<compile_context>
chip_gen: v6e
topology: v6e:2x2x1
jax: 0.10.0
libtpu: 0.0.40
codegen_flags: <defaults>
</compile_context>

<pallas_src>
import jax
import jax.numpy as jnp
from jax.experimental import pallas as pl
from jax.experimental.pallas import tpu as pltpu


def _pos_embed_kernel(coef_ref, xy1_ref, out_ref):
    """One grid step writes a (2F, tile_p) CHW-flattened output tile.

    coef_ref: (2F, 3)      columns = [a_x, a_y, b]   (precomputed in wrapper)
    xy1_ref:  (3, tile_p)  rows    = [j, i, 1] (f32) for this tile's pixels
    out_ref:  (2F, tile_p) channels on sublanes, pixels on lanes
    """
    # Per-pixel affine on the (otherwise idle) MXU; K=3 padding is irrelevant.
    theta = jnp.dot(coef_ref[...], xy1_ref[...],
                    preferred_element_type=jnp.float32)
    # Single uninterrupted sin stream on the VALU (the binding unit).
    out_ref[...] = jnp.sin(theta)


def _make_coef(gauss, h, w):
    """Fold the affine pipeline into per-channel [a_x, a_y, b] coefficients.

    theta[c] = a_x[c]*j + a_y[c]*i + b[c]
             = 2*pi*( (2(j+0.5)/w - 1)*g0[c] + (2(i+0.5)/h - 1)*g1[c] ) + phase[c]
    with channels [0, F) -> sin branch (phase 0), [F, 2F) -> cos branch (pi/2).
    """
    gauss = gauss.astype(jnp.float32)
    F = gauss.shape[1]
    g0 = jnp.concatenate([gauss[0], gauss[0]])  # (2F,)
    g1 = jnp.concatenate([gauss[1], gauss[1]])
    two_pi = jnp.float32(2.0 * jnp.pi)
    a_x = two_pi * jnp.float32(2.0 / w) * g0
    a_y = two_pi * jnp.float32(2.0 / h) * g1
    phase = jnp.concatenate(
        [jnp.zeros((F,), jnp.float32), jnp.full((F,), jnp.pi / 2, jnp.float32)]
    )
    b = two_pi * (jnp.float32(1.0 / w - 1.0) * g0
                  + jnp.float32(1.0 / h - 1.0) * g1) + phase
    return jnp.stack([a_x, a_y, b], axis=1)  # (2F, 3)


def _make_xy1(w, padded_p):
    """Exact [j, i, 1] rows (f32) for flat pixel indices 0..padded_p-1."""
    p = jnp.arange(padded_p, dtype=jnp.int32)
    j = (p % w).astype(jnp.float32)
    i = (p // w).astype(jnp.float32)
    return jnp.stack([j, i, jnp.ones_like(j)], axis=0)  # (3, padded_p)


def _cdiv(a, b):
    return -(-a // b)


def _choose_tiling(total_p, channels):
    """Return (tile_p, padded_p): lane tile and padded flat-pixel extent.

    - padded_p is a multiple of 128 (and of tile_p) -> lane-dense stores.
    - output <= 2 MiB  -> single grid step (single-TC v5e/v6e: no extra step).
    - otherwise        -> equal tiles of ~6 MiB, EVEN step count (v7x 2 TCs),
                          double-buffered footprint <= ~14 MiB (< 24 MiB cap).
    """
    p128 = _cdiv(total_p, 128) * 128
    out_bytes = p128 * channels * 4
    small_limit = 2 << 20
    if out_bytes <= small_limit:
        return p128, p128

    target_tile_bytes = 6 << 20
    chunk_bytes = 128 * channels * 4
    chunks_total = p128 // 128
    tile_chunks = max(1, target_tile_bytes // chunk_bytes)
    n_steps = _cdiv(chunks_total, tile_chunks)
    if n_steps % 2:
        n_steps += 1          # even -> balanced across v7x's two TensorCores
    n_steps = max(n_steps, 2)
    tile_chunks = _cdiv(chunks_total, n_steps)
    tile_p = tile_chunks * 128
    return tile_p, tile_p * n_steps


def pos_embed_random_forward(gauss, size):
    """JAX/Pallas equivalent of PosEmbedRandom.forward(size) -> (2F, h, w)."""
    h, w = int(size[0]), int(size[1])
    F = gauss.shape[1]
    C = 2 * F
    total_p = h * w

    tile_p, padded_p = _choose_tiling(total_p, C)
    n_steps = padded_p // tile_p

    coef = _make_coef(gauss, h, w)       # (C, 3)   tiny
    xy1 = _make_xy1(w, padded_p)         # (3, padded_p) exact int-derived f32

    cost = pl.CostEstimate(
        flops=2 * C * 3 * padded_p,
        transcendentals=C * padded_p,
        bytes_accessed=4 * (C * padded_p + 3 * padded_p + C * 3),
    )

    out_flat = pl.pallas_call(
        _pos_embed_kernel,
        out_shape=jax.ShapeDtypeStruct((C, padded_p), jnp.float32),
        grid=(n_steps,),
        in_specs=[
            pl.BlockSpec((C, 3), lambda i: (0, 0)),
            pl.BlockSpec((3, tile_p), lambda i: (0, i)),
        ],
        out_specs=pl.BlockSpec((C, tile_p), lambda i: (0, i)),
        compiler_params=pltpu.CompilerParams(
            dimension_semantics=("parallel",)),
        cost_estimate=cost,
    )(coef, xy1)

    if padded_p != total_p:
        out_flat = out_flat[:, :total_p]
    # Free, contiguity-preserving reshape: (2F, h*w) -> (2F, h, w).  Matches
    # torch's pe.permute(2, 0, 1) with no relayout / extra HBM pass.
    return out_flat.reshape(C, h, w)


def _reference_forward(gauss, size):
    """Pure-JAX reference mirroring the PyTorch module exactly."""
    h, w = size
    grid = jnp.ones((h, w), dtype=jnp.float32)
    y_embed = (jnp.cumsum(grid, axis=0) - 0.5) / h
    x_embed = (jnp.cumsum(grid, axis=1) - 0.5) / w
    coords = jnp.stack([x_embed, y_embed], axis=-1)
    coords = 2.0 * coords - 1.0
    coords = coords @ gauss.astype(jnp.float32)
    coords = 2.0 * jnp.pi * coords
    pe = jnp.concatenate([jnp.sin(coords), jnp.cos(coords)], axis=-1)
    return jnp.transpose(pe, (2, 0, 1))


if __name__ == "__main__":
    # Deterministic init (module __init__: scale * randn((2, num_pos_feat))).
    key = jax.random.PRNGKey(0)
    num_pos_feat = 64                      # module default -> 2F = 128 channels
    scale = 1.0
    gauss = scale * jax.random.normal(key, (2, num_pos_feat), dtype=jnp.float32)

    # Cases exercise: small single step, SAM-scale single step, ragged (lane
    # padding + slice), and the multi-step even-grid path.
    for (h, w) in [(16, 16), (64, 64), (12, 20), (64, 128)]:
        pe = pos_embed_random_forward(gauss, (h, w))
        pe = jax.block_until_ready(pe)

        assert pe.shape == (2 * num_pos_feat, h, w), pe.shape
        assert pe.dtype == jnp.float32

        ref = _reference_forward(gauss, (h, w))
        max_diff = float(jnp.max(jnp.abs(pe - ref)))
        assert jnp.allclose(pe, ref, atol=1e-4, rtol=1e-4), (
            f"mismatch vs reference for size {(h, w)}: max |diff| = {max_diff}")

    print("KERNEL_OK")
</pallas_src>

<mosaic_0001>
module attributes {stable_mosaic.version = 11 : i64} {
  func.func @_pos_embed_kernel(%arg0: i32, %arg1: memref<128x3xf32, #tpu.memory_space<vmem>>, %arg2: memref<3x256xf32, #tpu.memory_space<vmem>>, %arg3: memref<128x256xf32, #tpu.memory_space<vmem>>) attributes {dimension_semantics = [#tpu.dimension_semantics<parallel>], iteration_bounds = array<i64: 1>, scalar_prefetch = 0 : i64, scratch_operands = 0 : i64, tpu.core_type = #tpu.core_type<tc>, window_params = [{pipeline_mode = #tpu.pipeline_mode<synchronous>, transform_indices = @transform_0, window_bounds = array<i64: 128, 3>}, {transform_indices = @transform_1, window_bounds = array<i64: 3, 256>}, {transform_indices = @transform_2, window_bounds = array<i64: 128, 256>}]} {
    %c0 = arith.constant 0 : index
    %c0_0 = arith.constant 0 : index
    %0 = vector.load %arg1[%c0, %c0_0] : memref<128x3xf32, #tpu.memory_space<vmem>>, vector<128x3xf32>
    %c0_1 = arith.constant 0 : index
    %c0_2 = arith.constant 0 : index
    %1 = vector.load %arg2[%c0_1, %c0_2] : memref<3x256xf32, #tpu.memory_space<vmem>>, vector<3x256xf32>
    %cst = arith.constant dense<0.000000e+00> : vector<128x256xf32>
    %2 = tpu.matmul %0, %1, %cst {dimension_numbers = #tpu.dot_dimension_numbers<[1], [0], [0], [1], [0, 0, 1, 1], [], []>} : vector<128x3xf32>, vector<3x256xf32>, vector<128x256xf32> -> vector<128x256xf32>
    %3 = math.sin %2 : vector<128x256xf32>
    %c0_3 = arith.constant 0 : index
    %c0_4 = arith.constant 0 : index
    %4 = vector.load %arg3[%c0_3, %c0_4] : memref<128x256xf32, #tpu.memory_space<vmem>>, vector<128x256xf32>
    tpu.vector_store %arg3[%c0_3, %c0_4], %3 {strides = array<i32>} : memref<128x256xf32, #tpu.memory_space<vmem>>, vector<128x256xf32>,
    return
  }
  func.func @transform_0(%arg0: i32) -> (i32, i32) {
    %c0_i32 = arith.constant 0 : i32
    %c0_i32_0 = arith.constant 0 : i32
    %c0_i32_1 = arith.constant 0 : i32
    return %c0_i32, %c0_i32_0 : i32, i32
  }
  func.func @transform_1(%arg0: i32) -> (i32, i32) {
    %c0_i32 = arith.constant 0 : i32
    %c0_i32_0 = arith.constant 0 : i32
    return %c0_i32, %arg0 : i32, i32
  }
  func.func @transform_2(%arg0: i32) -> (i32, i32) {
    %c0_i32 = arith.constant 0 : i32
    %c0_i32_0 = arith.constant 0 : i32
    return %c0_i32, %arg0 : i32, i32
  }
}

</mosaic_0001>

<llo_original>
// kernel: tpu_custom_call.1
$region0: #{tpu_custom_call.1}
  #allocation0 [shape = 'u32[]', space=smem, size = 0x4, offset = 0x4, fixed_abs, tag = 'smem constant byte address 0x4 - core index']
  #allocation1 [shape = 'u32[144,128]{1,0:T(1,128)}', space=vmem, size = 0x12000, scoped, tag = 'internal scratch']
  %s0 = inlined_call_operand.vmem [shape: f32[128,3], index: 0, kind: input, shape index: {}]
  %s1 = inlined_call_operand.vmem [shape: f32[3,256], index: 1, kind: input, shape index: {}]
  %s2 = inlined_call_operand.hbm [shape: f32[128,256], index: 2, kind: output, shape index: {}]
  %s3 = sld [smem:[#allocation0]]
  $region18: #{tpu_custom_call.1} parent=0
    _
  %s5 = ssub.s32 1, %s3
  %s6 = scalar_select 0, %s5, %s3
  $region1: #{tpu_custom_call.1} parent=0
    #allocation2 [shape = 'u8[131072]{0}', space=vmem, size = 0x20000, scoped, tag = 'output window, operand 0, single buffered']
    #allocation3 [shape = 's32[1]{0}', space=sflag, size = 0x4, scoped, tag = 'scoped memory for tpu_custom_call.1']
    %7 = vsyncpa [#allocation3], 0
    // Predicated region
    $region2: #{tpu_custom_call.1} parent=1 // pred_check
      _
    $region3: #{tpu_custom_call.1} parent=1 // pred_check_branch
      %9 = sbr.rel (0) target = $region5
    $region4: #{tpu_custom_call.1} parent=1 // pred_region
      _
    $region5: #{tpu_custom_call.1} parent=1 // pred_fallthru
      _
    // Predicated region
    $region6: #{tpu_custom_call.1} parent=1 // pred_check
      _
    $region7: #{tpu_custom_call.1} parent=1 // pred_check_branch
      %11 = sbr.rel (0) target = $region9
    $region8: #{tpu_custom_call.1} parent=1 // pred_region
      _
    $region9: #{tpu_custom_call.1} parent=1 // pred_fallthru
      _
    %v12 = vld [vmem:[%s0] sm:$0xff]
    %v13 = vld [vmem:[%s0 + $0x8] sm:$0xff]
    %v14 = vld [vmem:[%s0 + $0x10] sm:$0xff]
    %v15 = vld [vmem:[%s0 + $0x18] sm:$0xff]
    %v16 = vld [vmem:[%s0 + $0x20] sm:$0xff]
    %v17 = vld [vmem:[%s0 + $0x28] sm:$0xff]
    %v18 = vld [vmem:[%s0 + $0x30] sm:$0xff]
    %v19 = vld [vmem:[%s0 + $0x38] sm:$0xff]
    %v20 = vld [vmem:[%s0 + $0x40] sm:$0xff]
    %v21 = vld [vmem:[%s0 + $0x48] sm:$0xff]
    %v22 = vld [vmem:[%s0 + $0x50] sm:$0xff]
    %v23 = vld [vmem:[%s0 + $0x58] sm:$0xff]
    %v24 = vld [vmem:[%s0 + $0x60] sm:$0xff]
    %v25 = vld [vmem:[%s0 + $0x68] sm:$0xff]
    %v26 = vld [vmem:[%s0 + $0x70] sm:$0xff]
    %v27 = vld [vmem:[%s0 + $0x78] sm:$0xff]
    %v28 = vld [vmem:[%s1] sm:$0x77]
    %v30 = vcombine.high %v28, %v28
    %vm31 = vcmask 23552
    %v33 = vsel %vm31, %v12, 0
    %v36 = vsel %vm31, %v13, 0
    %v39 = vsel %vm31, %v14, 0
    %v42 = vsel %vm31, %v15, 0
    %v45 = vsel %vm31, %v16, 0
    %v48 = vsel %vm31, %v17, 0
    %v51 = vsel %vm31, %v18, 0
    %v54 = vsel %vm31, %v19, 0
    %v57 = vsel %vm31, %v20, 0
    %v60 = vsel %vm31, %v21, 0
    %v63 = vsel %vm31, %v22, 0
    %v66 = vsel %vm31, %v23, 0
    %v69 = vsel %vm31, %v24, 0
    %v72 = vsel %vm31, %v25, 0
    %v75 = vsel %vm31, %v26, 0
    %v78 = vsel %vm31, %v27, 0
    %vm80 = vcmask 1042432
    %v81 = vsel %vm80, %v28, 0
    %v83 = vsel %vm80, %v30, 0
    %85 = vmatprep.subr.mxu0 0.0
    %86 = vmatpush1.msra.mxu0 0.0
    %87 = vmatprep.subr.mxu0 0.0
    %88 = vmatpush1.msra.mxu0 0.0
    %89 = vmatprep.subr.mxu0 0.0
    %90 = vmatpush1.msra.mxu0 0.0
    %91 = vmatprep.subr.mxu0 0.0
    %92 = vmatpush1.msra.mxu0 0.0
    %93 = vmatprep.subr.mxu0 0.0
    %94 = vmatpush1.msra.mxu0 0.0
    %95 = vmatprep.subr.mxu0 0.0
    %96 = vmatpush1.msra.mxu0 0.0
    %97 = vmatprep.subr.mxu0 0.0
    %98 = vmatpush1.msra.mxu0 0.0
    %99 = vmatprep.subr.mxu0 0.0
    %100 = vmatpush1.msra.mxu0 0.0
    %101 = vmatprep.subr.mxu0 0.0
    %102 = vmatpush1.msra.mxu0 0.0
    %103 = vmatprep.subr.mxu0 0.0
    %104 = vmatpush1.msra.mxu0 0.0
    %105 = vmatprep.subr.mxu0 0.0
    %106 = vmatpush1.msra.mxu0 0.0
    %107 = vmatprep.subr.mxu0 0.0
    %108 = vmatpush1.msra.mxu0 0.0
    %109 = vmatprep.subr.mxu0 0.0
    %110 = vmatpush1.msra.mxu0 0.0
    %111 = vmatprep.subr.mxu0 0.0
    %112 = vmatpush1.msra.mxu0 0.0
    %113 = vmatprep.subr.mxu0 0.0
    %114 = vmatpush1.msra.mxu0 0.0
    %115 = vmatprep.subr.mxu0 %v83
    %116 = vmatpush1.msra.mxu0 %v81
    %117 = vmatprep.subr.mxu0 0.0
    %118 = vmatpush2.msra.mxu0 0.0
    %119 = vmatprep.subr.mxu0 0.0
    %120 = vmatpush2.msra.mxu0 0.0
    %121 = vmatprep.subr.mxu0 0.0
    %122 = vmatpush2.msra.mxu0 0.0
    %123 = vmatprep.subr.mxu0 0.0
    %124 = vmatpush2.msra.mxu0 0.0
    %125 = vmatprep.subr.mxu0 0.0
    %126 = vmatpush2.msra.mxu0 0.0
    %127 = vmatprep.subr.mxu0 0.0
    %128 = vmatpush2.msra.mxu0 0.0
    %129 = vmatprep.subr.mxu0 0.0
    %130 = vmatpush2.msra.mxu0 0.0
    %131 = vmatprep.subr.mxu0 0.0
    %132 = vmatpush2.msra.mxu0 0.0
    %133 = vmatprep.subr.mxu0 0.0
    %134 = vmatpush2.msra.mxu0 0.0
    %135 = vmatprep.subr.mxu0 0.0
    %136 = vmatpush2.msra.mxu0 0.0
    %137 = vmatprep.subr.mxu0 0.0
    %138 = vmatpush2.msra.mxu0 0.0
    %139 = vmatprep.subr.mxu0 0.0
    %140 = vmatpush2.msra.mxu0 0.0
    %141 = vmatprep.subr.mxu0 0.0
    %142 = vmatpush2.msra.mxu0 0.0
    %143 = vmatprep.subr.mxu0 0.0
    %144 = vmatpush2.msra.mxu0 0.0
    %145 = vmatprep.subr.mxu0 0.0
    %146 = vmatpush2.msra.mxu0 0.0
    %147 = vmatprep.subr.mxu0 0.0
    %148 = vmatpush2.msra.mxu0 0.0
    %149 = vmatprep.mubr.f32.mxu0 0.0
    %150 = vmatmul.mubr.f32.gmra.mxu0 %v33
    %v151 = vpop.f32.mrf.mxu0
    %v152 = vadd.f32 0.0, %v151
    %v153 = vpop.f32.mrf.mxu0
    %v154 = vadd.f32 0.0, %v153
    %155 = vmatprep.mubr.f32.mxu0 0.0
    %156 = vmatmul.mubr.f32.gmra.mxu0 %v36
    %v157 = vpop.f32.mrf.mxu0
    %v158 = vadd.f32 0.0, %v157
    %v159 = vpop.f32.mrf.mxu0
    %v160 = vadd.f32 0.0, %v159
    %161 = vmatprep.mubr.f32.mxu0 0.0
    %162 = vmatmul.mubr.f32.gmra.mxu0 %v39
    %v163 = vpop.f32.mrf.mxu0
    %v164 = vadd.f32 0.0, %v163
    %v165 = vpop.f32.mrf.mxu0
    %v166 = vadd.f32 0.0, %v165
    %167 = vmatprep.mubr.f32.mxu0 0.0
    %168 = vmatmul.mubr.f32.gmra.mxu0 %v42
    %v169 = vpop.f32.mrf.mxu0
    %v170 = vadd.f32 0.0, %v169
    %v171 = vpop.f32.mrf.mxu0
    %v172 = vadd.f32 0.0, %v171
    %173 = vmatprep.mubr.f32.mxu0 0.0
    %174 = vmatmul.mubr.f32.gmra.mxu0 %v45
    %v175 = vpop.f32.mrf.mxu0
    %v176 = vadd.f32 0.0, %v175
    %v177 = vpop.f32.mrf.mxu0
    %v178 = vadd.f32 0.0, %v177
    %179 = vmatprep.mubr.f32.mxu0 0.0
    %180 = vmatmul.mubr.f32.gmra.mxu0 %v48
    %v181 = vpop.f32.mrf.mxu0
    %v182 = vadd.f32 0.0, %v181
    %v183 = vpop.f32.mrf.mxu0
    %v184 = vadd.f32 0.0, %v183
    %185 = vmatprep.mubr.f32.mxu0 0.0
    %186 = vmatmul.mubr.f32.gmra.mxu0 %v51
    %v187 = vpop.f32.mrf.mxu0
    %v188 = vadd.f32 0.0, %v187
    %v189 = vpop.f32.mrf.mxu0
    %v190 = vadd.f32 0.0, %v189
    %191 = vmatprep.mubr.f32.mxu0 0.0
    %192 = vmatmul.mubr.f32.gmra.mxu0 %v54
    %v193 = vpop.f32.mrf.mxu0
    %v194 = vadd.f32 0.0, %v193
    %v195 = vpop.f32.mrf.mxu0
    %v196 = vadd.f32 0.0, %v195
    %197 = vmatprep.mubr.f32.mxu0 0.0
    %198 = vmatmul.mubr.f32.gmra.mxu0 %v57
    %v199 = vpop.f32.mrf.mxu0
    %v200 = vadd.f32 0.0, %v199
    %v201 = vpop.f32.mrf.mxu0
    %v202 = vadd.f32 0.0, %v201
    %203 = vmatprep.mubr.f32.mxu0 0.0
    %204 = vmatmul.mubr.f32.gmra.mxu0 %v60
    %v205 = vpop.f32.mrf.mxu0
    %v206 = vadd.f32 0.0, %v205
    %v207 = vpop.f32.mrf.mxu0
    %v208 = vadd.f32 0.0, %v207
    %209 = vmatprep.mubr.f32.mxu0 0.0
    %210 = vmatmul.mubr.f32.gmra.mxu0 %v63
    %v211 = vpop.f32.mrf.mxu0
    %v212 = vadd.f32 0.0, %v211
    %v213 = vpop.f32.mrf.mxu0
    %v214 = vadd.f32 0.0, %v213
    %215 = vmatprep.mubr.f32.mxu0 0.0
    %216 = vmatmul.mubr.f32.gmra.mxu0 %v66
    %v217 = vpop.f32.mrf.mxu0
    %v218 = vadd.f32 0.0, %v217
    %v219 = vpop.f32.mrf.mxu0
    %v220 = vadd.f32 0.0, %v219
    %221 = vmatprep.mubr.f32.mxu0 0.0
    %222 = vmatmul.mubr.f32.gmra.mxu0 %v69
    %v223 = vpop.f32.mrf.mxu0
    %v224 = vadd.f32 0.0, %v223
    %v225 = vpop.f32.mrf.mxu0
    %v226 = vadd.f32 0.0, %v225
    %227 = vmatprep.mubr.f32.mxu0 0.0
    %228 = vmatmul.mubr.f32.gmra.mxu0 %v72
    %v229 = vpop.f32.mrf.mxu0
    %v230 = vadd.f32 0.0, %v229
    %v231 = vpop.f32.mrf.mxu0
    %v232 = vadd.f32 0.0, %v231
    %233 = vmatprep.mubr.f32.mxu0 0.0
    %234 = vmatmul.mubr.f32.gmra.mxu0 %v75
    %v235 = vpop.f32.mrf.mxu0
    %v236 = vadd.f32 0.0, %v235
    %v237 = vpop.f32.mrf.mxu0
    %v238 = vadd.f32 0.0, %v237
    %239 = vmatprep.mubr.f32.mxu0 0.0
    %240 = vmatmul.mubr.f32.gmra.mxu0 %v78
    %v241 = vpop.f32.mrf.mxu0
    %v242 = vadd.f32 0.0, %v241
    %v243 = vpop.f32.mrf.mxu0
    %v244 = vadd.f32 0.0, %v243
    %245 = vdwg.mxu0
    %v246 = vand.u32 2147483647, %v152
    %vm247 = vcmp.le.f32.partialorder %v246, 0.7853982
    %vm248 = vcmp.lt.s32.totalorder %v152, 0
    %v249 = vand.u32 %v152, 2139095040
    %v250 = vshrl.u32 %v249, 23
    %v251 = vsub.s32 %v250, 127
    %v252 = vand.u32 2147483647, %v152
    %v253 = vand.u32 %v252, 8388607
    %v254 = vor.u32 %v253, 8388608
    %v255 = vsub.s32 0, %v254
    %v256 = vadd.s32 %v251, 1
    %vm257 = vcmp.gt.s32.totalorder %v256, 0
    %v258 = vsel %vm257, %v256, 0
    %v259 = vshrl.u32 %v258, 5
    %v260 = vand.u32 %v258, 31
    %v261 = vsub.s32 32, %v260
    %v262 = vshrl.u32 683565275, %v261
    %v263 = vshll.u32 683565275, %v260
    %v264 = vshrl.u32 2475754826, %v261
    %v265 = vor.u32 %v263, %v264
    %v266 = vshll.u32 2475754826, %v260
    %v267 = vshrl.u32 2131351028, %v261
    %v268 = vor.u32 %v266, %v267
    %v269 = vshll.u32 2131351028, %v260
    %v270 = vshrl.u32 2102212464, %v261
    %v271 = vor.u32 %v269, %v270
    %v272 = vshll.u32 2102212464, %v260
    %v273 = vshrl.u32 920167782, %v261
    %v274 = vor.u32 %v272, %v273
    %v275 = vshll.u32 920167782, %v260
    %v276 = vshrl.u32 1326507024, %v261
    %v277 = vor.u32 %v275, %v276
    %vm278 = vcmp.lt.s32.totalorder %v259, 1
    %vm279 = vcmp.lt.s32.totalorder %v259, 2
    %vm280 = vcmp.lt.s32.totalorder %v259, 3
    %vm281 = vcmp.lt.s32.totalorder %v259, 4
    %v282 = vsel %vm278, %v262, %v265
    %v283 = vsel %vm281, %v271, 2102212464
    %v284 = vsel %vm280, %v268, %v283
    %v285 = vsel %vm279, %v282, %v284
    %v286 = vsel %vm278, %v265, %v268
    %v287 = vsel %vm281, %v274, 920167782
    %v288 = vsel %vm280, %v271, %v287
    %v289 = vsel %vm279, %v286, %v288
    %v290 = vsel %vm278, %v268, %v271
    %v291 = vsel %vm281, %v277, 1326507024
    %v292 = vsel %vm280, %v274, %v291
    %v293 = vsel %vm279, %v290, %v292
    %v294 = vshll.u32 %v254, 8
    %v295 = vmul.u32.u64.compose %v294, %v293
    %v296 = vextract.low.u32 %v295
    %v297 = vextract.high.u32 %v295
    %v298 = vmul.u32.u64.compose %v294, %v289
    %v299 = vextract.low.u32 %v298
    %v300 = vextract.high.u32 %v298
    %v301 = vmul.u32 %v294, %v285
    %v302 = vadd.s32 %v297, %v299
    %vm303 = vc.u32 %v297, %v299
    %v304 = vadd.s32 %v300, 1
    %v305 = vsel %vm303, %v304, %v300
    %v306 = vadd.s32 %v301, %v305
    %v307 = vadd.s32 %v306, 536870912
    %v308 = vshrl.u32 %v307, 30
    %v309 = vshll.u32 %v308, 30
    %v310 = vsub.s32 %v306, %v309
    %vm311 = vcmp.lt.s32.totalorder %v310, 0
    %v312 = vsub.s32 0, %v310
    %v313 = vsel %vm311, %v312, %v310
    %v314 = vclz %v313
    %v315 = vsub.s32 %v314, 2
    %vm316 = vcmp.gt.s32.totalorder 0, %v315
    %v317 = vsel %vm316, 0, %v315
    %v318 = vsub.s32 32, %v317
    %v319 = vshll.u32 %v310, %v317
    %v320 = vshrl.u32 %v302, %v318
    %v321 = vor.u32 %v319, %v320
    %v322 = vsub.s32 4294967266, %v317
    %v323 = vadd.s32 %v322, 127
    %v324 = vshll.u32 %v323, 23
    %v325 = vor.u32 4788187, %v324
    %v326 = vand.u32 2147483647, %v325
    %v328 = vcvt.s32.f32 %v321
    %v329 = vmul.f32 %v328, %v326
    %v330 = vxor.u32 %v329, 2147483648
    %v331 = vsel %vm248, %v330, %v329
    %v332 = vsub.s32 4, %v308
    %v333 = vsel %vm248, %v332, %v308
    %v334 = vsel %vm247, %v152, %v331
    %v335 = vsel %vm247, 0, %v333
    %v336 = vcosq.f32.pop %v334
    %v337 = vsinq.f32.pop %v334
    %vm338 = vweird.f32 %v152
    %v339 = vadd.s32 %v335, 3
    %v340 = vand.u32 %v339, 3
    %vm341 = vcmp.lt.s32.totalorder %v340, 2
    %vm342 = vcmp.eq.s32.totalorder %v340, 0
    %v343 = vxor.u32 %v337, 2147483648
    %v344 = vsel %vm342, %v336, %v343
    %vm345 = vcmp.eq.s32.totalorder %v340, 2
    %v346 = vxor.u32 %v336, 2147483648
    %v347 = vsel %vm345, %v346, %v337
    %v348 = vsel %vm341, %v344, %v347
    %v349 = vsel %vm338, nan, %v348
    %v350 = vand.u32 2147483647, %v154
    %vm351 = vcmp.le.f32.partialorder %v350, 0.7853982
    %vm352 = vcmp.lt.s32.totalorder %v154, 0
    %v353 = vand.u32 %v154, 2139095040
    %v354 = vshrl.u32 %v353, 23
    %v355 = vsub.s32 %v354, 127
    %v356 = vand.u32 2147483647, %v154
    %v357 = vand.u32 %v356, 8388607
    %v358 = vor.u32 %v357, 8388608
    %v359 = vsub.s32 0, %v358
    %v360 = vadd.s32 %v355, 1
    %vm361 = vcmp.gt.s32.totalorder %v360, 0
    %v362 = vsel %vm361, %v360, 0
    %v363 = vshrl.u32 %v362, 5
    %v364 = vand.u32 %v362, 31
    %v365 = vsub.s32 32, %v364
    %v366 = vshrl.u32 683565275, %v365
    %v367 = vshll.u32 683565275, %v364
    %v368 = vshrl.u32 2475754826, %v365
    %v369 = vor.u32 %v367, %v368
    %v370 = vshll.u32 2475754826, %v364
    %v371 = vshrl.u32 2131351028, %v365
    %v372 = vor.u32 %v370, %v371
    %v373 = vshll.u32 2131351028, %v364
    %v374 = vshrl.u32 2102212464, %v365
    %v375 = vor.u32 %v373, %v374
    %v376 = vshll.u32 2102212464, %v364
    %v377 = vshrl.u32 920167782, %v365
    %v378 = vor.u32 %v376, %v377
    %v379 = vshll.u32 920167782, %v364
    %v380 = vshrl.u32 1326507024, %v365
    %v381 = vor.u32 %v379, %v380
    %vm382 = vcmp.lt.s32.totalorder %v363, 1
    %vm383 = vcmp.lt.s32.totalorder %v363, 2
    %vm384 = vcmp.lt.s32.totalorder %v363, 3
    %vm385 = vcmp.lt.s32.totalorder %v363, 4
    %v386 = vsel %vm382, %v366, %v369
    %v387 = vsel %vm385, %v375, 2102212464
    %v388 = vsel %vm384, %v372, %v387
    %v389 = vsel %vm383, %v386, %v388
    %v390 = vsel %vm382, %v369, %v372
    %v391 = vsel %vm385, %v378, 920167782
    %v392 = vsel %vm384, %v375, %v391
    %v393 = vsel %vm383, %v390, %v392
    %v394 = vsel %vm382, %v372, %v375
    %v395 = vsel %vm385, %v381, 1326507024
    %v396 = vsel %vm384, %v378, %v395
    %v397 = vsel %vm383, %v394, %v396
    %v398 = vshll.u32 %v358, 8
    %v399 = vmul.u32.u64.compose %v398, %v397
    %v400 = vextract.low.u32 %v399
    %v401 = vextract.high.u32 %v399
    %v402 = vmul.u32.u64.compose %v398, %v393
    %v403 = vextract.low.u32 %v402
    %v404 = vextract.high.u32 %v402
    %v405 = vmul.u32 %v398, %v389
    %v406 = vadd.s32 %v401, %v403
    %vm407 = vc.u32 %v401, %v403
    %v408 = vadd.s32 %v404, 1
    %v409 = vsel %vm407, %v408, %v404
    %v410 = vadd.s32 %v405, %v409
    %v411 = vadd.s32 %v410, 536870912
    %v412 = vshrl.u32 %v411, 30
    %v413 = vshll.u32 %v412, 30
    %v414 = vsub.s32 %v410, %v413
    %vm415 = vcmp.lt.s32.totalorder %v414, 0
    %v416 = vsub.s32 0, %v414
    %v417 = vsel %vm415, %v416, %v414
    %v418 = vclz %v417
    %v419 = vsub.s32 %v418, 2
    %vm420 = vcmp.gt.s32.totalorder 0, %v419
    %v421 = vsel %vm420, 0, %v419
    %v422 = vsub.s32 32, %v421
    %v423 = vshll.u32 %v414, %v421
    %v424 = vshrl.u32 %v406, %v422
    %v425 = vor.u32 %v423, %v424
    %v426 = vsub.s32 4294967266, %v421
    %v427 = vadd.s32 %v426, 127
    %v428 = vshll.u32 %v427, 23
    %v429 = vor.u32 4788187, %v428
    %v430 = vand.u32 2147483647, %v429
    %v432 = vcvt.s32.f32 %v425
    %v433 = vmul.f32 %v432, %v430
    %v434 = vxor.u32 %v433, 2147483648
    %v435 = vsel %vm352, %v434, %v433
    %v436 = vsub.s32 4, %v412
    %v437 = vsel %vm352, %v436, %v412
    %v438 = vsel %vm351, %v154, %v435
    %v439 = vsel %vm351, 0, %v437
    %v440 = vcosq.f32.pop %v438
    %v441 = vsinq.f32.pop %v438
    %vm442 = vweird.f32 %v154
    %v443 = vadd.s32 %v439, 3
    %v444 = vand.u32 %v443, 3
    %vm445 = vcmp.lt.s32.totalorder %v444, 2
    %vm446 = vcmp.eq.s32.totalorder %v444, 0
    %v447 = vxor.u32 %v441, 2147483648
    %v448 = vsel %vm446, %v440, %v447
    %vm449 = vcmp.eq.s32.totalorder %v444, 2
    %v450 = vxor.u32 %v440, 2147483648
    %v451 = vsel %vm449, %v450, %v441
    %v452 = vsel %vm445, %v448, %v451
    %v453 = vsel %vm442, nan, %v452
    %v454 = vand.u32 2147483647, %v158
    %vm455 = vcmp.le.f32.partialorder %v454, 0.7853982
    %vm456 = vcmp.lt.s32.totalorder %v158, 0
    %v457 = vand.u32 %v158, 2139095040
    %v458 = vshrl.u32 %v457, 23
    %v459 = vsub.s32 %v458, 127
    %v460 = vand.u32 2147483647, %v158
    %v461 = vand.u32 %v460, 8388607
    %v462 = vor.u32 %v461, 8388608
    %v463 = vsub.s32 0, %v462
    %v464 = vadd.s32 %v459, 1
    %vm465 = vcmp.gt.s32.totalorder %v464, 0
    %v466 = vsel %vm465, %v464, 0
    %v467 = vshrl.u32 %v466, 5
    %v468 = vand.u32 %v466, 31
    %v469 = vsub.s32 32, %v468
    %v470 = vshrl.u32 683565275, %v469
    %v471 = vshll.u32 683565275, %v468
    %v472 = vshrl.u32 2475754826, %v469
    %v473 = vor.u32 %v471, %v472
    %v474 = vshll.u32 2475754826, %v468
    %v475 = vshrl.u32 2131351028, %v469
    %v476 = vor.u32 %v474, %v475
    %v477 = vshll.u32 2131351028, %v468
    %v478 = vshrl.u32 2102212464, %v469
    %v479 = vor.u32 %v477, %v478
    %v480 = vshll.u32 2102212464, %v468
    %v481 = vshrl.u32 920167782, %v469
    %v482 = vor.u32 %v480, %v481
    %v483 = vshll.u32 920167782, %v468
    %v484 = vshrl.u32 1326507024, %v469
    %v485 = vor.u32 %v483, %v484
    %vm486 = vcmp.lt.s32.totalorder %v467, 1
    %vm487 = vcmp.lt.s32.totalorder %v467, 2
    %vm488 = vcmp.lt.s32.totalorder %v467, 3
    %vm489 = vcmp.lt.s32.totalorder %v467, 4
    %v490 = vsel %vm486, %v470, %v473
    %v491 = vsel %vm489, %v479, 2102212464
    %v492 = vsel %vm488, %v476, %v491
    %v493 = vsel %vm487, %v490, %v492
    %v494 = vsel %vm486, %v473, %v476
    %v495 = vsel %vm489, %v482, 920167782
    %v496 = vsel %vm488, %v479, %v495
    %v497 = vsel %vm487, %v494, %v496
    %v498 = vsel %vm486, %v476, %v479
    %v499 = vsel %vm489, %v485, 1326507024
    %v500 = vsel %vm488, %v482, %v499
    %v501 = vsel %vm487, %v498, %v500
    %v502 = vshll.u32 %v462, 8
    %v503 = vmul.u32.u64.compose %v502, %v501
    %v504 = vextract.low.u32 %v503
    %v505 = vextract.high.u32 %v503
    %v506 = vmul.u32.u64.compose %v502, %v497
    %v507 = vextract.low.u32 %v506
    %v508 = vextract.high.u32 %v506
    %v509 = vmul.u32 %v502, %v493
    %v510 = vadd.s32 %v505, %v507
    %vm511 = vc.u32 %v505, %v507
    %v512 = vadd.s32 %v508, 1
    %v513 = vsel %vm511, %v512, %v508
    %v514 = vadd.s32 %v509, %v513
    %v515 = vadd.s32 %v514, 536870912
    %v516 = vshrl.u32 %v515, 30
    %v517 = vshll.u32 %v516, 30
    %v518 = vsub.s32 %v514, %v517
    %vm519 = vcmp.lt.s32.totalorder %v518, 0
    %v520 = vsub.s32 0, %v518
    %v521 = vsel %vm519, %v520, %v518
    %v522 = vclz %v521
    %v523 = vsub.s32 %v522, 2
    %vm524 = vcmp.gt.s32.totalorder 0, %v523
    %v525 = vsel %vm524, 0, %v523
    %v526 = vsub.s32 32, %v525
    %v527 = vshll.u32 %v518, %v525
    %v528 = vshrl.u32 %v510, %v526
    %v529 = vor.u32 %v527, %v528
    %v530 = vsub.s32 4294967266, %v525
    %v531 = vadd.s32 %v530, 127
    %v532 = vshll.u32 %v531, 23
    %v533 = vor.u32 4788187, %v532
    %v534 = vand.u32 2147483647, %v533
    %v536 = vcvt.s32.f32 %v529
    %v537 = vmul.f32 %v536, %v534
    %v538 = vxor.u32 %v537, 2147483648
    %v539 = vsel %vm456, %v538, %v537
    %v540 = vsub.s32 4, %v516
    %v541 = vsel %vm456, %v540, %v516
    %v542 = vsel %vm455, %v158, %v539
    %v543 = vsel %vm455, 0, %v541
    %v544 = vcosq.f32.pop %v542
    %v545 = vsinq.f32.pop %v542
    %vm546 = vweird.f32 %v158
    %v547 = vadd.s32 %v543, 3
    %v548 = vand.u32 %v547, 3
    %vm549 = vcmp.lt.s32.totalorder %v548, 2
    %vm550 = vcmp.eq.s32.totalorder %v548, 0
    %v551 = vxor.u32 %v545, 2147483648
    %v552 = vsel %vm550, %v544, %v551
    %vm553 = vcmp.eq.s32.totalorder %v548, 2
    %v554 = vxor.u32 %v544, 2147483648
    %v555 = vsel %vm553, %v554, %v545
    %v556 = vsel %vm549, %v552, %v555
    %v557 = vsel %vm546, nan, %v556
    %v558 = vand.u32 2147483647, %v160
    %vm559 = vcmp.le.f32.partialorder %v558, 0.7853982
    %vm560 = vcmp.lt.s32.totalorder %v160, 0
    %v561 = vand.u32 %v160, 2139095040
    %v562 = vshrl.u32 %v561, 23
    %v563 = vsub.s32 %v562, 127
    %v564 = vand.u32 2147483647, %v160
    %v565 = vand.u32 %v564, 8388607
    %v566 = vor.u32 %v565, 8388608
    %v567 = vsub.s32 0, %v566
    %v568 = vadd.s32 %v563, 1
    %vm569 = vcmp.gt.s32.totalorder %v568, 0
    %v570 = vsel %vm569, %v568, 0
    %v571 = vshrl.u32 %v570, 5
    %v572 = vand.u32 %v570, 31
    %v573 = vsub.s32 32, %v572
    %v574 = vshrl.u32 683565275, %v573
    %v575 = vshll.u32 683565275, %v572
    %v576 = vshrl.u32 2475754826, %v573
    %v577 = vor.u32 %v575, %v576
    %v578 = vshll.u32 2475754826, %v572
    %v579 = vshrl.u32 2131351028, %v573
    %v580 = vor.u32 %v578, %v579
    %v581 = vshll.u32 2131351028, %v572
    %v582 = vshrl.u32 2102212464, %v573
    %v583 = vor.u32 %v581, %v582
    %v584 = vshll.u32 2102212464, %v572
    %v585 = vshrl.u32 920167782, %v573
    %v586 = vor.u32 %v584, %v585
    %v587 = vshll.u32 920167782, %v572
    %v588 = vshrl.u32 1326507024, %v573
    %v589 = vor.u32 %v587, %v588
    %vm590 = vcmp.lt.s32.totalorder %v571, 1
    %vm591 = vcmp.lt.s32.totalorder %v571, 2
    %vm592 = vcmp.lt.s32.totalorder %v571, 3
    %vm593 = vcmp.lt.s32.totalorder %v571, 4
    %v594 = vsel %vm590, %v574, %v577
    %v595 = vsel %vm593, %v583, 2102212464
    %v596 = vsel %vm592, %v580, %v595
    %v597 = vsel %vm591, %v594, %v596
    %v598 = vsel %vm590, %v577, %v580
    %v599 = vsel %vm593, %v586, 920167782
    %v600 = vsel %vm592, %v583, %v599
    %v601 = vsel %vm591, %v598, %v600
    %v602 = vsel %vm590, %v580, %v583
    %v603 = vsel %vm593, %v589, 1326507024
    %v604 = vsel %vm592, %v586, %v603
    %v605 = vsel %vm591, %v602, %v604
    %v606 = vshll.u32 %v566, 8
    %v607 = vmul.u32.u64.compose %v606, %v605
    %v608 = vextract.low.u32 %v607
    %v609 = vextract.high.u32 %v607
    %v610 = vmul.u32.u64.compose %v606, %v601
    %v611 = vextract.low.u32 %v610
    %v612 = vextract.high.u32 %v610
    %v613 = vmul.u32 %v606, %v597
    %v614 = vadd.s32 %v609, %v611
    %vm615 = vc.u32 %v609, %v611
    %v616 = vadd.s32 %v612, 1
    %v617 = vsel %vm615, %v616, %v612
    %v618 = vadd.s32 %v613, %v617
    %v619 = vadd.s32 %v618, 536870912
    %v620 = vshrl.u32 %v619, 30
    %v621 = vshll.u32 %v620, 30
    %v622 = vsub.s32 %v618, %v621
    %vm623 = vcmp.lt.s32.totalorder %v622, 0
    %v624 = vsub.s32 0, %v622
    %v625 = vsel %vm623, %v624, %v622
    %v626 = vclz %v625
    %v627 = vsub.s32 %v626, 2
    %vm628 = vcmp.gt.s32.totalorder 0, %v627
    %v629 = vsel %vm628, 0, %v627
    %v630 = vsub.s32 32, %v629
    %v631 = vshll.u32 %v622, %v629
    %v632 = vshrl.u32 %v614, %v630
    %v633 = vor.u32 %v631, %v632
    %v634 = vsub.s32 4294967266, %v629
    %v635 = vadd.s32 %v634, 127
    %v636 = vshll.u32 %v635, 23
    %v637 = vor.u32 4788187, %v636
    %v638 = vand.u32 2147483647, %v637
    %v640 = vcvt.s32.f32 %v633
    %v641 = vmul.f32 %v640, %v638
    %v642 = vxor.u32 %v641, 2147483648
    %v643 = vsel %vm560, %v642, %v641
    %v644 = vsub.s32 4, %v620
    %v645 = vsel %vm560, %v644, %v620
    %v646 = vsel %vm559, %v160, %v643
    %v647 = vsel %vm559, 0, %v645
    %v648 = vcosq.f32.pop %v646
    %v649 = vsinq.f32.pop %v646
    %vm650 = vweird.f32 %v160
    %v651 = vadd.s32 %v647, 3
    %v652 = vand.u32 %v651, 3
    %vm653 = vcmp.lt.s32.totalorder %v652, 2
    %vm654 = vcmp.eq.s32.totalorder %v652, 0
    %v655 = vxor.u32 %v649, 2147483648
    %v656 = vsel %vm654, %v648, %v655
    %vm657 = vcmp.eq.s32.totalorder %v652, 2
    %v658 = vxor.u32 %v648, 2147483648
    %v659 = vsel %vm657, %v658, %v649
    %v660 = vsel %vm653, %v656, %v659
    %v661 = vsel %vm650, nan, %v660
    %v662 = vand.u32 2147483647, %v164
    %vm663 = vcmp.le.f32.partialorder %v662, 0.7853982
    %vm664 = vcmp.lt.s32.totalorder %v164, 0
    %v665 = vand.u32 %v164, 2139095040
    %v666 = vshrl.u32 %v665, 23
    %v667 = vsub.s32 %v666, 127
    %v668 = vand.u32 2147483647, %v164
    %v669 = vand.u32 %v668, 8388607
    %v670 = vor.u32 %v669, 8388608
    %v671 = vsub.s32 0, %v670
    %v672 = vadd.s32 %v667, 1
    %vm673 = vcmp.gt.s32.totalorder %v672, 0
    %v674 = vsel %vm673, %v672, 0
    %v675 = vshrl.u32 %v674, 5
    %v676 = vand.u32 %v674, 31
    %v677 = vsub.s32 32, %v676
    %v678 = vshrl.u32 683565275, %v677
    %v679 = vshll.u32 683565275, %v676
    %v680 = vshrl.u32 2475754826, %v677
    %v681 = vor.u32 %v679, %v680
    %v682 = vshll.u32 2475754826, %v676
    %v683 = vshrl.u32 2131351028, %v677
    %v684 = vor.u32 %v682, %v683
    %v685 = vshll.u32 2131351028, %v676
    %v686 = vshrl.u32 2102212464, %v677
    %v687 = vor.u32 %v685, %v686
    %v688 = vshll.u32 2102212464, %v676
    %v689 = vshrl.u32 920167782, %v677
    %v690 = vor.u32 %v688, %v689
    %v691 = vshll.u32 920167782, %v676
    %v692 = vshrl.u32 1326507024, %v677
    %v693 = vor.u32 %v691, %v692
    %vm694 = vcmp.lt.s32.totalorder %v675, 1
    %vm695 = vcmp.lt.s32.totalorder %v675, 2
    %vm696 = vcmp.lt.s32.totalorder %v675, 3
    %vm697 = vcmp.lt.s32.totalorder %v675, 4
    %v698 = vsel %vm694, %v678, %v681
    %v699 = vsel %vm697, %v687, 2102212464
    %v700 = vsel %vm696, %v684, %v699
    %v701 = vsel %vm695, %v698, %v700
    %v702 = vsel %vm694, %v681, %v684
    %v703 = vsel %vm697, %v690, 920167782
    %v704 = vsel %vm696, %v687, %v703
    %v705 = vsel %vm695, %v702, %v704
    %v706 = vsel %vm694, %v684, %v687
    %v707 = vsel %vm697, %v693, 1326507024
    %v708 = vsel %vm696, %v690, %v707
    %v709 = vsel %vm695, %v706, %v708
    %v710 = vshll.u32 %v670, 8
    %v711 = vmul.u32.u64.compose %v710, %v709
    %v712 = vextract.low.u32 %v711
    %v713 = vextract.high.u32 %v711
    %v714 = vmul.u32.u64.compose %v710, %v705
    %v715 = vextract.low.u32 %v714
    %v716 = vextract.high.u32 %v714
    %v717 = vmul.u32 %v710, %v701
    %v718 = vadd.s32 %v713, %v715
    %vm719 = vc.u32 %v713, %v715
    %v720 = vadd.s32 %v716, 1
    %v721 = vsel %vm719, %v720, %v716
    %v722 = vadd.s32 %v717, %v721
    %v723 = vadd.s32 %v722, 536870912
    %v724 = vshrl.u32 %v723, 30
    %v725 = vshll.u32 %v724, 30
    %v726 = vsub.s32 %v722, %v725
    %vm727 = vcmp.lt.s32.totalorder %v726, 0
    %v728 = vsub.s32 0, %v726
    %v729 = vsel %vm727, %v728, %v726
    %v730 = vclz %v729
    %v731 = vsub.s32 %v730, 2
    %vm732 = vcmp.gt.s32.totalorder 0, %v731
    %v733 = vsel %vm732, 0, %v731
    %v734 = vsub.s32 32, %v733
    %v735 = vshll.u32 %v726, %v733
    %v736 = vshrl.u32 %v718, %v734
    %v737 = vor.u32 %v735, %v736
    %v738 = vsub.s32 4294967266, %v733
    %v739 = vadd.s32 %v738, 127
    %v740 = vshll.u32 %v739, 23
    %v741 = vor.u32 4788187, %v740
    %v742 = vand.u32 2147483647, %v741
    %v744 = vcvt.s32.f32 %v737
    %v745 = vmul.f32 %v744, %v742
    %v746 = vxor.u32 %v745, 2147483648
    %v747 = vsel %vm664, %v746, %v745
    %v748 = vsub.s32 4, %v724
    %v749 = vsel %vm664, %v748, %v724
    %v750 = vsel %vm663, %v164, %v747
    %v751 = vsel %vm663, 0, %v749
    %v752 = vcosq.f32.pop %v750
    %v753 = vsinq.f32.pop %v750
    %vm754 = vweird.f32 %v164
    %v755 = vadd.s32 %v751, 3
    %v756 = vand.u32 %v755, 3
    %vm757 = vcmp.lt.s32.totalorder %v756, 2
    %vm758 = vcmp.eq.s32.totalorder %v756, 0
    %v759 = vxor.u32 %v753, 2147483648
    %v760 = vsel %vm758, %v752, %v759
    %vm761 = vcmp.eq.s32.totalorder %v756, 2
    %v762 = vxor.u32 %v752, 2147483648
    %v763 = vsel %vm761, %v762, %v753
    %v764 = vsel %vm757, %v760, %v763
    %v765 = vsel %vm754, nan, %v764
    %v766 = vand.u32 2147483647, %v166
    %vm767 = vcmp.le.f32.partialorder %v766, 0.7853982
    %vm768 = vcmp.lt.s32.totalorder %v166, 0
    %v769 = vand.u32 %v166, 2139095040
    %v770 = vshrl.u32 %v769, 23
    %v771 = vsub.s32 %v770, 127
    %v772 = vand.u32 2147483647, %v166
    %v773 = vand.u32 %v772, 8388607
    %v774 = vor.u32 %v773, 8388608
    %v775 = vsub.s32 0, %v774
    %v776 = vadd.s32 %v771, 1
    %vm777 = vcmp.gt.s32.totalorder %v776, 0
    %v778 = vsel %vm777, %v776, 0
    %v779 = vshrl.u32 %v778, 5
    %v780 = vand.u32 %v778, 31
    %v781 = vsub.s32 32, %v780
    %v782 = vshrl.u32 683565275, %v781
    %v783 = vshll.u32 683565275, %v780
    %v784 = vshrl.u32 2475754826, %v781
    %v785 = vor.u32 %v783, %v784
    %v786 = vshll.u32 2475754826, %v780
    %v787 = vshrl.u32 2131351028, %v781
    %v788 = vor.u32 %v786, %v787
    %v789 = vshll.u32 2131351028, %v780
    %v790 = vshrl.u32 2102212464, %v781
    %v791 = vor.u32 %v789, %v790
    %v792 = vshll.u32 2102212464, %v780
    %v793 = vshrl.u32 920167782, %v781
    %v794 = vor.u32 %v792, %v793
    %v795 = vshll.u32 920167782, %v780
    %v796 = vshrl.u32 1326507024, %v781
    %v797 = vor.u32 %v795, %v796
    %vm798 = vcmp.lt.s32.totalorder %v779, 1
    %vm799 = vcmp.lt.s32.totalorder %v779, 2
    %vm800 = vcmp.lt.s32.totalorder %v779, 3
    %vm801 = vcmp.lt.s32.totalorder %v779, 4
    %v802 = vsel %vm798, %v782, %v785
    %v803 = vsel %vm801, %v791, 2102212464
    %v804 = vsel %vm800, %v788, %v803
    %v805 = vsel %vm799, %v802, %v804
    %v806 = vsel %vm798, %v785, %v788
    %v807 = vsel %vm801, %v794, 920167782
    %v808 = vsel %vm800, %v791, %v807
    %v809 = vsel %vm799, %v806, %v808
    %v810 = vsel %vm798, %v788, %v791
    %v811 = vsel %vm801, %v797, 1326507024
    %v812 = vsel %vm800, %v794, %v811
    %v813 = vsel %vm799, %v810, %v812
    %v814 = vshll.u32 %v774, 8
    %v815 = vmul.u32.u64.compose %v814, %v813
    %v816 = vextract.low.u32 %v815
    %v817 = vextract.high.u32 %v815
    %v818 = vmul.u32.u64.compose %v814, %v809
    %v819 = vextract.low.u32 %v818
    %v820 = vextract.high.u32 %v818
    %v821 = vmul.u32 %v814, %v805
    %v822 = vadd.s32 %v817, %v819
    %vm823 = vc.u32 %v817, %v819
    %v824 = vadd.s32 %v820, 1
    %v825 = vsel %vm823, %v824, %v820
    %v826 = vadd.s32 %v821, %v825
    %v827 = vadd.s32 %v826, 536870912
    %v828 = vshrl.u32 %v827, 30
    %v829 = vshll.u32 %v828, 30
    %v830 = vsub.s32 %v826, %v829
    %vm831 = vcmp.lt.s32.totalorder %v830, 0
    %v832 = vsub.s32 0, %v830
    %v833 = vsel %vm831, %v832, %v830
    %v834 = vclz %v833
    %v835 = vsub.s32 %v834, 2
    %vm836 = vcmp.gt.s32.totalorder 0, %v835
    %v837 = vsel %vm836, 0, %v835
    %v838 = vsub.s32 32, %v837
    %v839 = vshll.u32 %v830, %v837
    %v840 = vshrl.u32 %v822, %v838
    %v841 = vor.u32 %v839, %v840
    %v842 = vsub.s32 4294967266, %v837
    %v843 = vadd.s32 %v842, 127
    %v844 = vshll.u32 %v843, 23
    %v845 = vor.u32 4788187, %v844
    %v846 = vand.u32 2147483647, %v845
    %v848 = vcvt.s32.f32 %v841
    %v849 = vmul.f32 %v848, %v846
    %v850 = vxor.u32 %v849, 2147483648
    %v851 = vsel %vm768, %v850, %v849
    %v852 = vsub.s32 4, %v828
    %v853 = vsel %vm768, %v852, %v828
    %v854 = vsel %vm767, %v166, %v851
    %v855 = vsel %vm767, 0, %v853
    %v856 = vcosq.f32.pop %v854
    %v857 = vsinq.f32.pop %v854
    %vm858 = vweird.f32 %v166
    %v859 = vadd.s32 %v855, 3
    %v860 = vand.u32 %v859, 3
    %vm861 = vcmp.lt.s32.totalorder %v860, 2
    %vm862 = vcmp.eq.s32.totalorder %v860, 0
    %v863 = vxor.u32 %v857, 2147483648
    %v864 = vsel %vm862, %v856, %v863
    %vm865 = vcmp.eq.s32.totalorder %v860, 2
    %v866 = vxor.u32 %v856, 2147483648
    %v867 = vsel %vm865, %v866, %v857
    %v868 = vsel %vm861, %v864, %v867
    %v869 = vsel %vm858, nan, %v868
    %v870 = vand.u32 2147483647, %v170
    %vm871 = vcmp.le.f32.partialorder %v870, 0.7853982
    %vm872 = vcmp.lt.s32.totalorder %v170, 0
    %v873 = vand.u32 %v170, 2139095040
    %v874 = vshrl.u32 %v873, 23
    %v875 = vsub.s32 %v874, 127
    %v876 = vand.u32 2147483647, %v170
    %v877 = vand.u32 %v876, 8388607
    %v878 = vor.u32 %v877, 8388608
    %v879 = vsub.s32 0, %v878
    %v880 = vadd.s32 %v875, 1
    %vm881 = vcmp.gt.s32.totalorder %v880, 0
    %v882 = vsel %vm881, %v880, 0
    %v883 = vshrl.u32 %v882, 5
    %v884 = vand.u32 %v882, 31
    %v885 = vsub.s32 32, %v884
    %v886 = vshrl.u32 683565275, %v885
    %v887 = vshll.u32 683565275, %v884
    %v888 = vshrl.u32 2475754826, %v885
    %v889 = vor.u32 %v887, %v888
    %v890 = vshll.u32 2475754826, %v884
    %v891 = vshrl.u32 2131351028, %v885
    %v892 = vor.u32 %v890, %v891
    %v893 = vshll.u32 2131351028, %v884
    %v894 = vshrl.u32 2102212464, %v885
    %v895 = vor.u32 %v893, %v894
    %v896 = vshll.u32 2102212464, %v884
    %v897 = vshrl.u32 920167782, %v885
    %v898 = vor.u32 %v896, %v897
    %v899 = vshll.u32 920167782, %v884
    %v900 = vshrl.u32 1326507024, %v885
    %v901 = vor.u32 %v899, %v900
    %vm902 = vcmp.lt.s32.totalorder %v883, 1
    %vm903 = vcmp.lt.s32.totalorder %v883, 2
    %vm904 = vcmp.lt.s32.totalorder %v883, 3
    %vm905 = vcmp.lt.s32.totalorder %v883, 4
    %v906 = vsel %vm902, %v886, %v889
    %v907 = vsel %vm905, %v895, 2102212464
    %v908 = vsel %vm904, %v892, %v907
    %v909 = vsel %vm903, %v906, %v908
    %v910 = vsel %vm902, %v889, %v892
    %v911 = vsel %vm905, %v898, 920167782
    %v912 = vsel %vm904, %v895, %v911
    %v913 = vsel %vm903, %v910, %v912
    %v914 = vsel %vm902, %v892, %v895
    %v915 = vsel %vm905, %v901, 1326507024
    %v916 = vsel %vm904, %v898, %v915
    %v917 = vsel %vm903, %v914, %v916
    %v918 = vshll.u32 %v878, 8
    %v919 = vmul.u32.u64.compose %v918, %v917
    %v920 = vextract.low.u32 %v919
    %v921 = vextract.high.u32 %v919
    %v922 = vmul.u32.u64.compose %v918, %v913
    %v923 = vextract.low.u32 %v922
    %v924 = vextract.high.u32 %v922
    %v925 = vmul.u32 %v918, %v909
    %v926 = vadd.s32 %v921, %v923
    %vm927 = vc.u32 %v921, %v923
    %v928 = vadd.s32 %v924, 1
    %v929 = vsel %vm927, %v928, %v924
    %v930 = vadd.s32 %v925, %v929
    %v931 = vadd.s32 %v930, 536870912
    %v932 = vshrl.u32 %v931, 30
    %v933 = vshll.u32 %v932, 30
    %v934 = vsub.s32 %v930, %v933
    %vm935 = vcmp.lt.s32.totalorder %v934, 0
    %v936 = vsub.s32 0, %v934
    %v937 = vsel %vm935, %v936, %v934
    %v938 = vclz %v937
    %v939 = vsub.s32 %v938, 2
    %vm940 = vcmp.gt.s32.totalorder 0, %v939
    %v941 = vsel %vm940, 0, %v939
    %v942 = vsub.s32 32, %v941
    %v943 = vshll.u32 %v934, %v941
    %v944 = vshrl.u32 %v926, %v942
    %v945 = vor.u32 %v943, %v944
    %v946 = vsub.s32 4294967266, %v941
    %v947 = vadd.s32 %v946, 127
    %v948 = vshll.u32 %v947, 23
    %v949 = vor.u32 4788187, %v948
    %v950 = vand.u32 2147483647, %v949
    %v952 = vcvt.s32.f32 %v945
    %v953 = vmul.f32 %v952, %v950
    %v954 = vxor.u32 %v953, 2147483648
    %v955 = vsel %vm872, %v954, %v953
    %v956 = vsub.s32 4, %v932
    %v957 = vsel %vm872, %v956, %v932
    %v958 = vsel %vm871, %v170, %v955
    %v959 = vsel %vm871, 0, %v957
    %v960 = vcosq.f32.pop %v958
    %v961 = vsinq.f32.pop %v958
    %vm962 = vweird.f32 %v170
    %v963 = vadd.s32 %v959, 3
    %v964 = vand.u32 %v963, 3
    %vm965 = vcmp.lt.s32.totalorder %v964, 2
    %vm966 = vcmp.eq.s32.totalorder %v964, 0
    %v967 = vxor.u32 %v961, 2147483648
    %v968 = vsel %vm966, %v960, %v967
    %vm969 = vcmp.eq.s32.totalorder %v964, 2
    %v970 = vxor.u32 %v960, 2147483648
    %v971 = vsel %vm969, %v970, %v961
    %v972 = vsel %vm965, %v968, %v971
    %v973 = vsel %vm962, nan, %v972
    %v974 = vand.u32 2147483647, %v172
    %vm975 = vcmp.le.f32.partialorder %v974, 0.7853982
    %vm976 = vcmp.lt.s32.totalorder %v172, 0
    %v977 = vand.u32 %v172, 2139095040
    %v978 = vshrl.u32 %v977, 23
    %v979 = vsub.s32 %v978, 127
    %v980 = vand.u32 2147483647, %v172
    %v981 = vand.u32 %v980, 8388607
    %v982 = vor.u32 %v981, 8388608
    %v983 = vsub.s32 0, %v982
    %v984 = vadd.s32 %v979, 1
    %vm985 = vcmp.gt.s32.totalorder %v984, 0
    %v986 = vsel %vm985, %v984, 0
    %v987 = vshrl.u32 %v986, 5
    %v988 = vand.u32 %v986, 31
    %v989 = vsub.s32 32, %v988
    %v990 = vshrl.u32 683565275, %v989
    %v991 = vshll.u32 683565275, %v988
    %v992 = vshrl.u32 2475754826, %v989
    %v993 = vor.u32 %v991, %v992
    %v994 = vshll.u32 2475754826, %v988
    %v995 = vshrl.u32 2131351028, %v989
    %v996 = vor.u32 %v994, %v995
    %v997 = vshll.u32 2131351028, %v988
    %v998 = vshrl.u32 2102212464, %v989
    %v999 = vor.u32 %v997, %v998
    %v1000 = vshll.u32 2102212464, %v988
    %v1001 = vshrl.u32 920167782, %v989
    %v1002 = vor.u32 %v1000, %v1001
    %v1003 = vshll.u32 920167782, %v988
    %v1004 = vshrl.u32 1326507024, %v989
    %v1005 = vor.u32 %v1003, %v1004
    %vm1006 = vcmp.lt.s32.totalorder %v987, 1
    %vm1007 = vcmp.lt.s32.totalorder %v987, 2
    %vm1008 = vcmp.lt.s32.totalorder %v987, 3
    %vm1009 = vcmp.lt.s32.totalorder %v987, 4
    %v1010 = vsel %vm1006, %v990, %v993
    %v1011 = vsel %vm1009, %v999, 2102212464
    %v1012 = vsel %vm1008, %v996, %v1011
    %v1013 = vsel %vm1007, %v1010, %v1012
    %v1014 = vsel %vm1006, %v993, %v996
    %v1015 = vsel %vm1009, %v1002, 920167782
    %v1016 = vsel %vm1008, %v999, %v1015
    %v1017 = vsel %vm1007, %v1014, %v1016
    %v1018 = vsel %vm1006, %v996, %v999
    %v1019 = vsel %vm1009, %v1005, 1326507024
    %v1020 = vsel %vm1008, %v1002, %v1019
    %v1021 = vsel %vm1007, %v1018, %v1020
    %v1022 = vshll.u32 %v982, 8
    %v1023 = vmul.u32.u64.compose %v1022, %v1021
    %v1024 = vextract.low.u32 %v1023
    %v1025 = vextract.high.u32 %v1023
    %v1026 = vmul.u32.u64.compose %v1022, %v1017
    %v1027 = vextract.low.u32 %v1026
    %v1028 = vextract.high.u32 %v1026
    %v1029 = vmul.u32 %v1022, %v1013
    %v1030 = vadd.s32 %v1025, %v1027
    %vm1031 = vc.u32 %v1025, %v1027
    %v1032 = vadd.s32 %v1028, 1
    %v1033 = vsel %vm1031, %v1032, %v1028
    %v1034 = vadd.s32 %v1029, %v1033
    %v1035 = vadd.s32 %v1034, 536870912
    %v1036 = vshrl.u32 %v1035, 30
    %v1037 = vshll.u32 %v1036, 30
    %v1038 = vsub.s32 %v1034, %v1037
    %vm1039 = vcmp.lt.s32.totalorder %v1038, 0
    %v1040 = vsub.s32 0, %v1038
    %v1041 = vsel %vm1039, %v1040, %v1038
    %v1042 = vclz %v1041
    %v1043 = vsub.s32 %v1042, 2
    %vm1044 = vcmp.gt.s32.totalorder 0, %v1043
    %v1045 = vsel %vm1044, 0, %v1043
    %v1046 = vsub.s32 32, %v1045
    %v1047 = vshll.u32 %v1038, %v1045
    %v1048 = vshrl.u32 %v1030, %v1046
    %v1049 = vor.u32 %v1047, %v1048
    %v1050 = vsub.s32 4294967266, %v1045
    %v1051 = vadd.s32 %v1050, 127
    %v1052 = vshll.u32 %v1051, 23
    %v1053 = vor.u32 4788187, %v1052
    %v1054 = vand.u32 2147483647, %v1053
    %v1056 = vcvt.s32.f32 %v1049
    %v1057 = vmul.f32 %v1056, %v1054
    %v1058 = vxor.u32 %v1057, 2147483648
    %v1059 = vsel %vm976, %v1058, %v1057
    %v1060 = vsub.s32 4, %v1036
    %v1061 = vsel %vm976, %v1060, %v1036
    %v1062 = vsel %vm975, %v172, %v1059
    %v1063 = vsel %vm975, 0, %v1061
    %v1064 = vcosq.f32.pop %v1062
    %v1065 = vsinq.f32.pop %v1062
    %vm1066 = vweird.f32 %v172
    %v1067 = vadd.s32 %v1063, 3
    %v1068 = vand.u32 %v1067, 3
    %vm1069 = vcmp.lt.s32.totalorder %v1068, 2
    %vm1070 = vcmp.eq.s32.totalorder %v1068, 0
    %v1071 = vxor.u32 %v1065, 2147483648
    %v1072 = vsel %vm1070, %v1064, %v1071
    %vm1073 = vcmp.eq.s32.totalorder %v1068, 2
    %v1074 = vxor.u32 %v1064, 2147483648
    %v1075 = vsel %vm1073, %v1074, %v1065
    %v1076 = vsel %vm1069, %v1072, %v1075
    %v1077 = vsel %vm1066, nan, %v1076
    %v1078 = vand.u32 2147483647, %v176
    %vm1079 = vcmp.le.f32.partialorder %v1078, 0.7853982
    %vm1080 = vcmp.lt.s32.totalorder %v176, 0
    %v1081 = vand.u32 %v176, 2139095040
    %v1082 = vshrl.u32 %v1081, 23
    %v1083 = vsub.s32 %v1082, 127
    %v1084 = vand.u32 2147483647, %v176
    %v1085 = vand.u32 %v1084, 8388607
    %v1086 = vor.u32 %v1085, 8388608
    %v1087 = vsub.s32 0, %v1086
    %v1088 = vadd.s32 %v1083, 1
    %vm1089 = vcmp.gt.s32.totalorder %v1088, 0
    %v1090 = vsel %vm1089, %v1088, 0
    %v1091 = vshrl.u32 %v1090, 5
    %v1092 = vand.u32 %v1090, 31
    %v1093 = vsub.s32 32, %v1092
    %v1094 = vshrl.u32 683565275, %v1093
    %v1095 = vshll.u32 683565275, %v1092
    %v1096 = vshrl.u32 2475754826, %v1093
    %v1097 = vor.u32 %v1095, %v1096
    %v1098 = vshll.u32 2475754826, %v1092
    %v1099 = vshrl.u32 2131351028, %v1093
    %v1100 = vor.u32 %v1098, %v1099
    %v1101 = vshll.u32 2131351028, %v1092
    %v1102 = vshrl.u32 2102212464, %v1093
    %v1103 = vor.u32 %v1101, %v1102
    %v1104 = vshll.u32 2102212464, %v1092
    %v1105 = vshrl.u32 920167782, %v1093
    %v1106 = vor.u32 %v1104, %v1105
    %v1107 = vshll.u32 920167782, %v1092
    %v1108 = vshrl.u32 1326507024, %v1093
    %v1109 = vor.u32 %v1107, %v1108
    %vm1110 = vcmp.lt.s32.totalorder %v1091, 1
    %vm1111 = vcmp.lt.s32.totalorder %v1091, 2
    %vm1112 = vcmp.lt.s32.totalorder %v1091, 3
    %vm1113 = vcmp.lt.s32.totalorder %v1091, 4
    %v1114 = vsel %vm1110, %v1094, %v1097
    %v1115 = vsel %vm1113, %v1103, 2102212464
    %v1116 = vsel %vm1112, %v1100, %v1115
    %v1117 = vsel %vm1111, %v1114, %v1116
    %v1118 = vsel %vm1110, %v1097, %v1100
    %v1119 = vsel %vm1113, %v1106, 920167782
    %v1120 = vsel %vm1112, %v1103, %v1119
    %v1121 = vsel %vm1111, %v1118, %v1120
    %v1122 = vsel %vm1110, %v1100, %v1103
    %v1123 = vsel %vm1113, %v1109, 1326507024
    %v1124 = vsel %vm1112, %v1106, %v1123
    %v1125 = vsel %vm1111, %v1122, %v1124
    %v1126 = vshll.u32 %v1086, 8
    %v1127 = vmul.u32.u64.compose %v1126, %v1125
    %v1128 = vextract.low.u32 %v1127
    %v1129 = vextract.high.u32 %v1127
    %v1130 = vmul.u32.u64.compose %v1126, %v1121
    %v1131 = vextract.low.u32 %v1130
    %v1132 = vextract.high.u32 %v1130
    %v1133 = vmul.u32 %v1126, %v1117
    %v1134 = vadd.s32 %v1129, %v1131
    %vm1135 = vc.u32 %v1129, %v1131
    %v1136 = vadd.s32 %v1132, 1
    %v1137 = vsel %vm1135, %v1136, %v1132
    %v1138 = vadd.s32 %v1133, %v1137
    %v1139 = vadd.s32 %v1138, 536870912
    %v1140 = vshrl.u32 %v1139, 30
    %v1141 = vshll.u32 %v1140, 30
    %v1142 = vsub.s32 %v1138, %v1141
    %vm1143 = vcmp.lt.s32.totalorder %v1142, 0
    %v1144 = vsub.s32 0, %v1142
    %v1145 = vsel %vm1143, %v1144, %v1142
    %v1146 = vclz %v1145
    %v1147 = vsub.s32 %v1146, 2
    %vm1148 = vcmp.gt.s32.totalorder 0, %v1147
    %v1149 = vsel %vm1148, 0, %v1147
    %v1150 = vsub.s32 32, %v1149
    %v1151 = vshll.u32 %v1142, %v1149
    %v1152 = vshrl.u32 %v1134, %v1150
    %v1153 = vor.u32 %v1151, %v1152
    %v1154 = vsub.s32 4294967266, %v1149
    %v1155 = vadd.s32 %v1154, 127
    %v1156 = vshll.u32 %v1155, 23
    %v1157 = vor.u32 4788187, %v1156
    %v1158 = vand.u32 2147483647, %v1157
    %v1160 = vcvt.s32.f32 %v1153
    %v1161 = vmul.f32 %v1160, %v1158
    %v1162 = vxor.u32 %v1161, 2147483648
    %v1163 = vsel %vm1080, %v1162, %v1161
    %v1164 = vsub.s32 4, %v1140
    %v1165 = vsel %vm1080, %v1164, %v1140
    %v1166 = vsel %vm1079, %v176, %v1163
    %v1167 = vsel %vm1079, 0, %v1165
    %v1168 = vcosq.f32.pop %v1166
    %v1169 = vsinq.f32.pop %v1166
    %vm1170 = vweird.f32 %v176
    %v1171 = vadd.s32 %v1167, 3
    %v1172 = vand.u32 %v1171, 3
    %vm1173 = vcmp.lt.s32.totalorder %v1172, 2
    %vm1174 = vcmp.eq.s32.totalorder %v1172, 0
    %v1175 = vxor.u32 %v1169, 2147483648
    %v1176 = vsel %vm1174, %v1168, %v1175
    %vm1177 = vcmp.eq.s32.totalorder %v1172, 2
    %v1178 = vxor.u32 %v1168, 2147483648
    %v1179 = vsel %vm1177, %v1178, %v1169
    %v1180 = vsel %vm1173, %v1176, %v1179
    %v1181 = vsel %vm1170, nan, %v1180
    %v1182 = vand.u32 2147483647, %v178
    %vm1183 = vcmp.le.f32.partialorder %v1182, 0.7853982
    %vm1184 = vcmp.lt.s32.totalorder %v178, 0
    %v1185 = vand.u32 %v178, 2139095040
    %v1186 = vshrl.u32 %v1185, 23
    %v1187 = vsub.s32 %v1186, 127
    %v1188 = vand.u32 2147483647, %v178
    %v1189 = vand.u32 %v1188, 8388607
    %v1190 = vor.u32 %v1189, 8388608
    %v1191 = vsub.s32 0, %v1190
    %v1192 = vadd.s32 %v1187, 1
    %vm1193 = vcmp.gt.s32.totalorder %v1192, 0
    %v1194 = vsel %vm1193, %v1192, 0
    %v1195 = vshrl.u32 %v1194, 5
    %v1196 = vand.u32 %v1194, 31
    %v1197 = vsub.s32 32, %v1196
    %v1198 = vshrl.u32 683565275, %v1197
    %v1199 = vshll.u32 683565275, %v1196
    %v1200 = vshrl.u32 2475754826, %v1197
    %v1201 = vor.u32 %v1199, %v1200
    %v1202 = vshll.u32 2475754826, %v1196
    %v1203 = vshrl.u32 2131351028, %v1197
    %v1204 = vor.u32 %v1202, %v1203
    %v1205 = vshll.u32 2131351028, %v1196
    %v1206 = vshrl.u32 2102212464, %v1197
    %v1207 = vor.u32 %v1205, %v1206
    %v1208 = vshll.u32 2102212464, %v1196
    %v1209 = vshrl.u32 920167782, %v1197
    %v1210 = vor.u32 %v1208, %v1209
    %v1211 = vshll.u32 920167782, %v1196
    %v1212 = vshrl.u32 1326507024, %v1197
    %v1213 = vor.u32 %v1211, %v1212
    %vm1214 = vcmp.lt.s32.totalorder %v1195, 1
    %vm1215 = vcmp.lt.s32.totalorder %v1195, 2
    %vm1216 = vcmp.lt.s32.totalorder %v1195, 3
    %vm1217 = vcmp.lt.s32.totalorder %v1195, 4
    %v1218 = vsel %vm1214, %v1198, %v1201
    %v1219 = vsel %vm1217, %v1207, 2102212464
    %v1220 = vsel %vm1216, %v1204, %v1219
    %v1221 = vsel %vm1215, %v1218, %v1220
    %v1222 = vsel %vm1214, %v1201, %v1204
    %v1223 = vsel %vm1217, %v1210, 920167782
    %v1224 = vsel %vm1216, %v1207, %v1223
    %v1225 = vsel %vm1215, %v1222, %v1224
    %v1226 = vsel %vm1214, %v1204, %v1207
    %v1227 = vsel %vm1217, %v1213, 1326507024
    %v1228 = vsel %vm1216, %v1210, %v1227
    %v1229 = vsel %vm1215, %v1226, %v1228
    %v1230 = vshll.u32 %v1190, 8
    %v1231 = vmul.u32.u64.compose %v1230, %v1229
    %v1232 = vextract.low.u32 %v1231
    %v1233 = vextract.high.u32 %v1231
    %v1234 = vmul.u32.u64.compose %v1230, %v1225
    %v1235 = vextract.low.u32 %v1234
    %v1236 = vextract.high.u32 %v1234
    %v1237 = vmul.u32 %v1230, %v1221
    %v1238 = vadd.s32 %v1233, %v1235
    %vm1239 = vc.u32 %v1233, %v1235
    %v1240 = vadd.s32 %v1236, 1
    %v1241 = vsel %vm1239, %v1240, %v1236
    %v1242 = vadd.s32 %v1237, %v1241
    %v1243 = vadd.s32 %v1242, 536870912
    %v1244 = vshrl.u32 %v1243, 30
    %v1245 = vshll.u32 %v1244, 30
    %v1246 = vsub.s32 %v1242, %v1245
    %vm1247 = vcmp.lt.s32.totalorder %v1246, 0
    %v1248 = vsub.s32 0, %v1246
    %v1249 = vsel %vm1247, %v1248, %v1246
    %v1250 = vclz %v1249
    %v1251 = vsub.s32 %v1250, 2
    %vm1252 = vcmp.gt.s32.totalorder 0, %v1251
    %v1253 = vsel %vm1252, 0, %v1251
    %v1254 = vsub.s32 32, %v1253
    %v1255 = vshll.u32 %v1246, %v1253
    %v1256 = vshrl.u32 %v1238, %v1254
    %v1257 = vor.u32 %v1255, %v1256
    %v1258 = vsub.s32 4294967266, %v1253
    %v1259 = vadd.s32 %v1258, 127
    %v1260 = vshll.u32 %v1259, 23
    %v1261 = vor.u32 4788187, %v1260
    %v1262 = vand.u32 2147483647, %v1261
    %v1264 = vcvt.s32.f32 %v1257
    %v1265 = vmul.f32 %v1264, %v1262
    %v1266 = vxor.u32 %v1265, 2147483648
    %v1267 = vsel %vm1184, %v1266, %v1265
    %v1268 = vsub.s32 4, %v1244
    %v1269 = vsel %vm1184, %v1268, %v1244
    %v1270 = vsel %vm1183, %v178, %v1267
    %v1271 = vsel %vm1183, 0, %v1269
    %v1272 = vcosq.f32.pop %v1270
    %v1273 = vsinq.f32.pop %v1270
    %vm1274 = vweird.f32 %v178
    %v1275 = vadd.s32 %v1271, 3
    %v1276 = vand.u32 %v1275, 3
    %vm1277 = vcmp.lt.s32.totalorder %v1276, 2
    %vm1278 = vcmp.eq.s32.totalorder %v1276, 0
    %v1279 = vxor.u32 %v1273, 2147483648
    %v1280 = vsel %vm1278, %v1272, %v1279
    %vm1281 = vcmp.eq.s32.totalorder %v1276, 2
    %v1282 = vxor.u32 %v1272, 2147483648
    %v1283 = vsel %vm1281, %v1282, %v1273
    %v1284 = vsel %vm1277, %v1280, %v1283
    %v1285 = vsel %vm1274, nan, %v1284
    %v1286 = vand.u32 2147483647, %v182
    %vm1287 = vcmp.le.f32.partialorder %v1286, 0.7853982
    %vm1288 = vcmp.lt.s32.totalorder %v182, 0
    %v1289 = vand.u32 %v182, 2139095040
    %v1290 = vshrl.u32 %v1289, 23
    %v1291 = vsub.s32 %v1290, 127
    %v1292 = vand.u32 2147483647, %v182
    %v1293 = vand.u32 %v1292, 8388607
    %v1294 = vor.u32 %v1293, 8388608
    %v1295 = vsub.s32 0, %v1294
    %v1296 = vadd.s32 %v1291, 1
    %vm1297 = vcmp.gt.s32.totalorder %v1296, 0
    %v1298 = vsel %vm1297, %v1296, 0
    %v1299 = vshrl.u32 %v1298, 5
    %v1300 = vand.u32 %v1298, 31
    %v1301 = vsub.s32 32, %v1300
    %v1302 = vshrl.u32 683565275, %v1301
    %v1303 = vshll.u32 683565275, %v1300
    %v1304 = vshrl.u32 2475754826, %v1301
    %v1305 = vor.u32 %v1303, %v1304
    %v1306 = vshll.u32 2475754826, %v1300
    %v1307 = vshrl.u32 2131351028, %v1301
    %v1308 = vor.u32 %v1306, %v1307
    %v1309 = vshll.u32 2131351028, %v1300
    %v1310 = vshrl.u32 2102212464, %v1301
    %v1311 = vor.u32 %v1309, %v1310
    %v1312 = vshll.u32 2102212464, %v1300
    %v1313 = vshrl.u32 920167782, %v1301
    %v1314 = vor.u32 %v1312, %v1313
    %v1315 = vshll.u32 920167782, %v1300
    %v1316 = vshrl.u32 1326507024, %v1301
    %v1317 = vor.u32 %v1315, %v1316
    %vm1318 = vcmp.lt.s32.totalorder %v1299, 1
    %vm1319 = vcmp.lt.s32.totalorder %v1299, 2
    %vm1320 = vcmp.lt.s32.totalorder %v1299, 3
    %vm1321 = vcmp.lt.s32.totalorder %v1299, 4
    %v1322 = vsel %vm1318, %v1302, %v1305
    %v1323 = vsel %vm1321, %v1311, 2102212464
    %v1324 = vsel %vm1320, %v1308, %v1323
    %v1325 = vsel %vm1319, %v1322, %v1324
    %v1326 = vsel %vm1318, %v1305, %v1308
    %v1327 = vsel %vm1321, %v1314, 920167782
    %v1328 = vsel %vm1320, %v1311, %v1327
    %v1329 = vsel %vm1319, %v1326, %v1328
    %v1330 = vsel %vm1318, %v1308, %v1311
    %v1331 = vsel %vm1321, %v1317, 1326507024
    %v1332 = vsel %vm1320, %v1314, %v1331
    %v1333 = vsel %vm1319, %v1330, %v1332
    %v1334 = vshll.u32 %v1294, 8
    %v1335 = vmul.u32.u64.compose %v1334, %v1333
    %v1336 = vextract.low.u32 %v1335
    %v1337 = vextract.high.u32 %v1335
    %v1338 = vmul.u32.u64.compose %v1334, %v1329
    %v1339 = vextract.low.u32 %v1338
    %v1340 = vextract.high.u32 %v1338
    %v1341 = vmul.u32 %v1334, %v1325
    %v1342 = vadd.s32 %v1337, %v1339
    %vm1343 = vc.u32 %v1337, %v1339
    %v1344 = vadd.s32 %v1340, 1
    %v1345 = vsel %vm1343, %v1344, %v1340
    %v1346 = vadd.s32 %v1341, %v1345
    %v1347 = vadd.s32 %v1346, 536870912
    %v1348 = vshrl.u32 %v1347, 30
    %v1349 = vshll.u32 %v1348, 30
    %v1350 = vsub.s32 %v1346, %v1349
    %vm1351 = vcmp.lt.s32.totalorder %v1350, 0
    %v1352 = vsub.s32 0, %v1350
    %v1353 = vsel %vm1351, %v1352, %v1350
    %v1354 = vclz %v1353
    %v1355 = vsub.s32 %v1354, 2
    %vm1356 = vcmp.gt.s32.totalorder 0, %v1355
    %v1357 = vsel %vm1356, 0, %v1355
    %v1358 = vsub.s32 32, %v1357
    %v1359 = vshll.u32 %v1350, %v1357
    %v1360 = vshrl.u32 %v1342, %v1358
    %v1361 = vor.u32 %v1359, %v1360
    %v1362 = vsub.s32 4294967266, %v1357
    %v1363 = vadd.s32 %v1362, 127
    %v1364 = vshll.u32 %v1363, 23
    %v1365 = vor.u32 4788187, %v1364
    %v1366 = vand.u32 2147483647, %v1365
    %v1368 = vcvt.s32.f32 %v1361
    %v1369 = vmul.f32 %v1368, %v1366
    %v1370 = vxor.u32 %v1369, 2147483648
    %v1371 = vsel %vm1288, %v1370, %v1369
    %v1372 = vsub.s32 4, %v1348
    %v1373 = vsel %vm1288, %v1372, %v1348
    %v1374 = vsel %vm1287, %v182, %v1371
    %v1375 = vsel %vm1287, 0, %v1373
    %v1376 = vcosq.f32.pop %v1374
    %v1377 = vsinq.f32.pop %v1374
    %vm1378 = vweird.f32 %v182
    %v1379 = vadd.s32 %v1375, 3
    %v1380 = vand.u32 %v1379, 3
    %vm1381 = vcmp.lt.s32.totalorder %v1380, 2
    %vm1382 = vcmp.eq.s32.totalorder %v1380, 0
    %v1383 = vxor.u32 %v1377, 2147483648
    %v1384 = vsel %vm1382, %v1376, %v1383
    %vm1385 = vcmp.eq.s32.totalorder %v1380, 2
    %v1386 = vxor.u32 %v1376, 2147483648
    %v1387 = vsel %vm1385, %v1386, %v1377
    %v1388 = vsel %vm1381, %v1384, %v1387
    %v1389 = vsel %vm1378, nan, %v1388
    %v1390 = vand.u32 2147483647, %v184
    %vm1391 = vcmp.le.f32.partialorder %v1390, 0.7853982
    %vm1392 = vcmp.lt.s32.totalorder %v184, 0
    %v1393 = vand.u32 %v184, 2139095040
    %v1394 = vshrl.u32 %v1393, 23
    %v1395 = vsub.s32 %v1394, 127
    %v1396 = vand.u32 2147483647, %v184
    %v1397 = vand.u32 %v1396, 8388607
    %v1398 = vor.u32 %v1397, 8388608
    %v1399 = vsub.s32 0, %v1398
    %v1400 = vadd.s32 %v1395, 1
    %vm1401 = vcmp.gt.s32.totalorder %v1400, 0
    %v1402 = vsel %vm1401, %v1400, 0
    %v1403 = vshrl.u32 %v1402, 5
    %v1404 = vand.u32 %v1402, 31
    %v1405 = vsub.s32 32, %v1404
    %v1406 = vshrl.u32 683565275, %v1405
    %v1407 = vshll.u32 683565275, %v1404
    %v1408 = vshrl.u32 2475754826, %v1405
    %v1409 = vor.u32 %v1407, %v1408
    %v1410 = vshll.u32 2475754826, %v1404
    %v1411 = vshrl.u32 2131351028, %v1405
    %v1412 = vor.u32 %v1410, %v1411
    %v1413 = vshll.u32 2131351028, %v1404
    %v1414 = vshrl.u32 2102212464, %v1405
    %v1415 = vor.u32 %v1413, %v1414
    %v1416 = vshll.u32 2102212464, %v1404
    %v1417 = vshrl.u32 920167782, %v1405
    %v1418 = vor.u32 %v1416, %v1417
    %v1419 = vshll.u32 920167782, %v1404
    %v1420 = vshrl.u32 1326507024, %v1405
    %v1421 = vor.u32 %v1419, %v1420
    %vm1422 = vcmp.lt.s32.totalorder %v1403, 1
    %vm1423 = vcmp.lt.s32.totalorder %v1403, 2
    %vm1424 = vcmp.lt.s32.totalorder %v1403, 3
    %vm1425 = vcmp.lt.s32.totalorder %v1403, 4
    %v1426 = vsel %vm1422, %v1406, %v1409
    %v1427 = vsel %vm1425, %v1415, 2102212464
    %v1428 = vsel %vm1424, %v1412, %v1427
    %v1429 = vsel %vm1423, %v1426, %v1428
    %v1430 = vsel %vm1422, %v1409, %v1412
    %v1431 = vsel %vm1425, %v1418, 920167782
    %v1432 = vsel %vm1424, %v1415, %v1431
    %v1433 = vsel %vm1423, %v1430, %v1432
    %v1434 = vsel %vm1422, %v1412, %v1415
    %v1435 = vsel %vm1425, %v1421, 1326507024
    %v1436 = vsel %vm1424, %v1418, %v1435
    %v1437 = vsel %vm1423, %v1434, %v1436
    %v1438 = vshll.u32 %v1398, 8
    %v1439 = vmul.u32.u64.compose %v1438, %v1437
    %v1440 = vextract.low.u32 %v1439
    %v1441 = vextract.high.u32 %v1439
    %v1442 = vmul.u32.u64.compose %v1438, %v1433
    %v1443 = vextract.low.u32 %v1442
    %v1444 = vextract.high.u32 %v1442
    %v1445 = vmul.u32 %v1438, %v1429
    %v1446 = vadd.s32 %v1441, %v1443
    %vm1447 = vc.u32 %v1441, %v1443
    %v1448 = vadd.s32 %v1444, 1
    %v1449 = vsel %vm1447, %v1448, %v1444
    %v1450 = vadd.s32 %v1445, %v1449
    %v1451 = vadd.s32 %v1450, 536870912
    %v1452 = vshrl.u32 %v1451, 30
    %v1453 = vshll.u32 %v1452, 30
    %v1454 = vsub.s32 %v1450, %v1453
    %vm1455 = vcmp.lt.s32.totalorder %v1454, 0
    %v1456 = vsub.s32 0, %v1454
    %v1457 = vsel %vm1455, %v1456, %v1454
    %v1458 = vclz %v1457
    %v1459 = vsub.s32 %v1458, 2
    %vm1460 = vcmp.gt.s32.totalorder 0, %v1459
    %v1461 = vsel %vm1460, 0, %v1459
    %v1462 = vsub.s32 32, %v1461
    %v1463 = vshll.u32 %v1454, %v1461
    %v1464 = vshrl.u32 %v1446, %v1462
    %v1465 = vor.u32 %v1463, %v1464
    %v1466 = vsub.s32 4294967266, %v1461
    %v1467 = vadd.s32 %v1466, 127
    %v1468 = vshll.u32 %v1467, 23
    %v1469 = vor.u32 4788187, %v1468
    %v1470 = vand.u32 2147483647, %v1469
    %v1472 = vcvt.s32.f32 %v1465
    %v1473 = vmul.f32 %v1472, %v1470
    %v1474 = vxor.u32 %v1473, 2147483648
    %v1475 = vsel %vm1392, %v1474, %v1473
    %v1476 = vsub.s32 4, %v1452
    %v1477 = vsel %vm1392, %v1476, %v1452
    %v1478 = vsel %vm1391, %v184, %v1475
    %v1479 = vsel %vm1391, 0, %v1477
    %v1480 = vcosq.f32.pop %v1478
    %v1481 = vsinq.f32.pop %v1478
    %vm1482 = vweird.f32 %v184
    %v1483 = vadd.s32 %v1479, 3
    %v1484 = vand.u32 %v1483, 3
    %vm1485 = vcmp.lt.s32.totalorder %v1484, 2
    %vm1486 = vcmp.eq.s32.totalorder %v1484, 0
    %v1487 = vxor.u32 %v1481, 2147483648
    %v1488 = vsel %vm1486, %v1480, %v1487
    %vm1489 = vcmp.eq.s32.totalorder %v1484, 2
    %v1490 = vxor.u32 %v1480, 2147483648
    %v1491 = vsel %vm1489, %v1490, %v1481
    %v1492 = vsel %vm1485, %v1488, %v1491
    %v1493 = vsel %vm1482, nan, %v1492
    %v1494 = vand.u32 2147483647, %v188
    %vm1495 = vcmp.le.f32.partialorder %v1494, 0.7853982
    %vm1496 = vcmp.lt.s32.totalorder %v188, 0
    %v1497 = vand.u32 %v188, 2139095040
    %v1498 = vshrl.u32 %v1497, 23
    %v1499 = vsub.s32 %v1498, 127
    %v1500 = vand.u32 2147483647, %v188
    %v1501 = vand.u32 %v1500, 8388607
    %v1502 = vor.u32 %v1501, 8388608
    %v1503 = vsub.s32 0, %v1502
    %v1504 = vadd.s32 %v1499, 1
    %vm1505 = vcmp.gt.s32.totalorder %v1504, 0
    %v1506 = vsel %vm1505, %v1504, 0
    %v1507 = vshrl.u32 %v1506, 5
    %v1508 = vand.u32 %v1506, 31
    %v1509 = vsub.s32 32, %v1508
    %v1510 = vshrl.u32 683565275, %v1509
    %v1511 = vshll.u32 683565275, %v1508
    %v1512 = vshrl.u32 2475754826, %v1509
    %v1513 = vor.u32 %v1511, %v1512
    %v1514 = vshll.u32 2475754826, %v1508
    %v1515 = vshrl.u32 2131351028, %v1509
    %v1516 = vor.u32 %v1514, %v1515
    %v1517 = vshll.u32 2131351028, %v1508
    %v1518 = vshrl.u32 2102212464, %v1509
    %v1519 = vor.u32 %v1517, %v1518
    %v1520 = vshll.u32 2102212464, %v1508
    %v1521 = vshrl.u32 920167782, %v1509
    %v1522 = vor.u32 %v1520, %v1521
    %v1523 = vshll.u32 920167782, %v1508
    %v1524 = vshrl.u32 1326507024, %v1509
    %v1525 = vor.u32 %v1523, %v1524
    %vm1526 = vcmp.lt.s32.totalorder %v1507, 1
    %vm1527 = vcmp.lt.s32.totalorder %v1507, 2
    %vm1528 = vcmp.lt.s32.totalorder %v1507, 3
    %vm1529 = vcmp.lt.s32.totalorder %v1507, 4
    %v1530 = vsel %vm1526, %v1510, %v1513
    %v1531 = vsel %vm1529, %v1519, 2102212464
    %v1532 = vsel %vm1528, %v1516, %v1531
    %v1533 = vsel %vm1527, %v1530, %v1532
    %v1534 = vsel %vm1526, %v1513, %v1516
    %v1535 = vsel %vm1529, %v1522, 920167782
    %v1536 = vsel %vm1528, %v1519, %v1535
    %v1537 = vsel %vm1527, %v1534, %v1536
    %v1538 = vsel %vm1526, %v1516, %v1519
    %v1539 = vsel %vm1529, %v1525, 1326507024
    %v1540 = vsel %vm1528, %v1522, %v1539
    %v1541 = vsel %vm1527, %v1538, %v1540
    %v1542 = vshll.u32 %v1502, 8
    %v1543 = vmul.u32.u64.compose %v1542, %v1541
    %v1544 = vextract.low.u32 %v1543
    %v1545 = vextract.high.u32 %v1543
    %v1546 = vmul.u32.u64.compose %v1542, %v1537
    %v1547 = vextract.low.u32 %v1546
    %v1548 = vextract.high.u32 %v1546
    %v1549 = vmul.u32 %v1542, %v1533
    %v1550 = vadd.s32 %v1545, %v1547
    %vm1551 = vc.u32 %v1545, %v1547
    %v1552 = vadd.s32 %v1548, 1
    %v1553 = vsel %vm1551, %v1552, %v1548
    %v1554 = vadd.s32 %v1549, %v1553
    %v1555 = vadd.s32 %v1554, 536870912
    %v1556 = vshrl.u32 %v1555, 30
    %v1557 = vshll.u32 %v1556, 30
    %v1558 = vsub.s32 %v1554, %v1557
    %vm1559 = vcmp.lt.s32.totalorder %v1558, 0
    %v1560 = vsub.s32 0, %v1558
    %v1561 = vsel %vm1559, %v1560, %v1558
    %v1562 = vclz %v1561
    %v1563 = vsub.s32 %v1562, 2
    %vm1564 = vcmp.gt.s32.totalorder 0, %v1563
    %v1565 = vsel %vm1564, 0, %v1563
    %v1566 = vsub.s32 32, %v1565
    %v1567 = vshll.u32 %v1558, %v1565
    %v1568 = vshrl.u32 %v1550, %v1566
    %v1569 = vor.u32 %v1567, %v1568
    %v1570 = vsub.s32 4294967266, %v1565
    %v1571 = vadd.s32 %v1570, 127
    %v1572 = vshll.u32 %v1571, 23
    %v1573 = vor.u32 4788187, %v1572
    %v1574 = vand.u32 2147483647, %v1573
    %v1576 = vcvt.s32.f32 %v1569
    %v1577 = vmul.f32 %v1576, %v1574
    %v1578 = vxor.u32 %v1577, 2147483648
    %v1579 = vsel %vm1496, %v1578, %v1577
    %v1580 = vsub.s32 4, %v1556
    %v1581 = vsel %vm1496, %v1580, %v1556
    %v1582 = vsel %vm1495, %v188, %v1579
    %v1583 = vsel %vm1495, 0, %v1581
    %v1584 = vcosq.f32.pop %v1582
    %v1585 = vsinq.f32.pop %v1582
    %vm1586 = vweird.f32 %v188
    %v1587 = vadd.s32 %v1583, 3
    %v1588 = vand.u32 %v1587, 3
    %vm1589 = vcmp.lt.s32.totalorder %v1588, 2
    %vm1590 = vcmp.eq.s32.totalorder %v1588, 0
    %v1591 = vxor.u32 %v1585, 2147483648
    %v1592 = vsel %vm1590, %v1584, %v1591
    %vm1593 = vcmp.eq.s32.totalorder %v1588, 2
    %v1594 = vxor.u32 %v1584, 2147483648
    %v1595 = vsel %vm1593, %v1594, %v1585
    %v1596 = vsel %vm1589, %v1592, %v1595
    %v1597 = vsel %vm1586, nan, %v1596
    %v1598 = vand.u32 2147483647, %v190
    %vm1599 = vcmp.le.f32.partialorder %v1598, 0.7853982
    %vm1600 = vcmp.lt.s32.totalorder %v190, 0
    %v1601 = vand.u32 %v190, 2139095040
    %v1602 = vshrl.u32 %v1601, 23
    %v1603 = vsub.s32 %v1602, 127
    %v1604 = vand.u32 2147483647, %v190
    %v1605 = vand.u32 %v1604, 8388607
    %v1606 = vor.u32 %v1605, 8388608
    %v1607 = vsub.s32 0, %v1606
    %v1608 = vadd.s32 %v1603, 1
    %vm1609 = vcmp.gt.s32.totalorder %v1608, 0
    %v1610 = vsel %vm1609, %v1608, 0
    %v1611 = vshrl.u32 %v1610, 5
    %v1612 = vand.u32 %v1610, 31
    %v1613 = vsub.s32 32, %v1612
    %v1614 = vshrl.u32 683565275, %v1613
    %v1615 = vshll.u32 683565275, %v1612
    %v1616 = vshrl.u32 2475754826, %v1613
    %v1617 = vor.u32 %v1615, %v1616
    %v1618 = vshll.u32 2475754826, %v1612
    %v1619 = vshrl.u32 2131351028, %v1613
    %v1620 = vor.u32 %v1618, %v1619
    %v1621 = vshll.u32 2131351028, %v1612
    %v1622 = vshrl.u32 2102212464, %v1613
    %v1623 = vor.u32 %v1621, %v1622
    %v1624 = vshll.u32 2102212464, %v1612
    %v1625 = vshrl.u32 920167782, %v1613
    %v1626 = vor.u32 %v1624, %v1625
    %v1627 = vshll.u32 920167782, %v1612
    %v1628 = vshrl.u32 1326507024, %v1613
    %v1629 = vor.u32 %v1627, %v1628
    %vm1630 = vcmp.lt.s32.totalorder %v1611, 1
    %vm1631 = vcmp.lt.s32.totalorder %v1611, 2
    %vm1632 = vcmp.lt.s32.totalorder %v1611, 3
    %vm1633 = vcmp.lt.s32.totalorder %v1611, 4
    %v1634 = vsel %vm1630, %v1614, %v1617
    %v1635 = vsel %vm1633, %v1623, 2102212464
    %v1636 = vsel %vm1632, %v1620, %v1635
    %v1637 = vsel %vm1631, %v1634, %v1636
    %v1638 = vsel %vm1630, %v1617, %v1620
    %v1639 = vsel %vm1633, %v1626, 920167782
    %v1640 = vsel %vm1632, %v1623, %v1639
    %v1641 = vsel %vm1631, %v1638, %v1640
    %v1642 = vsel %vm1630, %v1620, %v1623
    %v1643 = vsel %vm1633, %v1629, 1326507024
    %v1644 = vsel %vm1632, %v1626, %v1643
    %v1645 = vsel %vm1631, %v1642, %v1644
    %v1646 = vshll.u32 %v1606, 8
    %v1647 = vmul.u32.u64.compose %v1646, %v1645
    %v1648 = vextract.low.u32 %v1647
    %v1649 = vextract.high.u32 %v1647
    %v1650 = vmul.u32.u64.compose %v1646, %v1641
    %v1651 = vextract.low.u32 %v1650
    %v1652 = vextract.high.u32 %v1650
    %v1653 = vmul.u32 %v1646, %v1637
    %v1654 = vadd.s32 %v1649, %v1651
    %vm1655 = vc.u32 %v1649, %v1651
    %v1656 = vadd.s32 %v1652, 1
    %v1657 = vsel %vm1655, %v1656, %v1652
    %v1658 = vadd.s32 %v1653, %v1657
    %v1659 = vadd.s32 %v1658, 536870912
    %v1660 = vshrl.u32 %v1659, 30
    %v1661 = vshll.u32 %v1660, 30
    %v1662 = vsub.s32 %v1658, %v1661
    %vm1663 = vcmp.lt.s32.totalorder %v1662, 0
    %v1664 = vsub.s32 0, %v1662
    %v1665 = vsel %vm1663, %v1664, %v1662
    %v1666 = vclz %v1665
    %v1667 = vsub.s32 %v1666, 2
    %vm1668 = vcmp.gt.s32.totalorder 0, %v1667
    %v1669 = vsel %vm1668, 0, %v1667
    %v1670 = vsub.s32 32, %v1669
    %v1671 = vshll.u32 %v1662, %v1669
    %v1672 = vshrl.u32 %v1654, %v1670
    %v1673 = vor.u32 %v1671, %v1672
    %v1674 = vsub.s32 4294967266, %v1669
    %v1675 = vadd.s32 %v1674, 127
    %v1676 = vshll.u32 %v1675, 23
    %v1677 = vor.u32 4788187, %v1676
    %v1678 = vand.u32 2147483647, %v1677
    %v1680 = vcvt.s32.f32 %v1673
    %v1681 = vmul.f32 %v1680, %v1678
    %v1682 = vxor.u32 %v1681, 2147483648
    %v1683 = vsel %vm1600, %v1682, %v1681
    %v1684 = vsub.s32 4, %v1660
    %v1685 = vsel %vm1600, %v1684, %v1660
    %v1686 = vsel %vm1599, %v190, %v1683
    %v1687 = vsel %vm1599, 0, %v1685
    %v1688 = vcosq.f32.pop %v1686
    %v1689 = vsinq.f32.pop %v1686
    %vm1690 = vweird.f32 %v190
    %v1691 = vadd.s32 %v1687, 3
    %v1692 = vand.u32 %v1691, 3
    %vm1693 = vcmp.lt.s32.totalorder %v1692, 2
    %vm1694 = vcmp.eq.s32.totalorder %v1692, 0
    %v1695 = vxor.u32 %v1689, 2147483648
    %v1696 = vsel %vm1694, %v1688, %v1695
    %vm1697 = vcmp.eq.s32.totalorder %v1692, 2
    %v1698 = vxor.u32 %v1688, 2147483648
    %v1699 = vsel %vm1697, %v1698, %v1689
    %v1700 = vsel %vm1693, %v1696, %v1699
    %v1701 = vsel %vm1690, nan, %v1700
    %v1702 = vand.u32 2147483647, %v194
    %vm1703 = vcmp.le.f32.partialorder %v1702, 0.7853982
    %vm1704 = vcmp.lt.s32.totalorder %v194, 0
    %v1705 = vand.u32 %v194, 2139095040
    %v1706 = vshrl.u32 %v1705, 23
    %v1707 = vsub.s32 %v1706, 127
    %v1708 = vand.u32 2147483647, %v194
    %v1709 = vand.u32 %v1708, 8388607
    %v1710 = vor.u32 %v1709, 8388608
    %v1711 = vsub.s32 0, %v1710
    %v1712 = vadd.s32 %v1707, 1
    %vm1713 = vcmp.gt.s32.totalorder %v1712, 0
    %v1714 = vsel %vm1713, %v1712, 0
    %v1715 = vshrl.u32 %v1714, 5
    %v1716 = vand.u32 %v1714, 31
    %v1717 = vsub.s32 32, %v1716
    %v1718 = vshrl.u32 683565275, %v1717
    %v1719 = vshll.u32 683565275, %v1716
    %v1720 = vshrl.u32 2475754826, %v1717
    %v1721 = vor.u32 %v1719, %v1720
    %v1722 = vshll.u32 2475754826, %v1716
    %v1723 = vshrl.u32 2131351028, %v1717
    %v1724 = vor.u32 %v1722, %v1723
    %v1725 = vshll.u32 2131351028, %v1716
    %v1726 = vshrl.u32 2102212464, %v1717
    %v1727 = vor.u32 %v1725, %v1726
    %v1728 = vshll.u32 2102212464, %v1716
    %v1729 = vshrl.u32 920167782, %v1717
    %v1730 = vor.u32 %v1728, %v1729
    %v1731 = vshll.u32 920167782, %v1716
    %v1732 = vshrl.u32 1326507024, %v1717
    %v1733 = vor.u32 %v1731, %v1732
    %vm1734 = vcmp.lt.s32.totalorder %v1715, 1
    %vm1735 = vcmp.lt.s32.totalorder %v1715, 2
    %vm1736 = vcmp.lt.s32.totalorder %v1715, 3
    %vm1737 = vcmp.lt.s32.totalorder %v1715, 4
    %v1738 = vsel %vm1734, %v1718, %v1721
    %v1739 = vsel %vm1737, %v1727, 2102212464
    %v1740 = vsel %vm1736, %v1724, %v1739
    %v1741 = vsel %vm1735, %v1738, %v1740
    %v1742 = vsel %vm1734, %v1721, %v1724
    %v1743 = vsel %vm1737, %v1730, 920167782
    %v1744 = vsel %vm1736, %v1727, %v1743
    %v1745 = vsel %vm1735, %v1742, %v1744
    %v1746 = vsel %vm1734, %v1724, %v1727
    %v1747 = vsel %vm1737, %v1733, 1326507024
    %v1748 = vsel %vm1736, %v1730, %v1747
    %v1749 = vsel %vm1735, %v1746, %v1748
    %v1750 = vshll.u32 %v1710, 8
    %v1751 = vmul.u32.u64.compose %v1750, %v1749
    %v1752 = vextract.low.u32 %v1751
    %v1753 = vextract.high.u32 %v1751
    %v1754 = vmul.u32.u64.compose %v1750, %v1745
    %v1755 = vextract.low.u32 %v1754
    %v1756 = vextract.high.u32 %v1754
    %v1757 = vmul.u32 %v1750, %v1741
    %v1758 = vadd.s32 %v1753, %v1755
    %vm1759 = vc.u32 %v1753, %v1755
    %v1760 = vadd.s32 %v1756, 1
    %v1761 = vsel %vm1759, %v1760, %v1756
    %v1762 = vadd.s32 %v1757, %v1761
    %v1763 = vadd.s32 %v1762, 536870912
    %v1764 = vshrl.u32 %v1763, 30
    %v1765 = vshll.u32 %v1764, 30
    %v1766 = vsub.s32 %v1762, %v1765
    %vm1767 = vcmp.lt.s32.totalorder %v1766, 0
    %v1768 = vsub.s32 0, %v1766
    %v1769 = vsel %vm1767, %v1768, %v1766
    %v1770 = vclz %v1769
    %v1771 = vsub.s32 %v1770, 2
    %vm1772 = vcmp.gt.s32.totalorder 0, %v1771
    %v1773 = vsel %vm1772, 0, %v1771
    %v1774 = vsub.s32 32, %v1773
    %v1775 = vshll.u32 %v1766, %v1773
    %v1776 = vshrl.u32 %v1758, %v1774
    %v1777 = vor.u32 %v1775, %v1776
    %v1778 = vsub.s32 4294967266, %v1773
    %v1779 = vadd.s32 %v1778, 127
    %v1780 = vshll.u32 %v1779, 23
    %v1781 = vor.u32 4788187, %v1780
    %v1782 = vand.u32 2147483647, %v1781
    %v1784 = vcvt.s32.f32 %v1777
    %v1785 = vmul.f32 %v1784, %v1782
    %v1786 = vxor.u32 %v1785, 2147483648
    %v1787 = vsel %vm1704, %v1786, %v1785
    %v1788 = vsub.s32 4, %v1764
    %v1789 = vsel %vm1704, %v1788, %v1764
    %v1790 = vsel %vm1703, %v194, %v1787
    %v1791 = vsel %vm1703, 0, %v1789
    %v1792 = vcosq.f32.pop %v1790
    %v1793 = vsinq.f32.pop %v1790
    %vm1794 = vweird.f32 %v194
    %v1795 = vadd.s32 %v1791, 3
    %v1796 = vand.u32 %v1795, 3
    %vm1797 = vcmp.lt.s32.totalorder %v1796, 2
    %vm1798 = vcmp.eq.s32.totalorder %v1796, 0
    %v1799 = vxor.u32 %v1793, 2147483648
    %v1800 = vsel %vm1798, %v1792, %v1799
    %vm1801 = vcmp.eq.s32.totalorder %v1796, 2
    %v1802 = vxor.u32 %v1792, 2147483648
    %v1803 = vsel %vm1801, %v1802, %v1793
    %v1804 = vsel %vm1797, %v1800, %v1803
    %v1805 = vsel %vm1794, nan, %v1804
    %v1806 = vand.u32 2147483647, %v196
    %vm1807 = vcmp.le.f32.partialorder %v1806, 0.7853982
    %vm1808 = vcmp.lt.s32.totalorder %v196, 0
    %v1809 = vand.u32 %v196, 2139095040
    %v1810 = vshrl.u32 %v1809, 23
    %v1811 = vsub.s32 %v1810, 127
    %v1812 = vand.u32 2147483647, %v196
    %v1813 = vand.u32 %v1812, 8388607
    %v1814 = vor.u32 %v1813, 8388608
    %v1815 = vsub.s32 0, %v1814
    %v1816 = vadd.s32 %v1811, 1
    %vm1817 = vcmp.gt.s32.totalorder %v1816, 0
    %v1818 = vsel %vm1817, %v1816, 0
    %v1819 = vshrl.u32 %v1818, 5
    %v1820 = vand.u32 %v1818, 31
    %v1821 = vsub.s32 32, %v1820
    %v1822 = vshrl.u32 683565275, %v1821
    %v1823 = vshll.u32 683565275, %v1820
    %v1824 = vshrl.u32 2475754826, %v1821
    %v1825 = vor.u32 %v1823, %v1824
    %v1826 = vshll.u32 2475754826, %v1820
    %v1827 = vshrl.u32 2131351028, %v1821
    %v1828 = vor.u32 %v1826, %v1827
    %v1829 = vshll.u32 2131351028, %v1820
    %v1830 = vshrl.u32 2102212464, %v1821
    %v1831 = vor.u32 %v1829, %v1830
    %v1832 = vshll.u32 2102212464, %v1820
    %v1833 = vshrl.u32 920167782, %v1821
    %v1834 = vor.u32 %v1832, %v1833
    %v1835 = vshll.u32 920167782, %v1820
    %v1836 = vshrl.u32 1326507024, %v1821
    %v1837 = vor.u32 %v1835, %v1836
    %vm1838 = vcmp.lt.s32.totalorder %v1819, 1
    %vm1839 = vcmp.lt.s32.totalorder %v1819, 2
    %vm1840 = vcmp.lt.s32.totalorder %v1819, 3
    %vm1841 = vcmp.lt.s32.totalorder %v1819, 4
    %v1842 = vsel %vm1838, %v1822, %v1825
    %v1843 = vsel %vm1841, %v1831, 2102212464
    %v1844 = vsel %vm1840, %v1828, %v1843
    %v1845 = vsel %vm1839, %v1842, %v1844
    %v1846 = vsel %vm1838, %v1825, %v1828
    %v1847 = vsel %vm1841, %v1834, 920167782
    %v1848 = vsel %vm1840, %v1831, %v1847
    %v1849 = vsel %vm1839, %v1846, %v1848
    %v1850 = vsel %vm1838, %v1828, %v1831
    %v1851 = vsel %vm1841, %v1837, 1326507024
    %v1852 = vsel %vm1840, %v1834, %v1851
    %v1853 = vsel %vm1839, %v1850, %v1852
    %v1854 = vshll.u32 %v1814, 8
    %v1855 = vmul.u32.u64.compose %v1854, %v1853
    %v1856 = vextract.low.u32 %v1855
    %v1857 = vextract.high.u32 %v1855
    %v1858 = vmul.u32.u64.compose %v1854, %v1849
    %v1859 = vextract.low.u32 %v1858
    %v1860 = vextract.high.u32 %v1858
    %v1861 = vmul.u32 %v1854, %v1845
    %v1862 = vadd.s32 %v1857, %v1859
    %vm1863 = vc.u32 %v1857, %v1859
    %v1864 = vadd.s32 %v1860, 1
    %v1865 = vsel %vm1863, %v1864, %v1860
    %v1866 = vadd.s32 %v1861, %v1865
    %v1867 = vadd.s32 %v1866, 536870912
    %v1868 = vshrl.u32 %v1867, 30
    %v1869 = vshll.u32 %v1868, 30
    %v1870 = vsub.s32 %v1866, %v1869
    %vm1871 = vcmp.lt.s32.totalorder %v1870, 0
    %v1872 = vsub.s32 0, %v1870
    %v1873 = vsel %vm1871, %v1872, %v1870
    %v1874 = vclz %v1873
    %v1875 = vsub.s32 %v1874, 2
    %vm1876 = vcmp.gt.s32.totalorder 0, %v1875
    %v1877 = vsel %vm1876, 0, %v1875
    %v1878 = vsub.s32 32, %v1877
    %v1879 = vshll.u32 %v1870, %v1877
    %v1880 = vshrl.u32 %v1862, %v1878
    %v1881 = vor.u32 %v1879, %v1880
    %v1882 = vsub.s32 4294967266, %v1877
    %v1883 = vadd.s32 %v1882, 127
    %v1884 = vshll.u32 %v1883, 23
    %v1885 = vor.u32 4788187, %v1884
    %v1886 = vand.u32 2147483647, %v1885
    %v1888 = vcvt.s32.f32 %v1881
    %v1889 = vmul.f32 %v1888, %v1886
    %v1890 = vxor.u32 %v1889, 2147483648
    %v1891 = vsel %vm1808, %v1890, %v1889
    %v1892 = vsub.s32 4, %v1868
    %v1893 = vsel %vm1808, %v1892, %v1868
    %v1894 = vsel %vm1807, %v196, %v1891
    %v1895 = vsel %vm1807, 0, %v1893
    %v1896 = vcosq.f32.pop %v1894
    %v1897 = vsinq.f32.pop %v1894
    %vm1898 = vweird.f32 %v196
    %v1899 = vadd.s32 %v1895, 3
    %v1900 = vand.u32 %v1899, 3
    %vm1901 = vcmp.lt.s32.totalorder %v1900, 2
    %vm1902 = vcmp.eq.s32.totalorder %v1900, 0
    %v1903 = vxor.u32 %v1897, 2147483648
    %v1904 = vsel %vm1902, %v1896, %v1903
    %vm1905 = vcmp.eq.s32.totalorder %v1900, 2
    %v1906 = vxor.u32 %v1896, 2147483648
    %v1907 = vsel %vm1905, %v1906, %v1897
    %v1908 = vsel %vm1901, %v1904, %v1907
    %v1909 = vsel %vm1898, nan, %v1908
    %v1910 = vand.u32 2147483647, %v200
    %vm1911 = vcmp.le.f32.partialorder %v1910, 0.7853982
    %vm1912 = vcmp.lt.s32.totalorder %v200, 0
    %v1913 = vand.u32 %v200, 2139095040
    %v1914 = vshrl.u32 %v1913, 23
    %v1915 = vsub.s32 %v1914, 127
    %v1916 = vand.u32 2147483647, %v200
    %v1917 = vand.u32 %v1916, 8388607
    %v1918 = vor.u32 %v1917, 8388608
    %v1919 = vsub.s32 0, %v1918
    %v1920 = vadd.s32 %v1915, 1
    %vm1921 = vcmp.gt.s32.totalorder %v1920, 0
    %v1922 = vsel %vm1921, %v1920, 0
    %v1923 = vshrl.u32 %v1922, 5
    %v1924 = vand.u32 %v1922, 31
    %v1925 = vsub.s32 32, %v1924
    %v1926 = vshrl.u32 683565275, %v1925
    %v1927 = vshll.u32 683565275, %v1924
    %v1928 = vshrl.u32 2475754826, %v1925
    %v1929 = vor.u32 %v1927, %v1928
    %v1930 = vshll.u32 2475754826, %v1924
    %v1931 = vshrl.u32 2131351028, %v1925
    %v1932 = vor.u32 %v1930, %v1931
    %v1933 = vshll.u32 2131351028, %v1924
    %v1934 = vshrl.u32 2102212464, %v1925
    %v1935 = vor.u32 %v1933, %v1934
    %v1936 = vshll.u32 2102212464, %v1924
    %v1937 = vshrl.u32 920167782, %v1925
    %v1938 = vor.u32 %v1936, %v1937
    %v1939 = vshll.u32 920167782, %v1924
    %v1940 = vshrl.u32 1326507024, %v1925
    %v1941 = vor.u32 %v1939, %v1940
    %vm1942 = vcmp.lt.s32.totalorder %v1923, 1
    %vm1943 = vcmp.lt.s32.totalorder %v1923, 2
    %vm1944 = vcmp.lt.s32.totalorder %v1923, 3
    %vm1945 = vcmp.lt.s32.totalorder %v1923, 4
    %v1946 = vsel %vm1942, %v1926, %v1929
    %v1947 = vsel %vm1945, %v1935, 2102212464
    %v1948 = vsel %vm1944, %v1932, %v1947
    %v1949 = vsel %vm1943, %v1946, %v1948
    %v1950 = vsel %vm1942, %v1929, %v1932
    %v1951 = vsel %vm1945, %v1938, 920167782
    %v1952 = vsel %vm1944, %v1935, %v1951
    %v1953 = vsel %vm1943, %v1950, %v1952
    %v1954 = vsel %vm1942, %v1932, %v1935
    %v1955 = vsel %vm1945, %v1941, 1326507024
    %v1956 = vsel %vm1944, %v1938, %v1955
    %v1957 = vsel %vm1943, %v1954, %v1956
    %v1958 = vshll.u32 %v1918, 8
    %v1959 = vmul.u32.u64.compose %v1958, %v1957
    %v1960 = vextract.low.u32 %v1959
    %v1961 = vextract.high.u32 %v1959
    %v1962 = vmul.u32.u64.compose %v1958, %v1953
    %v1963 = vextract.low.u32 %v1962
    %v1964 = vextract.high.u32 %v1962
    %v1965 = vmul.u32 %v1958, %v1949
    %v1966 = vadd.s32 %v1961, %v1963
    %vm1967 = vc.u32 %v1961, %v1963
    %v1968 = vadd.s32 %v1964, 1
    %v1969 = vsel %vm1967, %v1968, %v1964
    %v1970 = vadd.s32 %v1965, %v1969
    %v1971 = vadd.s32 %v1970, 536870912
    %v1972 = vshrl.u32 %v1971, 30
    %v1973 = vshll.u32 %v1972, 30
    %v1974 = vsub.s32 %v1970, %v1973
    %vm1975 = vcmp.lt.s32.totalorder %v1974, 0
    %v1976 = vsub.s32 0, %v1974
    %v1977 = vsel %vm1975, %v1976, %v1974
    %v1978 = vclz %v1977
    %v1979 = vsub.s32 %v1978, 2
    %vm1980 = vcmp.gt.s32.totalorder 0, %v1979
    %v1981 = vsel %vm1980, 0, %v1979
    %v1982 = vsub.s32 32, %v1981
    %v1983 = vshll.u32 %v1974, %v1981
    %v1984 = vshrl.u32 %v1966, %v1982
    %v1985 = vor.u32 %v1983, %v1984
    %v1986 = vsub.s32 4294967266, %v1981
    %v1987 = vadd.s32 %v1986, 127
    %v1988 = vshll.u32 %v1987, 23
    %v1989 = vor.u32 4788187, %v1988
    %v1990 = vand.u32 2147483647, %v1989
    %v1992 = vcvt.s32.f32 %v1985
    %v1993 = vmul.f32 %v1992, %v1990
    %v1994 = vxor.u32 %v1993, 2147483648
    %v1995 = vsel %vm1912, %v1994, %v1993
    %v1996 = vsub.s32 4, %v1972
    %v1997 = vsel %vm1912, %v1996, %v1972
    %v1998 = vsel %vm1911, %v200, %v1995
    %v1999 = vsel %vm1911, 0, %v1997
    %v2000 = vcosq.f32.pop %v1998
    %v2001 = vsinq.f32.pop %v1998
    %vm2002 = vweird.f32 %v200
    %v2003 = vadd.s32 %v1999, 3
    %v2004 = vand.u32 %v2003, 3
    %vm2005 = vcmp.lt.s32.totalorder %v2004, 2
    %vm2006 = vcmp.eq.s32.totalorder %v2004, 0
    %v2007 = vxor.u32 %v2001, 2147483648
    %v2008 = vsel %vm2006, %v2000, %v2007
    %vm2009 = vcmp.eq.s32.totalorder %v2004, 2
    %v2010 = vxor.u32 %v2000, 2147483648
    %v2011 = vsel %vm2009, %v2010, %v2001
    %v2012 = vsel %vm2005, %v2008, %v2011
    %v2013 = vsel %vm2002, nan, %v2012
    %v2014 = vand.u32 2147483647, %v202
    %vm2015 = vcmp.le.f32.partialorder %v2014, 0.7853982
    %vm2016 = vcmp.lt.s32.totalorder %v202, 0
    %v2017 = vand.u32 %v202, 2139095040
    %v2018 = vshrl.u32 %v2017, 23
    %v2019 = vsub.s32 %v2018, 127
    %v2020 = vand.u32 2147483647, %v202
    %v2021 = vand.u32 %v2020, 8388607
    %v2022 = vor.u32 %v2021, 8388608
    %v2023 = vsub.s32 0, %v2022
    %v2024 = vadd.s32 %v2019, 1
    %vm2025 = vcmp.gt.s32.totalorder %v2024, 0
    %v2026 = vsel %vm2025, %v2024, 0
    %v2027 = vshrl.u32 %v2026, 5
    %v2028 = vand.u32 %v2026, 31
    %v2029 = vsub.s32 32, %v2028
    %v2030 = vshrl.u32 683565275, %v2029
    %v2031 = vshll.u32 683565275, %v2028
    %v2032 = vshrl.u32 2475754826, %v2029
    %v2033 = vor.u32 %v2031, %v2032
    %v2034 = vshll.u32 2475754826, %v2028
    %v2035 = vshrl.u32 2131351028, %v2029
    %v2036 = vor.u32 %v2034, %v2035
    %v2037 = vshll.u32 2131351028, %v2028
    %v2038 = vshrl.u32 2102212464, %v2029
    %v2039 = vor.u32 %v2037, %v2038
    %v2040 = vshll.u32 2102212464, %v2028
    %v2041 = vshrl.u32 920167782, %v2029
    %v2042 = vor.u32 %v2040, %v2041
    %v2043 = vshll.u32 920167782, %v2028
    %v2044 = vshrl.u32 1326507024, %v2029
    %v2045 = vor.u32 %v2043, %v2044
    %vm2046 = vcmp.lt.s32.totalorder %v2027, 1
    %vm2047 = vcmp.lt.s32.totalorder %v2027, 2
    %vm2048 = vcmp.lt.s32.totalorder %v2027, 3
    %vm2049 = vcmp.lt.s32.totalorder %v2027, 4
    %v2050 = vsel %vm2046, %v2030, %v2033
    %v2051 = vsel %vm2049, %v2039, 2102212464
    %v2052 = vsel %vm2048, %v2036, %v2051
    %v2053 = vsel %vm2047, %v2050, %v2052
    %v2054 = vsel %vm2046, %v2033, %v2036
    %v2055 = vsel %vm2049, %v2042, 920167782
    %v2056 = vsel %vm2048, %v2039, %v2055
    %v2057 = vsel %vm2047, %v2054, %v2056
    %v2058 = vsel %vm2046, %v2036, %v2039
    %v2059 = vsel %vm2049, %v2045, 1326507024
    %v2060 = vsel %vm2048, %v2042, %v2059
    %v2061 = vsel %vm2047, %v2058, %v2060
    %v2062 = vshll.u32 %v2022, 8
    %v2063 = vmul.u32.u64.compose %v2062, %v2061
    %v2064 = vextract.low.u32 %v2063
    %v2065 = vextract.high.u32 %v2063
    %v2066 = vmul.u32.u64.compose %v2062, %v2057
    %v2067 = vextract.low.u32 %v2066
    %v2068 = vextract.high.u32 %v2066
    %v2069 = vmul.u32 %v2062, %v2053
    %v2070 = vadd.s32 %v2065, %v2067
    %vm2071 = vc.u32 %v2065, %v2067
    %v2072 = vadd.s32 %v2068, 1
    %v2073 = vsel %vm2071, %v2072, %v2068
    %v2074 = vadd.s32 %v2069, %v2073
    %v2075 = vadd.s32 %v2074, 536870912
    %v2076 = vshrl.u32 %v2075, 30
    %v2077 = vshll.u32 %v2076, 30
    %v2078 = vsub.s32 %v2074, %v2077
    %vm2079 = vcmp.lt.s32.totalorder %v2078, 0
    %v2080 = vsub.s32 0, %v2078
    %v2081 = vsel %vm2079, %v2080, %v2078
    %v2082 = vclz %v2081
    %v2083 = vsub.s32 %v2082, 2
    %vm2084 = vcmp.gt.s32.totalorder 0, %v2083
    %v2085 = vsel %vm2084, 0, %v2083
    %v2086 = vsub.s32 32, %v2085
    %v2087 = vshll.u32 %v2078, %v2085
    %v2088 = vshrl.u32 %v2070, %v2086
    %v2089 = vor.u32 %v2087, %v2088
    %v2090 = vsub.s32 4294967266, %v2085
    %v2091 = vadd.s32 %v2090, 127
    %v2092 = vshll.u32 %v2091, 23
    %v2093 = vor.u32 4788187, %v2092
    %v2094 = vand.u32 2147483647, %v2093
    %v2096 = vcvt.s32.f32 %v2089
    %v2097 = vmul.f32 %v2096, %v2094
    %v2098 = vxor.u32 %v2097, 2147483648
    %v2099 = vsel %vm2016, %v2098, %v2097
    %v2100 = vsub.s32 4, %v2076
    %v2101 = vsel %vm2016, %v2100, %v2076
    %v2102 = vsel %vm2015, %v202, %v2099
    %v2103 = vsel %vm2015, 0, %v2101
    %v2104 = vcosq.f32.pop %v2102
    %v2105 = vsinq.f32.pop %v2102
    %vm2106 = vweird.f32 %v202
    %v2107 = vadd.s32 %v2103, 3
    %v2108 = vand.u32 %v2107, 3
    %vm2109 = vcmp.lt.s32.totalorder %v2108, 2
    %vm2110 = vcmp.eq.s32.totalorder %v2108, 0
    %v2111 = vxor.u32 %v2105, 2147483648
    %v2112 = vsel %vm2110, %v2104, %v2111
    %vm2113 = vcmp.eq.s32.totalorder %v2108, 2
    %v2114 = vxor.u32 %v2104, 2147483648
    %v2115 = vsel %vm2113, %v2114, %v2105
    %v2116 = vsel %vm2109, %v2112, %v2115
    %v2117 = vsel %vm2106, nan, %v2116
    %v2118 = vand.u32 2147483647, %v206
    %vm2119 = vcmp.le.f32.partialorder %v2118, 0.7853982
    %vm2120 = vcmp.lt.s32.totalorder %v206, 0
    %v2121 = vand.u32 %v206, 2139095040
    %v2122 = vshrl.u32 %v2121, 23
    %v2123 = vsub.s32 %v2122, 127
    %v2124 = vand.u32 2147483647, %v206
    %v2125 = vand.u32 %v2124, 8388607
    %v2126 = vor.u32 %v2125, 8388608
    %v2127 = vsub.s32 0, %v2126
    %v2128 = vadd.s32 %v2123, 1
    %vm2129 = vcmp.gt.s32.totalorder %v2128, 0
    %v2130 = vsel %vm2129, %v2128, 0
    %v2131 = vshrl.u32 %v2130, 5
    %v2132 = vand.u32 %v2130, 31
    %v2133 = vsub.s32 32, %v2132
    %v2134 = vshrl.u32 683565275, %v2133
    %v2135 = vshll.u32 683565275, %v2132
    %v2136 = vshrl.u32 2475754826, %v2133
    %v2137 = vor.u32 %v2135, %v2136
    %v2138 = vshll.u32 2475754826, %v2132
    %v2139 = vshrl.u32 2131351028, %v2133
    %v2140 = vor.u32 %v2138, %v2139
    %v2141 = vshll.u32 2131351028, %v2132
    %v2142 = vshrl.u32 2102212464, %v2133
    %v2143 = vor.u32 %v2141, %v2142
    %v2144 = vshll.u32 2102212464, %v2132
    %v2145 = vshrl.u32 920167782, %v2133
    %v2146 = vor.u32 %v2144, %v2145
    %v2147 = vshll.u32 920167782, %v2132
    %v2148 = vshrl.u32 1326507024, %v2133
    %v2149 = vor.u32 %v2147, %v2148
    %vm2150 = vcmp.lt.s32.totalorder %v2131, 1
    %vm2151 = vcmp.lt.s32.totalorder %v2131, 2
    %vm2152 = vcmp.lt.s32.totalorder %v2131, 3
    %vm2153 = vcmp.lt.s32.totalorder %v2131, 4
    %v2154 = vsel %vm2150, %v2134, %v2137
    %v2155 = vsel %vm2153, %v2143, 2102212464
    %v2156 = vsel %vm2152, %v2140, %v2155
    %v2157 = vsel %vm2151, %v2154, %v2156
    %v2158 = vsel %vm2150, %v2137, %v2140
    %v2159 = vsel %vm2153, %v2146, 920167782
    %v2160 = vsel %vm2152, %v2143, %v2159
    %v2161 = vsel %vm2151, %v2158, %v2160
    %v2162 = vsel %vm2150, %v2140, %v2143
    %v2163 = vsel %vm2153, %v2149, 1326507024
    %v2164 = vsel %vm2152, %v2146, %v2163
    %v2165 = vsel %vm2151, %v2162, %v2164
    %v2166 = vshll.u32 %v2126, 8
    %v2167 = vmul.u32.u64.compose %v2166, %v2165
    %v2168 = vextract.low.u32 %v2167
    %v2169 = vextract.high.u32 %v2167
    %v2170 = vmul.u32.u64.compose %v2166, %v2161
    %v2171 = vextract.low.u32 %v2170
    %v2172 = vextract.high.u32 %v2170
    %v2173 = vmul.u32 %v2166, %v2157
    %v2174 = vadd.s32 %v2169, %v2171
    %vm2175 = vc.u32 %v2169, %v2171
    %v2176 = vadd.s32 %v2172, 1
    %v2177 = vsel %vm2175, %v2176, %v2172
    %v2178 = vadd.s32 %v2173, %v2177
    %v2179 = vadd.s32 %v2178, 536870912
    %v2180 = vshrl.u32 %v2179, 30
    %v2181 = vshll.u32 %v2180, 30
    %v2182 = vsub.s32 %v2178, %v2181
    %vm2183 = vcmp.lt.s32.totalorder %v2182, 0
    %v2184 = vsub.s32 0, %v2182
    %v2185 = vsel %vm2183, %v2184, %v2182
    %v2186 = vclz %v2185
    %v2187 = vsub.s32 %v2186, 2
    %vm2188 = vcmp.gt.s32.totalorder 0, %v2187
    %v2189 = vsel %vm2188, 0, %v2187
    %v2190 = vsub.s32 32, %v2189
    %v2191 = vshll.u32 %v2182, %v2189
    %v2192 = vshrl.u32 %v2174, %v2190
    %v2193 = vor.u32 %v2191, %v2192
    %v2194 = vsub.s32 4294967266, %v2189
    %v2195 = vadd.s32 %v2194, 127
    %v2196 = vshll.u32 %v2195, 23
    %v2197 = vor.u32 4788187, %v2196
    %v2198 = vand.u32 2147483647, %v2197
    %v2200 = vcvt.s32.f32 %v2193
    %v2201 = vmul.f32 %v2200, %v2198
    %v2202 = vxor.u32 %v2201, 2147483648
    %v2203 = vsel %vm2120, %v2202, %v2201
    %v2204 = vsub.s32 4, %v2180
    %v2205 = vsel %vm2120, %v2204, %v2180
    %v2206 = vsel %vm2119, %v206, %v2203
    %v2207 = vsel %vm2119, 0, %v2205
    %v2208 = vcosq.f32.pop %v2206
    %v2209 = vsinq.f32.pop %v2206
    %vm2210 = vweird.f32 %v206
    %v2211 = vadd.s32 %v2207, 3
    %v2212 = vand.u32 %v2211, 3
    %vm2213 = vcmp.lt.s32.totalorder %v2212, 2
    %vm2214 = vcmp.eq.s32.totalorder %v2212, 0
    %v2215 = vxor.u32 %v2209, 2147483648
    %v2216 = vsel %vm2214, %v2208, %v2215
    %vm2217 = vcmp.eq.s32.totalorder %v2212, 2
    %v2218 = vxor.u32 %v2208, 2147483648
    %v2219 = vsel %vm2217, %v2218, %v2209
    %v2220 = vsel %vm2213, %v2216, %v2219
    %v2221 = vsel %vm2210, nan, %v2220
    %v2222 = vand.u32 2147483647, %v208
    %vm2223 = vcmp.le.f32.partialorder %v2222, 0.7853982
    %vm2224 = vcmp.lt.s32.totalorder %v208, 0
    %v2225 = vand.u32 %v208, 2139095040
    %v2226 = vshrl.u32 %v2225, 23
    %v2227 = vsub.s32 %v2226, 127
    %v2228 = vand.u32 2147483647, %v208
    %v2229 = vand.u32 %v2228, 8388607
    %v2230 = vor.u32 %v2229, 8388608
    %v2231 = vsub.s32 0, %v2230
    %v2232 = vadd.s32 %v2227, 1
    %vm2233 = vcmp.gt.s32.totalorder %v2232, 0
    %v2234 = vsel %vm2233, %v2232, 0
    %v2235 = vshrl.u32 %v2234, 5
    %v2236 = vand.u32 %v2234, 31
    %v2237 = vsub.s32 32, %v2236
    %v2238 = vshrl.u32 683565275, %v2237
    %v2239 = vshll.u32 683565275, %v2236
    %v2240 = vshrl.u32 2475754826, %v2237
    %v2241 = vor.u32 %v2239, %v2240
    %v2242 = vshll.u32 2475754826, %v2236
    %v2243 = vshrl.u32 2131351028, %v2237
    %v2244 = vor.u32 %v2242, %v2243
    %v2245 = vshll.u32 2131351028, %v2236
    %v2246 = vshrl.u32 2102212464, %v2237
    %v2247 = vor.u32 %v2245, %v2246
    %v2248 = vshll.u32 2102212464, %v2236
    %v2249 = vshrl.u32 920167782, %v2237
    %v2250 = vor.u32 %v2248, %v2249
    %v2251 = vshll.u32 920167782, %v2236
    %v2252 = vshrl.u32 1326507024, %v2237
    %v2253 = vor.u32 %v2251, %v2252
    %vm2254 = vcmp.lt.s32.totalorder %v2235, 1
    %vm2255 = vcmp.lt.s32.totalorder %v2235, 2
    %vm2256 = vcmp.lt.s32.totalorder %v2235, 3
    %vm2257 = vcmp.lt.s32.totalorder %v2235, 4
    %v2258 = vsel %vm2254, %v2238, %v2241
    %v2259 = vsel %vm2257, %v2247, 2102212464
    %v2260 = vsel %vm2256, %v2244, %v2259
    %v2261 = vsel %vm2255, %v2258, %v2260
    %v2262 = vsel %vm2254, %v2241, %v2244
    %v2263 = vsel %vm2257, %v2250, 920167782
    %v2264 = vsel %vm2256, %v2247, %v2263
    %v2265 = vsel %vm2255, %v2262, %v2264
    %v2266 = vsel %vm2254, %v2244, %v2247
    %v2267 = vsel %vm2257, %v2253, 1326507024
    %v2268 = vsel %vm2256, %v2250, %v2267
    %v2269 = vsel %vm2255, %v2266, %v2268
    %v2270 = vshll.u32 %v2230, 8
    %v2271 = vmul.u32.u64.compose %v2270, %v2269
    %v2272 = vextract.low.u32 %v2271
    %v2273 = vextract.high.u32 %v2271
    %v2274 = vmul.u32.u64.compose %v2270, %v2265
    %v2275 = vextract.low.u32 %v2274
    %v2276 = vextract.high.u32 %v2274
    %v2277 = vmul.u32 %v2270, %v2261
    %v2278 = vadd.s32 %v2273, %v2275
    %vm2279 = vc.u32 %v2273, %v2275
    %v2280 = vadd.s32 %v2276, 1
    %v2281 = vsel %vm2279, %v2280, %v2276
    %v2282 = vadd.s32 %v2277, %v2281
    %v2283 = vadd.s32 %v2282, 536870912
    %v2284 = vshrl.u32 %v2283, 30
    %v2285 = vshll.u32 %v2284, 30
    %v2286 = vsub.s32 %v2282, %v2285
    %vm2287 = vcmp.lt.s32.totalorder %v2286, 0
    %v2288 = vsub.s32 0, %v2286
    %v2289 = vsel %vm2287, %v2288, %v2286
    %v2290 = vclz %v2289
    %v2291 = vsub.s32 %v2290, 2
    %vm2292 = vcmp.gt.s32.totalorder 0, %v2291
    %v2293 = vsel %vm2292, 0, %v2291
    %v2294 = vsub.s32 32, %v2293
    %v2295 = vshll.u32 %v2286, %v2293
    %v2296 = vshrl.u32 %v2278, %v2294
    %v2297 = vor.u32 %v2295, %v2296
    %v2298 = vsub.s32 4294967266, %v2293
    %v2299 = vadd.s32 %v2298, 127
    %v2300 = vshll.u32 %v2299, 23
    %v2301 = vor.u32 4788187, %v2300
    %v2302 = vand.u32 2147483647, %v2301
    %v2304 = vcvt.s32.f32 %v2297
    %v2305 = vmul.f32 %v2304, %v2302
    %v2306 = vxor.u32 %v2305, 2147483648
    %v2307 = vsel %vm2224, %v2306, %v2305
    %v2308 = vsub.s32 4, %v2284
    %v2309 = vsel %vm2224, %v2308, %v2284
    %v2310 = vsel %vm2223, %v208, %v2307
    %v2311 = vsel %vm2223, 0, %v2309
    %v2312 = vcosq.f32.pop %v2310
    %v2313 = vsinq.f32.pop %v2310
    %vm2314 = vweird.f32 %v208
    %v2315 = vadd.s32 %v2311, 3
    %v2316 = vand.u32 %v2315, 3
    %vm2317 = vcmp.lt.s32.totalorder %v2316, 2
    %vm2318 = vcmp.eq.s32.totalorder %v2316, 0
    %v2319 = vxor.u32 %v2313, 2147483648
    %v2320 = vsel %vm2318, %v2312, %v2319
    %vm2321 = vcmp.eq.s32.totalorder %v2316, 2
    %v2322 = vxor.u32 %v2312, 2147483648
    %v2323 = vsel %vm2321, %v2322, %v2313
    %v2324 = vsel %vm2317, %v2320, %v2323
    %v2325 = vsel %vm2314, nan, %v2324
    %v2326 = vand.u32 2147483647, %v212
    %vm2327 = vcmp.le.f32.partialorder %v2326, 0.7853982
    %vm2328 = vcmp.lt.s32.totalorder %v212, 0
    %v2329 = vand.u32 %v212, 2139095040
    %v2330 = vshrl.u32 %v2329, 23
    %v2331 = vsub.s32 %v2330, 127
    %v2332 = vand.u32 2147483647, %v212
    %v2333 = vand.u32 %v2332, 8388607
    %v2334 = vor.u32 %v2333, 8388608
    %v2335 = vsub.s32 0, %v2334
    %v2336 = vadd.s32 %v2331, 1
    %vm2337 = vcmp.gt.s32.totalorder %v2336, 0
    %v2338 = vsel %vm2337, %v2336, 0
    %v2339 = vshrl.u32 %v2338, 5
    %v2340 = vand.u32 %v2338, 31
    %v2341 = vsub.s32 32, %v2340
    %v2342 = vshrl.u32 683565275, %v2341
    %v2343 = vshll.u32 683565275, %v2340
    %v2344 = vshrl.u32 2475754826, %v2341
    %v2345 = vor.u32 %v2343, %v2344
    %v2346 = vshll.u32 2475754826, %v2340
    %v2347 = vshrl.u32 2131351028, %v2341
    %v2348 = vor.u32 %v2346, %v2347
    %v2349 = vshll.u32 2131351028, %v2340
    %v2350 = vshrl.u32 2102212464, %v2341
    %v2351 = vor.u32 %v2349, %v2350
    %v2352 = vshll.u32 2102212464, %v2340
    %v2353 = vshrl.u32 920167782, %v2341
    %v2354 = vor.u32 %v2352, %v2353
    %v2355 = vshll.u32 920167782, %v2340
    %v2356 = vshrl.u32 1326507024, %v2341
    %v2357 = vor.u32 %v2355, %v2356
    %vm2358 = vcmp.lt.s32.totalorder %v2339, 1
    %vm2359 = vcmp.lt.s32.totalorder %v2339, 2
    %vm2360 = vcmp.lt.s32.totalorder %v2339, 3
    %vm2361 = vcmp.lt.s32.totalorder %v2339, 4
    %v2362 = vsel %vm2358, %v2342, %v2345
    %v2363 = vsel %vm2361, %v2351, 2102212464
    %v2364 = vsel %vm2360, %v2348, %v2363
    %v2365 = vsel %vm2359, %v2362, %v2364
    %v2366 = vsel %vm2358, %v2345, %v2348
    %v2367 = vsel %vm2361, %v2354, 920167782
    %v2368 = vsel %vm2360, %v2351, %v2367
    %v2369 = vsel %vm2359, %v2366, %v2368
    %v2370 = vsel %vm2358, %v2348, %v2351
    %v2371 = vsel %vm2361, %v2357, 1326507024
    %v2372 = vsel %vm2360, %v2354, %v2371
    %v2373 = vsel %vm2359, %v2370, %v2372
    %v2374 = vshll.u32 %v2334, 8
    %v2375 = vmul.u32.u64.compose %v2374, %v2373
    %v2376 = vextract.low.u32 %v2375
    %v2377 = vextract.high.u32 %v2375
    %v2378 = vmul.u32.u64.compose %v2374, %v2369
    %v2379 = vextract.low.u32 %v2378
    %v2380 = vextract.high.u32 %v2378
    %v2381 = vmul.u32 %v2374, %v2365
    %v2382 = vadd.s32 %v2377, %v2379
    %vm2383 = vc.u32 %v2377, %v2379
    %v2384 = vadd.s32 %v2380, 1
    %v2385 = vsel %vm2383, %v2384, %v2380
    %v2386 = vadd.s32 %v2381, %v2385
    %v2387 = vadd.s32 %v2386, 536870912
    %v2388 = vshrl.u32 %v2387, 30
    %v2389 = vshll.u32 %v2388, 30
    %v2390 = vsub.s32 %v2386, %v2389
    %vm2391 = vcmp.lt.s32.totalorder %v2390, 0
    %v2392 = vsub.s32 0, %v2390
    %v2393 = vsel %vm2391, %v2392, %v2390
    %v2394 = vclz %v2393
    %v2395 = vsub.s32 %v2394, 2
    %vm2396 = vcmp.gt.s32.totalorder 0, %v2395
    %v2397 = vsel %vm2396, 0, %v2395
    %v2398 = vsub.s32 32, %v2397
    %v2399 = vshll.u32 %v2390, %v2397
    %v2400 = vshrl.u32 %v2382, %v2398
    %v2401 = vor.u32 %v2399, %v2400
    %v2402 = vsub.s32 4294967266, %v2397
    %v2403 = vadd.s32 %v2402, 127
    %v2404 = vshll.u32 %v2403, 23
    %v2405 = vor.u32 4788187, %v2404
    %v2406 = vand.u32 2147483647, %v2405
    %v2408 = vcvt.s32.f32 %v2401
    %v2409 = vmul.f32 %v2408, %v2406
    %v2410 = vxor.u32 %v2409, 2147483648
    %v2411 = vsel %vm2328, %v2410, %v2409
    %v2412 = vsub.s32 4, %v2388
    %v2413 = vsel %vm2328, %v2412, %v2388
    %v2414 = vsel %vm2327, %v212, %v2411
    %v2415 = vsel %vm2327, 0, %v2413
    %v2416 = vcosq.f32.pop %v2414
    %v2417 = vsinq.f32.pop %v2414
    %vm2418 = vweird.f32 %v212
    %v2419 = vadd.s32 %v2415, 3
    %v2420 = vand.u32 %v2419, 3
    %vm2421 = vcmp.lt.s32.totalorder %v2420, 2
    %vm2422 = vcmp.eq.s32.totalorder %v2420, 0
    %v2423 = vxor.u32 %v2417, 2147483648
    %v2424 = vsel %vm2422, %v2416, %v2423
    %vm2425 = vcmp.eq.s32.totalorder %v2420, 2
    %v2426 = vxor.u32 %v2416, 2147483648
    %v2427 = vsel %vm2425, %v2426, %v2417
    %v2428 = vsel %vm2421, %v2424, %v2427
    %v2429 = vsel %vm2418, nan, %v2428
    %v2430 = vand.u32 2147483647, %v214
    %vm2431 = vcmp.le.f32.partialorder %v2430, 0.7853982
    %vm2432 = vcmp.lt.s32.totalorder %v214, 0
    %v2433 = vand.u32 %v214, 2139095040
    %v2434 = vshrl.u32 %v2433, 23
    %v2435 = vsub.s32 %v2434, 127
    %v2436 = vand.u32 2147483647, %v214
    %v2437 = vand.u32 %v2436, 8388607
    %v2438 = vor.u32 %v2437, 8388608
    %v2439 = vsub.s32 0, %v2438
    %v2440 = vadd.s32 %v2435, 1
    %vm2441 = vcmp.gt.s32.totalorder %v2440, 0
    %v2442 = vsel %vm2441, %v2440, 0
    %v2443 = vshrl.u32 %v2442, 5
    %v2444 = vand.u32 %v2442, 31
    %v2445 = vsub.s32 32, %v2444
    %v2446 = vshrl.u32 683565275, %v2445
    %v2447 = vshll.u32 683565275, %v2444
    %v2448 = vshrl.u32 2475754826, %v2445
    %v2449 = vor.u32 %v2447, %v2448
    %v2450 = vshll.u32 2475754826, %v2444
    %v2451 = vshrl.u32 2131351028, %v2445
    %v2452 = vor.u32 %v2450, %v2451
    %v2453 = vshll.u32 2131351028, %v2444
    %v2454 = vshrl.u32 2102212464, %v2445
    %v2455 = vor.u32 %v2453, %v2454
    %v2456 = vshll.u32 2102212464, %v2444
    %v2457 = vshrl.u32 920167782, %v2445
    %v2458 = vor.u32 %v2456, %v2457
    %v2459 = vshll.u32 920167782, %v2444
    %v2460 = vshrl.u32 1326507024, %v2445
    %v2461 = vor.u32 %v2459, %v2460
    %vm2462 = vcmp.lt.s32.totalorder %v2443, 1
    %vm2463 = vcmp.lt.s32.totalorder %v2443, 2
    %vm2464 = vcmp.lt.s32.totalorder %v2443, 3
    %vm2465 = vcmp.lt.s32.totalorder %v2443, 4
    %v2466 = vsel %vm2462, %v2446, %v2449
    %v2467 = vsel %vm2465, %v2455, 2102212464
    %v2468 = vsel %vm2464, %v2452, %v2467
    %v2469 = vsel %vm2463, %v2466, %v2468
    %v2470 = vsel %vm2462, %v2449, %v2452
    %v2471 = vsel %vm2465, %v2458, 920167782
    %v2472 = vsel %vm2464, %v2455, %v2471
    %v2473 = vsel %vm2463, %v2470, %v2472
    %v2474 = vsel %vm2462, %v2452, %v2455
    %v2475 = vsel %vm2465, %v2461, 1326507024
    %v2476 = vsel %vm2464, %v2458, %v2475
    %v2477 = vsel %vm2463, %v2474, %v2476
    %v2478 = vshll.u32 %v2438, 8
    %v2479 = vmul.u32.u64.compose %v2478, %v2477
    %v2480 = vextract.low.u32 %v2479
    %v2481 = vextract.high.u32 %v2479
    %v2482 = vmul.u32.u64.compose %v2478, %v2473
    %v2483 = vextract.low.u32 %v2482
    %v2484 = vextract.high.u32 %v2482
    %v2485 = vmul.u32 %v2478, %v2469
    %v2486 = vadd.s32 %v2481, %v2483
    %vm2487 = vc.u32 %v2481, %v2483
    %v2488 = vadd.s32 %v2484, 1
    %v2489 = vsel %vm2487, %v2488, %v2484
    %v2490 = vadd.s32 %v2485, %v2489
    %v2491 = vadd.s32 %v2490, 536870912
    %v2492 = vshrl.u32 %v2491, 30
    %v2493 = vshll.u32 %v2492, 30
    %v2494 = vsub.s32 %v2490, %v2493
    %vm2495 = vcmp.lt.s32.totalorder %v2494, 0
    %v2496 = vsub.s32 0, %v2494
    %v2497 = vsel %vm2495, %v2496, %v2494
    %v2498 = vclz %v2497
    %v2499 = vsub.s32 %v2498, 2
    %vm2500 = vcmp.gt.s32.totalorder 0, %v2499
    %v2501 = vsel %vm2500, 0, %v2499
    %v2502 = vsub.s32 32, %v2501
    %v2503 = vshll.u32 %v2494, %v2501
    %v2504 = vshrl.u32 %v2486, %v2502
    %v2505 = vor.u32 %v2503, %v2504
    %v2506 = vsub.s32 4294967266, %v2501
    %v2507 = vadd.s32 %v2506, 127
    %v2508 = vshll.u32 %v2507, 23
    %v2509 = vor.u32 4788187, %v2508
    %v2510 = vand.u32 2147483647, %v2509
    %v2512 = vcvt.s32.f32 %v2505
    %v2513 = vmul.f32 %v2512, %v2510
    %v2514 = vxor.u32 %v2513, 2147483648
    %v2515 = vsel %vm2432, %v2514, %v2513
    %v2516 = vsub.s32 4, %v2492
    %v2517 = vsel %vm2432, %v2516, %v2492
    %v2518 = vsel %vm2431, %v214, %v2515
    %v2519 = vsel %vm2431, 0, %v2517
    %v2520 = vcosq.f32.pop %v2518
    %v2521 = vsinq.f32.pop %v2518
    %vm2522 = vweird.f32 %v214
    %v2523 = vadd.s32 %v2519, 3
    %v2524 = vand.u32 %v2523, 3
    %vm2525 = vcmp.lt.s32.totalorder %v2524, 2
    %vm2526 = vcmp.eq.s32.totalorder %v2524, 0
    %v2527 = vxor.u32 %v2521, 2147483648
    %v2528 = vsel %vm2526, %v2520, %v2527
    %vm2529 = vcmp.eq.s32.totalorder %v2524, 2
    %v2530 = vxor.u32 %v2520, 2147483648
    %v2531 = vsel %vm2529, %v2530, %v2521
    %v2532 = vsel %vm2525, %v2528, %v2531
    %v2533 = vsel %vm2522, nan, %v2532
    %v2534 = vand.u32 2147483647, %v218
    %vm2535 = vcmp.le.f32.partialorder %v2534, 0.7853982
    %vm2536 = vcmp.lt.s32.totalorder %v218, 0
    %v2537 = vand.u32 %v218, 2139095040
    %v2538 = vshrl.u32 %v2537, 23
    %v2539 = vsub.s32 %v2538, 127
    %v2540 = vand.u32 2147483647, %v218
    %v2541 = vand.u32 %v2540, 8388607
    %v2542 = vor.u32 %v2541, 8388608
    %v2543 = vsub.s32 0, %v2542
    %v2544 = vadd.s32 %v2539, 1
    %vm2545 = vcmp.gt.s32.totalorder %v2544, 0
    %v2546 = vsel %vm2545, %v2544, 0
    %v2547 = vshrl.u32 %v2546, 5
    %v2548 = vand.u32 %v2546, 31
    %v2549 = vsub.s32 32, %v2548
    %v2550 = vshrl.u32 683565275, %v2549
    %v2551 = vshll.u32 683565275, %v2548
    %v2552 = vshrl.u32 2475754826, %v2549
    %v2553 = vor.u32 %v2551, %v2552
    %v2554 = vshll.u32 2475754826, %v2548
    %v2555 = vshrl.u32 2131351028, %v2549
    %v2556 = vor.u32 %v2554, %v2555
    %v2557 = vshll.u32 2131351028, %v2548
    %v2558 = vshrl.u32 2102212464, %v2549
    %v2559 = vor.u32 %v2557, %v2558
    %v2560 = vshll.u32 2102212464, %v2548
    %v2561 = vshrl.u32 920167782, %v2549
    %v2562 = vor.u32 %v2560, %v2561
    %v2563 = vshll.u32 920167782, %v2548
    %v2564 = vshrl.u32 1326507024, %v2549
    %v2565 = vor.u32 %v2563, %v2564
    %vm2566 = vcmp.lt.s32.totalorder %v2547, 1
    %vm2567 = vcmp.lt.s32.totalorder %v2547, 2
    %vm2568 = vcmp.lt.s32.totalorder %v2547, 3
    %vm2569 = vcmp.lt.s32.totalorder %v2547, 4
    %v2570 = vsel %vm2566, %v2550, %v2553
    %v2571 = vsel %vm2569, %v2559, 2102212464
    %v2572 = vsel %vm2568, %v2556, %v2571
    %v2573 = vsel %vm2567, %v2570, %v2572
    %v2574 = vsel %vm2566, %v2553, %v2556
    %v2575 = vsel %vm2569, %v2562, 920167782
    %v2576 = vsel %vm2568, %v2559, %v2575
    %v2577 = vsel %vm2567, %v2574, %v2576
    %v2578 = vsel %vm2566, %v2556, %v2559
    %v2579 = vsel %vm2569, %v2565, 1326507024
    %v2580 = vsel %vm2568, %v2562, %v2579
    %v2581 = vsel %vm2567, %v2578, %v2580
    %v2582 = vshll.u32 %v2542, 8
    %v2583 = vmul.u32.u64.compose %v2582, %v2581
    %v2584 = vextract.low.u32 %v2583
    %v2585 = vextract.high.u32 %v2583
    %v2586 = vmul.u32.u64.compose %v2582, %v2577
    %v2587 = vextract.low.u32 %v2586
    %v2588 = vextract.high.u32 %v2586
    %v2589 = vmul.u32 %v2582, %v2573
    %v2590 = vadd.s32 %v2585, %v2587
    %vm2591 = vc.u32 %v2585, %v2587
    %v2592 = vadd.s32 %v2588, 1
    %v2593 = vsel %vm2591, %v2592, %v2588
    %v2594 = vadd.s32 %v2589, %v2593
    %v2595 = vadd.s32 %v2594, 536870912
    %v2596 = vshrl.u32 %v2595, 30
    %v2597 = vshll.u32 %v2596, 30
    %v2598 = vsub.s32 %v2594, %v2597
    %vm2599 = vcmp.lt.s32.totalorder %v2598, 0
    %v2600 = vsub.s32 0, %v2598
    %v2601 = vsel %vm2599, %v2600, %v2598
    %v2602 = vclz %v2601
    %v2603 = vsub.s32 %v2602, 2
    %vm2604 = vcmp.gt.s32.totalorder 0, %v2603
    %v2605 = vsel %vm2604, 0, %v2603
    %v2606 = vsub.s32 32, %v2605
    %v2607 = vshll.u32 %v2598, %v2605
    %v2608 = vshrl.u32 %v2590, %v2606
    %v2609 = vor.u32 %v2607, %v2608
    %v2610 = vsub.s32 4294967266, %v2605
    %v2611 = vadd.s32 %v2610, 127
    %v2612 = vshll.u32 %v2611, 23
    %v2613 = vor.u32 4788187, %v2612
    %v2614 = vand.u32 2147483647, %v2613
    %v2616 = vcvt.s32.f32 %v2609
    %v2617 = vmul.f32 %v2616, %v2614
    %v2618 = vxor.u32 %v2617, 2147483648
    %v2619 = vsel %vm2536, %v2618, %v2617
    %v2620 = vsub.s32 4, %v2596
    %v2621 = vsel %vm2536, %v2620, %v2596
    %v2622 = vsel %vm2535, %v218, %v2619
    %v2623 = vsel %vm2535, 0, %v2621
    %v2624 = vcosq.f32.pop %v2622
    %v2625 = vsinq.f32.pop %v2622
    %vm2626 = vweird.f32 %v218
    %v2627 = vadd.s32 %v2623, 3
    %v2628 = vand.u32 %v2627, 3
    %vm2629 = vcmp.lt.s32.totalorder %v2628, 2
    %vm2630 = vcmp.eq.s32.totalorder %v2628, 0
    %v2631 = vxor.u32 %v2625, 2147483648
    %v2632 = vsel %vm2630, %v2624, %v2631
    %vm2633 = vcmp.eq.s32.totalorder %v2628, 2
    %v2634 = vxor.u32 %v2624, 2147483648
    %v2635 = vsel %vm2633, %v2634, %v2625
    %v2636 = vsel %vm2629, %v2632, %v2635
    %v2637 = vsel %vm2626, nan, %v2636
    %v2638 = vand.u32 2147483647, %v220
    %vm2639 = vcmp.le.f32.partialorder %v2638, 0.7853982
    %vm2640 = vcmp.lt.s32.totalorder %v220, 0
    %v2641 = vand.u32 %v220, 2139095040
    %v2642 = vshrl.u32 %v2641, 23
    %v2643 = vsub.s32 %v2642, 127
    %v2644 = vand.u32 2147483647, %v220
    %v2645 = vand.u32 %v2644, 8388607
    %v2646 = vor.u32 %v2645, 8388608
    %v2647 = vsub.s32 0, %v2646
    %v2648 = vadd.s32 %v2643, 1
    %vm2649 = vcmp.gt.s32.totalorder %v2648, 0
    %v2650 = vsel %vm2649, %v2648, 0
    %v2651 = vshrl.u32 %v2650, 5
    %v2652 = vand.u32 %v2650, 31
    %v2653 = vsub.s32 32, %v2652
    %v2654 = vshrl.u32 683565275, %v2653
    %v2655 = vshll.u32 683565275, %v2652
    %v2656 = vshrl.u32 2475754826, %v2653
    %v2657 = vor.u32 %v2655, %v2656
    %v2658 = vshll.u32 2475754826, %v2652
    %v2659 = vshrl.u32 2131351028, %v2653
    %v2660 = vor.u32 %v2658, %v2659
    %v2661 = vshll.u32 2131351028, %v2652
    %v2662 = vshrl.u32 2102212464, %v2653
    %v2663 = vor.u32 %v2661, %v2662
    %v2664 = vshll.u32 2102212464, %v2652
    %v2665 = vshrl.u32 920167782, %v2653
    %v2666 = vor.u32 %v2664, %v2665
    %v2667 = vshll.u32 920167782, %v2652
    %v2668 = vshrl.u32 1326507024, %v2653
    %v2669 = vor.u32 %v2667, %v2668
    %vm2670 = vcmp.lt.s32.totalorder %v2651, 1
    %vm2671 = vcmp.lt.s32.totalorder %v2651, 2
    %vm2672 = vcmp.lt.s32.totalorder %v2651, 3
    %vm2673 = vcmp.lt.s32.totalorder %v2651, 4
    %v2674 = vsel %vm2670, %v2654, %v2657
    %v2675 = vsel %vm2673, %v2663, 2102212464
    %v2676 = vsel %vm2672, %v2660, %v2675
    %v2677 = vsel %vm2671, %v2674, %v2676
    %v2678 = vsel %vm2670, %v2657, %v2660
    %v2679 = vsel %vm2673, %v2666, 920167782
    %v2680 = vsel %vm2672, %v2663, %v2679
    %v2681 = vsel %vm2671, %v2678, %v2680
    %v2682 = vsel %vm2670, %v2660, %v2663
    %v2683 = vsel %vm2673, %v2669, 1326507024
    %v2684 = vsel %vm2672, %v2666, %v2683
    %v2685 = vsel %vm2671, %v2682, %v2684
    %v2686 = vshll.u32 %v2646, 8
    %v2687 = vmul.u32.u64.compose %v2686, %v2685
    %v2688 = vextract.low.u32 %v2687
    %v2689 = vextract.high.u32 %v2687
    %v2690 = vmul.u32.u64.compose %v2686, %v2681
    %v2691 = vextract.low.u32 %v2690
    %v2692 = vextract.high.u32 %v2690
    %v2693 = vmul.u32 %v2686, %v2677
    %v2694 = vadd.s32 %v2689, %v2691
    %vm2695 = vc.u32 %v2689, %v2691
    %v2696 = vadd.s32 %v2692, 1
    %v2697 = vsel %vm2695, %v2696, %v2692
    %v2698 = vadd.s32 %v2693, %v2697
    %v2699 = vadd.s32 %v2698, 536870912
    %v2700 = vshrl.u32 %v2699, 30
    %v2701 = vshll.u32 %v2700, 30
    %v2702 = vsub.s32 %v2698, %v2701
    %vm2703 = vcmp.lt.s32.totalorder %v2702, 0
    %v2704 = vsub.s32 0, %v2702
    %v2705 = vsel %vm2703, %v2704, %v2702
    %v2706 = vclz %v2705
    %v2707 = vsub.s32 %v2706, 2
    %vm2708 = vcmp.gt.s32.totalorder 0, %v2707
    %v2709 = vsel %vm2708, 0, %v2707
    %v2710 = vsub.s32 32, %v2709
    %v2711 = vshll.u32 %v2702, %v2709
    %v2712 = vshrl.u32 %v2694, %v2710
    %v2713 = vor.u32 %v2711, %v2712
    %v2714 = vsub.s32 4294967266, %v2709
    %v2715 = vadd.s32 %v2714, 127
    %v2716 = vshll.u32 %v2715, 23
    %v2717 = vor.u32 4788187, %v2716
    %v2718 = vand.u32 2147483647, %v2717
    %v2720 = vcvt.s32.f32 %v2713
    %v2721 = vmul.f32 %v2720, %v2718
    %v2722 = vxor.u32 %v2721, 2147483648
    %v2723 = vsel %vm2640, %v2722, %v2721
    %v2724 = vsub.s32 4, %v2700
    %v2725 = vsel %vm2640, %v2724, %v2700
    %v2726 = vsel %vm2639, %v220, %v2723
    %v2727 = vsel %vm2639, 0, %v2725
    %v2728 = vcosq.f32.pop %v2726
    %v2729 = vsinq.f32.pop %v2726
    %vm2730 = vweird.f32 %v220
    %v2731 = vadd.s32 %v2727, 3
    %v2732 = vand.u32 %v2731, 3
    %vm2733 = vcmp.lt.s32.totalorder %v2732, 2
    %vm2734 = vcmp.eq.s32.totalorder %v2732, 0
    %v2735 = vxor.u32 %v2729, 2147483648
    %v2736 = vsel %vm2734, %v2728, %v2735
    %vm2737 = vcmp.eq.s32.totalorder %v2732, 2
    %v2738 = vxor.u32 %v2728, 2147483648
    %v2739 = vsel %vm2737, %v2738, %v2729
    %v2740 = vsel %vm2733, %v2736, %v2739
    %v2741 = vsel %vm2730, nan, %v2740
    %v2742 = vand.u32 2147483647, %v224
    %vm2743 = vcmp.le.f32.partialorder %v2742, 0.7853982
    %vm2744 = vcmp.lt.s32.totalorder %v224, 0
    %v2745 = vand.u32 %v224, 2139095040
    %v2746 = vshrl.u32 %v2745, 23
    %v2747 = vsub.s32 %v2746, 127
    %v2748 = vand.u32 2147483647, %v224
    %v2749 = vand.u32 %v2748, 8388607
    %v2750 = vor.u32 %v2749, 8388608
    %v2751 = vsub.s32 0, %v2750
    %v2752 = vadd.s32 %v2747, 1
    %vm2753 = vcmp.gt.s32.totalorder %v2752, 0
    %v2754 = vsel %vm2753, %v2752, 0
    %v2755 = vshrl.u32 %v2754, 5
    %v2756 = vand.u32 %v2754, 31
    %v2757 = vsub.s32 32, %v2756
    %v2758 = vshrl.u32 683565275, %v2757
    %v2759 = vshll.u32 683565275, %v2756
    %v2760 = vshrl.u32 2475754826, %v2757
    %v2761 = vor.u32 %v2759, %v2760
    %v2762 = vshll.u32 2475754826, %v2756
    %v2763 = vshrl.u32 2131351028, %v2757
    %v2764 = vor.u32 %v2762, %v2763
    %v2765 = vshll.u32 2131351028, %v2756
    %v2766 = vshrl.u32 2102212464, %v2757
    %v2767 = vor.u32 %v2765, %v2766
    %v2768 = vshll.u32 2102212464, %v2756
    %v2769 = vshrl.u32 920167782, %v2757
    %v2770 = vor.u32 %v2768, %v2769
    %v2771 = vshll.u32 920167782, %v2756
    %v2772 = vshrl.u32 1326507024, %v2757
    %v2773 = vor.u32 %v2771, %v2772
    %vm2774 = vcmp.lt.s32.totalorder %v2755, 1
    %vm2775 = vcmp.lt.s32.totalorder %v2755, 2
    %vm2776 = vcmp.lt.s32.totalorder %v2755, 3
    %vm2777 = vcmp.lt.s32.totalorder %v2755, 4
    %v2778 = vsel %vm2774, %v2758, %v2761
    %v2779 = vsel %vm2777, %v2767, 2102212464
    %v2780 = vsel %vm2776, %v2764, %v2779
    %v2781 = vsel %vm2775, %v2778, %v2780
    %v2782 = vsel %vm2774, %v2761, %v2764
    %v2783 = vsel %vm2777, %v2770, 920167782
    %v2784 = vsel %vm2776, %v2767, %v2783
    %v2785 = vsel %vm2775, %v2782, %v2784
    %v2786 = vsel %vm2774, %v2764, %v2767
    %v2787 = vsel %vm2777, %v2773, 1326507024
    %v2788 = vsel %vm2776, %v2770, %v2787
    %v2789 = vsel %vm2775, %v2786, %v2788
    %v2790 = vshll.u32 %v2750, 8
    %v2791 = vmul.u32.u64.compose %v2790, %v2789
    %v2792 = vextract.low.u32 %v2791
    %v2793 = vextract.high.u32 %v2791
    %v2794 = vmul.u32.u64.compose %v2790, %v2785
    %v2795 = vextract.low.u32 %v2794
    %v2796 = vextract.high.u32 %v2794
    %v2797 = vmul.u32 %v2790, %v2781
    %v2798 = vadd.s32 %v2793, %v2795
    %vm2799 = vc.u32 %v2793, %v2795
    %v2800 = vadd.s32 %v2796, 1
    %v2801 = vsel %vm2799, %v2800, %v2796
    %v2802 = vadd.s32 %v2797, %v2801
    %v2803 = vadd.s32 %v2802, 536870912
    %v2804 = vshrl.u32 %v2803, 30
    %v2805 = vshll.u32 %v2804, 30
    %v2806 = vsub.s32 %v2802, %v2805
    %vm2807 = vcmp.lt.s32.totalorder %v2806, 0
    %v2808 = vsub.s32 0, %v2806
    %v2809 = vsel %vm2807, %v2808, %v2806
    %v2810 = vclz %v2809
    %v2811 = vsub.s32 %v2810, 2
    %vm2812 = vcmp.gt.s32.totalorder 0, %v2811
    %v2813 = vsel %vm2812, 0, %v2811
    %v2814 = vsub.s32 32, %v2813
    %v2815 = vshll.u32 %v2806, %v2813
    %v2816 = vshrl.u32 %v2798, %v2814
    %v2817 = vor.u32 %v2815, %v2816
    %v2818 = vsub.s32 4294967266, %v2813
    %v2819 = vadd.s32 %v2818, 127
    %v2820 = vshll.u32 %v2819, 23
    %v2821 = vor.u32 4788187, %v2820
    %v2822 = vand.u32 2147483647, %v2821
    %v2824 = vcvt.s32.f32 %v2817
    %v2825 = vmul.f32 %v2824, %v2822
    %v2826 = vxor.u32 %v2825, 2147483648
    %v2827 = vsel %vm2744, %v2826, %v2825
    %v2828 = vsub.s32 4, %v2804
    %v2829 = vsel %vm2744, %v2828, %v2804
    %v2830 = vsel %vm2743, %v224, %v2827
    %v2831 = vsel %vm2743, 0, %v2829
    %v2832 = vcosq.f32.pop %v2830
    %v2833 = vsinq.f32.pop %v2830
    %vm2834 = vweird.f32 %v224
    %v2835 = vadd.s32 %v2831, 3
    %v2836 = vand.u32 %v2835, 3
    %vm2837 = vcmp.lt.s32.totalorder %v2836, 2
    %vm2838 = vcmp.eq.s32.totalorder %v2836, 0
    %v2839 = vxor.u32 %v2833, 2147483648
    %v2840 = vsel %vm2838, %v2832, %v2839
    %vm2841 = vcmp.eq.s32.totalorder %v2836, 2
    %v2842 = vxor.u32 %v2832, 2147483648
    %v2843 = vsel %vm2841, %v2842, %v2833
    %v2844 = vsel %vm2837, %v2840, %v2843
    %v2845 = vsel %vm2834, nan, %v2844
    %v2846 = vand.u32 2147483647, %v226
    %vm2847 = vcmp.le.f32.partialorder %v2846, 0.7853982
    %vm2848 = vcmp.lt.s32.totalorder %v226, 0
    %v2849 = vand.u32 %v226, 2139095040
    %v2850 = vshrl.u32 %v2849, 23
    %v2851 = vsub.s32 %v2850, 127
    %v2852 = vand.u32 2147483647, %v226
    %v2853 = vand.u32 %v2852, 8388607
    %v2854 = vor.u32 %v2853, 8388608
    %v2855 = vsub.s32 0, %v2854
    %v2856 = vadd.s32 %v2851, 1
    %vm2857 = vcmp.gt.s32.totalorder %v2856, 0
    %v2858 = vsel %vm2857, %v2856, 0
    %v2859 = vshrl.u32 %v2858, 5
    %v2860 = vand.u32 %v2858, 31
    %v2861 = vsub.s32 32, %v2860
    %v2862 = vshrl.u32 683565275, %v2861
    %v2863 = vshll.u32 683565275, %v2860
    %v2864 = vshrl.u32 2475754826, %v2861
    %v2865 = vor.u32 %v2863, %v2864
    %v2866 = vshll.u32 2475754826, %v2860
    %v2867 = vshrl.u32 2131351028, %v2861
    %v2868 = vor.u32 %v2866, %v2867
    %v2869 = vshll.u32 2131351028, %v2860
    %v2870 = vshrl.u32 2102212464, %v2861
    %v2871 = vor.u32 %v2869, %v2870
    %v2872 = vshll.u32 2102212464, %v2860
    %v2873 = vshrl.u32 920167782, %v2861
    %v2874 = vor.u32 %v2872, %v2873
    %v2875 = vshll.u32 920167782, %v2860
    %v2876 = vshrl.u32 1326507024, %v2861
    %v2877 = vor.u32 %v2875, %v2876
    %vm2878 = vcmp.lt.s32.totalorder %v2859, 1
    %vm2879 = vcmp.lt.s32.totalorder %v2859, 2
    %vm2880 = vcmp.lt.s32.totalorder %v2859, 3
    %vm2881 = vcmp.lt.s32.totalorder %v2859, 4
    %v2882 = vsel %vm2878, %v2862, %v2865
    %v2883 = vsel %vm2881, %v2871, 2102212464
    %v2884 = vsel %vm2880, %v2868, %v2883
    %v2885 = vsel %vm2879, %v2882, %v2884
    %v2886 = vsel %vm2878, %v2865, %v2868
    %v2887 = vsel %vm2881, %v2874, 920167782
    %v2888 = vsel %vm2880, %v2871, %v2887
    %v2889 = vsel %vm2879, %v2886, %v2888
    %v2890 = vsel %vm2878, %v2868, %v2871
    %v2891 = vsel %vm2881, %v2877, 1326507024
    %v2892 = vsel %vm2880, %v2874, %v2891
    %v2893 = vsel %vm2879, %v2890, %v2892
    %v2894 = vshll.u32 %v2854, 8
    %v2895 = vmul.u32.u64.compose %v2894, %v2893
    %v2896 = vextract.low.u32 %v2895
    %v2897 = vextract.high.u32 %v2895
    %v2898 = vmul.u32.u64.compose %v2894, %v2889
    %v2899 = vextract.low.u32 %v2898
    %v2900 = vextract.high.u32 %v2898
    %v2901 = vmul.u32 %v2894, %v2885
    %v2902 = vadd.s32 %v2897, %v2899
    %vm2903 = vc.u32 %v2897, %v2899
    %v2904 = vadd.s32 %v2900, 1
    %v2905 = vsel %vm2903, %v2904, %v2900
    %v2906 = vadd.s32 %v2901, %v2905
    %v2907 = vadd.s32 %v2906, 536870912
    %v2908 = vshrl.u32 %v2907, 30
    %v2909 = vshll.u32 %v2908, 30
    %v2910 = vsub.s32 %v2906, %v2909
    %vm2911 = vcmp.lt.s32.totalorder %v2910, 0
    %v2912 = vsub.s32 0, %v2910
    %v2913 = vsel %vm2911, %v2912, %v2910
    %v2914 = vclz %v2913
    %v2915 = vsub.s32 %v2914, 2
    %vm2916 = vcmp.gt.s32.totalorder 0, %v2915
    %v2917 = vsel %vm2916, 0, %v2915
    %v2918 = vsub.s32 32, %v2917
    %v2919 = vshll.u32 %v2910, %v2917
    %v2920 = vshrl.u32 %v2902, %v2918
    %v2921 = vor.u32 %v2919, %v2920
    %v2922 = vsub.s32 4294967266, %v2917
    %v2923 = vadd.s32 %v2922, 127
    %v2924 = vshll.u32 %v2923, 23
    %v2925 = vor.u32 4788187, %v2924
    %v2926 = vand.u32 2147483647, %v2925
    %v2928 = vcvt.s32.f32 %v2921
    %v2929 = vmul.f32 %v2928, %v2926
    %v2930 = vxor.u32 %v2929, 2147483648
    %v2931 = vsel %vm2848, %v2930, %v2929
    %v2932 = vsub.s32 4, %v2908
    %v2933 = vsel %vm2848, %v2932, %v2908
    %v2934 = vsel %vm2847, %v226, %v2931
    %v2935 = vsel %vm2847, 0, %v2933
    %v2936 = vcosq.f32.pop %v2934
    %v2937 = vsinq.f32.pop %v2934
    %vm2938 = vweird.f32 %v226
    %v2939 = vadd.s32 %v2935, 3
    %v2940 = vand.u32 %v2939, 3
    %vm2941 = vcmp.lt.s32.totalorder %v2940, 2
    %vm2942 = vcmp.eq.s32.totalorder %v2940, 0
    %v2943 = vxor.u32 %v2937, 2147483648
    %v2944 = vsel %vm2942, %v2936, %v2943
    %vm2945 = vcmp.eq.s32.totalorder %v2940, 2
    %v2946 = vxor.u32 %v2936, 2147483648
    %v2947 = vsel %vm2945, %v2946, %v2937
    %v2948 = vsel %vm2941, %v2944, %v2947
    %v2949 = vsel %vm2938, nan, %v2948
    %v2950 = vand.u32 2147483647, %v230
    %vm2951 = vcmp.le.f32.partialorder %v2950, 0.7853982
    %vm2952 = vcmp.lt.s32.totalorder %v230, 0
    %v2953 = vand.u32 %v230, 2139095040
    %v2954 = vshrl.u32 %v2953, 23
    %v2955 = vsub.s32 %v2954, 127
    %v2956 = vand.u32 2147483647, %v230
    %v2957 = vand.u32 %v2956, 8388607
    %v2958 = vor.u32 %v2957, 8388608
    %v2959 = vsub.s32 0, %v2958
    %v2960 = vadd.s32 %v2955, 1
    %vm2961 = vcmp.gt.s32.totalorder %v2960, 0
    %v2962 = vsel %vm2961, %v2960, 0
    %v2963 = vshrl.u32 %v2962, 5
    %v2964 = vand.u32 %v2962, 31
    %v2965 = vsub.s32 32, %v2964
    %v2966 = vshrl.u32 683565275, %v2965
    %v2967 = vshll.u32 683565275, %v2964
    %v2968 = vshrl.u32 2475754826, %v2965
    %v2969 = vor.u32 %v2967, %v2968
    %v2970 = vshll.u32 2475754826, %v2964
    %v2971 = vshrl.u32 2131351028, %v2965
    %v2972 = vor.u32 %v2970, %v2971
    %v2973 = vshll.u32 2131351028, %v2964
    %v2974 = vshrl.u32 2102212464, %v2965
    %v2975 = vor.u32 %v2973, %v2974
    %v2976 = vshll.u32 2102212464, %v2964
    %v2977 = vshrl.u32 920167782, %v2965
    %v2978 = vor.u32 %v2976, %v2977
    %v2979 = vshll.u32 920167782, %v2964
    %v2980 = vshrl.u32 1326507024, %v2965
    %v2981 = vor.u32 %v2979, %v2980
    %vm2982 = vcmp.lt.s32.totalorder %v2963, 1
    %vm2983 = vcmp.lt.s32.totalorder %v2963, 2
    %vm2984 = vcmp.lt.s32.totalorder %v2963, 3
    %vm2985 = vcmp.lt.s32.totalorder %v2963, 4
    %v2986 = vsel %vm2982, %v2966, %v2969
    %v2987 = vsel %vm2985, %v2975, 2102212464
    %v2988 = vsel %vm2984, %v2972, %v2987
    %v2989 = vsel %vm2983, %v2986, %v2988
    %v2990 = vsel %vm2982, %v2969, %v2972
    %v2991 = vsel %vm2985, %v2978, 920167782
    %v2992 = vsel %vm2984, %v2975, %v2991
    %v2993 = vsel %vm2983, %v2990, %v2992
    %v2994 = vsel %vm2982, %v2972, %v2975
    %v2995 = vsel %vm2985, %v2981, 1326507024
    %v2996 = vsel %vm2984, %v2978, %v2995
    %v2997 = vsel %vm2983, %v2994, %v2996
    %v2998 = vshll.u32 %v2958, 8
    %v2999 = vmul.u32.u64.compose %v2998, %v2997
    %v3000 = vextract.low.u32 %v2999
    %v3001 = vextract.high.u32 %v2999
    %v3002 = vmul.u32.u64.compose %v2998, %v2993
    %v3003 = vextract.low.u32 %v3002
    %v3004 = vextract.high.u32 %v3002
    %v3005 = vmul.u32 %v2998, %v2989
    %v3006 = vadd.s32 %v3001, %v3003
    %vm3007 = vc.u32 %v3001, %v3003
    %v3008 = vadd.s32 %v3004, 1
    %v3009 = vsel %vm3007, %v3008, %v3004
    %v3010 = vadd.s32 %v3005, %v3009
    %v3011 = vadd.s32 %v3010, 536870912
    %v3012 = vshrl.u32 %v3011, 30
    %v3013 = vshll.u32 %v3012, 30
    %v3014 = vsub.s32 %v3010, %v3013
    %vm3015 = vcmp.lt.s32.totalorder %v3014, 0
    %v3016 = vsub.s32 0, %v3014
    %v3017 = vsel %vm3015, %v3016, %v3014
    %v3018 = vclz %v3017
    %v3019 = vsub.s32 %v3018, 2
    %vm3020 = vcmp.gt.s32.totalorder 0, %v3019
    %v3021 = vsel %vm3020, 0, %v3019
    %v3022 = vsub.s32 32, %v3021
    %v3023 = vshll.u32 %v3014, %v3021
    %v3024 = vshrl.u32 %v3006, %v3022
    %v3025 = vor.u32 %v3023, %v3024
    %v3026 = vsub.s32 4294967266, %v3021
    %v3027 = vadd.s32 %v3026, 127
    %v3028 = vshll.u32 %v3027, 23
    %v3029 = vor.u32 4788187, %v3028
    %v3030 = vand.u32 2147483647, %v3029
    %v3032 = vcvt.s32.f32 %v3025
    %v3033 = vmul.f32 %v3032, %v3030
    %v3034 = vxor.u32 %v3033, 2147483648
    %v3035 = vsel %vm2952, %v3034, %v3033
    %v3036 = vsub.s32 4, %v3012
    %v3037 = vsel %vm2952, %v3036, %v3012
    %v3038 = vsel %vm2951, %v230, %v3035
    %v3039 = vsel %vm2951, 0, %v3037
    %v3040 = vcosq.f32.pop %v3038
    %v3041 = vsinq.f32.pop %v3038
    %vm3042 = vweird.f32 %v230
    %v3043 = vadd.s32 %v3039, 3
    %v3044 = vand.u32 %v3043, 3
    %vm3045 = vcmp.lt.s32.totalorder %v3044, 2
    %vm3046 = vcmp.eq.s32.totalorder %v3044, 0
    %v3047 = vxor.u32 %v3041, 2147483648
    %v3048 = vsel %vm3046, %v3040, %v3047
    %vm3049 = vcmp.eq.s32.totalorder %v3044, 2
    %v3050 = vxor.u32 %v3040, 2147483648
    %v3051 = vsel %vm3049, %v3050, %v3041
    %v3052 = vsel %vm3045, %v3048, %v3051
    %v3053 = vsel %vm3042, nan, %v3052
    %v3054 = vand.u32 2147483647, %v232
    %vm3055 = vcmp.le.f32.partialorder %v3054, 0.7853982
    %vm3056 = vcmp.lt.s32.totalorder %v232, 0
    %v3057 = vand.u32 %v232, 2139095040
    %v3058 = vshrl.u32 %v3057, 23
    %v3059 = vsub.s32 %v3058, 127
    %v3060 = vand.u32 2147483647, %v232
    %v3061 = vand.u32 %v3060, 8388607
    %v3062 = vor.u32 %v3061, 8388608
    %v3063 = vsub.s32 0, %v3062
    %v3064 = vadd.s32 %v3059, 1
    %vm3065 = vcmp.gt.s32.totalorder %v3064, 0
    %v3066 = vsel %vm3065, %v3064, 0
    %v3067 = vshrl.u32 %v3066, 5
    %v3068 = vand.u32 %v3066, 31
    %v3069 = vsub.s32 32, %v3068
    %v3070 = vshrl.u32 683565275, %v3069
    %v3071 = vshll.u32 683565275, %v3068
    %v3072 = vshrl.u32 2475754826, %v3069
    %v3073 = vor.u32 %v3071, %v3072
    %v3074 = vshll.u32 2475754826, %v3068
    %v3075 = vshrl.u32 2131351028, %v3069
    %v3076 = vor.u32 %v3074, %v3075
    %v3077 = vshll.u32 2131351028, %v3068
    %v3078 = vshrl.u32 2102212464, %v3069
    %v3079 = vor.u32 %v3077, %v3078
    %v3080 = vshll.u32 2102212464, %v3068
    %v3081 = vshrl.u32 920167782, %v3069
    %v3082 = vor.u32 %v3080, %v3081
    %v3083 = vshll.u32 920167782, %v3068
    %v3084 = vshrl.u32 1326507024, %v3069
    %v3085 = vor.u32 %v3083, %v3084
    %vm3086 = vcmp.lt.s32.totalorder %v3067, 1
    %vm3087 = vcmp.lt.s32.totalorder %v3067, 2
    %vm3088 = vcmp.lt.s32.totalorder %v3067, 3
    %vm3089 = vcmp.lt.s32.totalorder %v3067, 4
    %v3090 = vsel %vm3086, %v3070, %v3073
    %v3091 = vsel %vm3089, %v3079, 2102212464
    %v3092 = vsel %vm3088, %v3076, %v3091
    %v3093 = vsel %vm3087, %v3090, %v3092
    %v3094 = vsel %vm3086, %v3073, %v3076
    %v3095 = vsel %vm3089, %v3082, 920167782
    %v3096 = vsel %vm3088, %v3079, %v3095
    %v3097 = vsel %vm3087, %v3094, %v3096
    %v3098 = vsel %vm3086, %v3076, %v3079
    %v3099 = vsel %vm3089, %v3085, 1326507024
    %v3100 = vsel %vm3088, %v3082, %v3099
    %v3101 = vsel %vm3087, %v3098, %v3100
    %v3102 = vshll.u32 %v3062, 8
    %v3103 = vmul.u32.u64.compose %v3102, %v3101
    %v3104 = vextract.low.u32 %v3103
    %v3105 = vextract.high.u32 %v3103
    %v3106 = vmul.u32.u64.compose %v3102, %v3097
    %v3107 = vextract.low.u32 %v3106
    %v3108 = vextract.high.u32 %v3106
    %v3109 = vmul.u32 %v3102, %v3093
    %v3110 = vadd.s32 %v3105, %v3107
    %vm3111 = vc.u32 %v3105, %v3107
    %v3112 = vadd.s32 %v3108, 1
    %v3113 = vsel %vm3111, %v3112, %v3108
    %v3114 = vadd.s32 %v3109, %v3113
    %v3115 = vadd.s32 %v3114, 536870912
    %v3116 = vshrl.u32 %v3115, 30
    %v3117 = vshll.u32 %v3116, 30
    %v3118 = vsub.s32 %v3114, %v3117
    %vm3119 = vcmp.lt.s32.totalorder %v3118, 0
    %v3120 = vsub.s32 0, %v3118
    %v3121 = vsel %vm3119, %v3120, %v3118
    %v3122 = vclz %v3121
    %v3123 = vsub.s32 %v3122, 2
    %vm3124 = vcmp.gt.s32.totalorder 0, %v3123
    %v3125 = vsel %vm3124, 0, %v3123
    %v3126 = vsub.s32 32, %v3125
    %v3127 = vshll.u32 %v3118, %v3125
    %v3128 = vshrl.u32 %v3110, %v3126
    %v3129 = vor.u32 %v3127, %v3128
    %v3130 = vsub.s32 4294967266, %v3125
    %v3131 = vadd.s32 %v3130, 127
    %v3132 = vshll.u32 %v3131, 23
    %v3133 = vor.u32 4788187, %v3132
    %v3134 = vand.u32 2147483647, %v3133
    %v3136 = vcvt.s32.f32 %v3129
    %v3137 = vmul.f32 %v3136, %v3134
    %v3138 = vxor.u32 %v3137, 2147483648
    %v3139 = vsel %vm3056, %v3138, %v3137
    %v3140 = vsub.s32 4, %v3116
    %v3141 = vsel %vm3056, %v3140, %v3116
    %v3142 = vsel %vm3055, %v232, %v3139
    %v3143 = vsel %vm3055, 0, %v3141
    %v3144 = vcosq.f32.pop %v3142
    %v3145 = vsinq.f32.pop %v3142
    %vm3146 = vweird.f32 %v232
    %v3147 = vadd.s32 %v3143, 3
    %v3148 = vand.u32 %v3147, 3
    %vm3149 = vcmp.lt.s32.totalorder %v3148, 2
    %vm3150 = vcmp.eq.s32.totalorder %v3148, 0
    %v3151 = vxor.u32 %v3145, 2147483648
    %v3152 = vsel %vm3150, %v3144, %v3151
    %vm3153 = vcmp.eq.s32.totalorder %v3148, 2
    %v3154 = vxor.u32 %v3144, 2147483648
    %v3155 = vsel %vm3153, %v3154, %v3145
    %v3156 = vsel %vm3149, %v3152, %v3155
    %v3157 = vsel %vm3146, nan, %v3156
    %v3158 = vand.u32 2147483647, %v236
    %vm3159 = vcmp.le.f32.partialorder %v3158, 0.7853982
    %vm3160 = vcmp.lt.s32.totalorder %v236, 0
    %v3161 = vand.u32 %v236, 2139095040
    %v3162 = vshrl.u32 %v3161, 23
    %v3163 = vsub.s32 %v3162, 127
    %v3164 = vand.u32 2147483647, %v236
    %v3165 = vand.u32 %v3164, 8388607
    %v3166 = vor.u32 %v3165, 8388608
    %v3167 = vsub.s32 0, %v3166
    %v3168 = vadd.s32 %v3163, 1
    %vm3169 = vcmp.gt.s32.totalorder %v3168, 0
    %v3170 = vsel %vm3169, %v3168, 0
    %v3171 = vshrl.u32 %v3170, 5
    %v3172 = vand.u32 %v3170, 31
    %v3173 = vsub.s32 32, %v3172
    %v3174 = vshrl.u32 683565275, %v3173
    %v3175 = vshll.u32 683565275, %v3172
    %v3176 = vshrl.u32 2475754826, %v3173
    %v3177 = vor.u32 %v3175, %v3176
    %v3178 = vshll.u32 2475754826, %v3172
    %v3179 = vshrl.u32 2131351028, %v3173
    %v3180 = vor.u32 %v3178, %v3179
    %v3181 = vshll.u32 2131351028, %v3172
    %v3182 = vshrl.u32 2102212464, %v3173
    %v3183 = vor.u32 %v3181, %v3182
    %v3184 = vshll.u32 2102212464, %v3172
    %v3185 = vshrl.u32 920167782, %v3173
    %v3186 = vor.u32 %v3184, %v3185
    %v3187 = vshll.u32 920167782, %v3172
    %v3188 = vshrl.u32 1326507024, %v3173
    %v3189 = vor.u32 %v3187, %v3188
    %vm3190 = vcmp.lt.s32.totalorder %v3171, 1
    %vm3191 = vcmp.lt.s32.totalorder %v3171, 2
    %vm3192 = vcmp.lt.s32.totalorder %v3171, 3
    %vm3193 = vcmp.lt.s32.totalorder %v3171, 4
    %v3194 = vsel %vm3190, %v3174, %v3177
    %v3195 = vsel %vm3193, %v3183, 2102212464
    %v3196 = vsel %vm3192, %v3180, %v3195
    %v3197 = vsel %vm3191, %v3194, %v3196
    %v3198 = vsel %vm3190, %v3177, %v3180
    %v3199 = vsel %vm3193, %v3186, 920167782
    %v3200 = vsel %vm3192, %v3183, %v3199
    %v3201 = vsel %vm3191, %v3198, %v3200
    %v3202 = vsel %vm3190, %v3180, %v3183
    %v3203 = vsel %vm3193, %v3189, 1326507024
    %v3204 = vsel %vm3192, %v3186, %v3203
    %v3205 = vsel %vm3191, %v3202, %v3204
    %v3206 = vshll.u32 %v3166, 8
    %v3207 = vmul.u32.u64.compose %v3206, %v3205
    %v3208 = vextract.low.u32 %v3207
    %v3209 = vextract.high.u32 %v3207
    %v3210 = vmul.u32.u64.compose %v3206, %v3201
    %v3211 = vextract.low.u32 %v3210
    %v3212 = vextract.high.u32 %v3210
    %v3213 = vmul.u32 %v3206, %v3197
    %v3214 = vadd.s32 %v3209, %v3211
    %vm3215 = vc.u32 %v3209, %v3211
    %v3216 = vadd.s32 %v3212, 1
    %v3217 = vsel %vm3215, %v3216, %v3212
    %v3218 = vadd.s32 %v3213, %v3217
    %v3219 = vadd.s32 %v3218, 536870912
    %v3220 = vshrl.u32 %v3219, 30
    %v3221 = vshll.u32 %v3220, 30
    %v3222 = vsub.s32 %v3218, %v3221
    %vm3223 = vcmp.lt.s32.totalorder %v3222, 0
    %v3224 = vsub.s32 0, %v3222
    %v3225 = vsel %vm3223, %v3224, %v3222
    %v3226 = vclz %v3225
    %v3227 = vsub.s32 %v3226, 2
    %vm3228 = vcmp.gt.s32.totalorder 0, %v3227
    %v3229 = vsel %vm3228, 0, %v3227
    %v3230 = vsub.s32 32, %v3229
    %v3231 = vshll.u32 %v3222, %v3229
    %v3232 = vshrl.u32 %v3214, %v3230
    %v3233 = vor.u32 %v3231, %v3232
    %v3234 = vsub.s32 4294967266, %v3229
    %v3235 = vadd.s32 %v3234, 127
    %v3236 = vshll.u32 %v3235, 23
    %v3237 = vor.u32 4788187, %v3236
    %v3238 = vand.u32 2147483647, %v3237
    %v3240 = vcvt.s32.f32 %v3233
    %v3241 = vmul.f32 %v3240, %v3238
    %v3242 = vxor.u32 %v3241, 2147483648
    %v3243 = vsel %vm3160, %v3242, %v3241
    %v3244 = vsub.s32 4, %v3220
    %v3245 = vsel %vm3160, %v3244, %v3220
    %v3246 = vsel %vm3159, %v236, %v3243
    %v3247 = vsel %vm3159, 0, %v3245
    %v3248 = vcosq.f32.pop %v3246
    %v3249 = vsinq.f32.pop %v3246
    %vm3250 = vweird.f32 %v236
    %v3251 = vadd.s32 %v3247, 3
    %v3252 = vand.u32 %v3251, 3
    %vm3253 = vcmp.lt.s32.totalorder %v3252, 2
    %vm3254 = vcmp.eq.s32.totalorder %v3252, 0
    %v3255 = vxor.u32 %v3249, 2147483648
    %v3256 = vsel %vm3254, %v3248, %v3255
    %vm3257 = vcmp.eq.s32.totalorder %v3252, 2
    %v3258 = vxor.u32 %v3248, 2147483648
    %v3259 = vsel %vm3257, %v3258, %v3249
    %v3260 = vsel %vm3253, %v3256, %v3259
    %v3261 = vsel %vm3250, nan, %v3260
    %v3262 = vand.u32 2147483647, %v238
    %vm3263 = vcmp.le.f32.partialorder %v3262, 0.7853982
    %vm3264 = vcmp.lt.s32.totalorder %v238, 0
    %v3265 = vand.u32 %v238, 2139095040
    %v3266 = vshrl.u32 %v3265, 23
    %v3267 = vsub.s32 %v3266, 127
    %v3268 = vand.u32 2147483647, %v238
    %v3269 = vand.u32 %v3268, 8388607
    %v3270 = vor.u32 %v3269, 8388608
    %v3271 = vsub.s32 0, %v3270
    %v3272 = vadd.s32 %v3267, 1
    %vm3273 = vcmp.gt.s32.totalorder %v3272, 0
    %v3274 = vsel %vm3273, %v3272, 0
    %v3275 = vshrl.u32 %v3274, 5
    %v3276 = vand.u32 %v3274, 31
    %v3277 = vsub.s32 32, %v3276
    %v3278 = vshrl.u32 683565275, %v3277
    %v3279 = vshll.u32 683565275, %v3276
    %v3280 = vshrl.u32 2475754826, %v3277
    %v3281 = vor.u32 %v3279, %v3280
    %v3282 = vshll.u32 2475754826, %v3276
    %v3283 = vshrl.u32 2131351028, %v3277
    %v3284 = vor.u32 %v3282, %v3283
    %v3285 = vshll.u32 2131351028, %v3276
    %v3286 = vshrl.u32 2102212464, %v3277
    %v3287 = vor.u32 %v3285, %v3286
    %v3288 = vshll.u32 2102212464, %v3276
    %v3289 = vshrl.u32 920167782, %v3277
    %v3290 = vor.u32 %v3288, %v3289
    %v3291 = vshll.u32 920167782, %v3276
    %v3292 = vshrl.u32 1326507024, %v3277
    %v3293 = vor.u32 %v3291, %v3292
    %vm3294 = vcmp.lt.s32.totalorder %v3275, 1
    %vm3295 = vcmp.lt.s32.totalorder %v3275, 2
    %vm3296 = vcmp.lt.s32.totalorder %v3275, 3
    %vm3297 = vcmp.lt.s32.totalorder %v3275, 4
    %v3298 = vsel %vm3294, %v3278, %v3281
    %v3299 = vsel %vm3297, %v3287, 2102212464
    %v3300 = vsel %vm3296, %v3284, %v3299
    %v3301 = vsel %vm3295, %v3298, %v3300
    %v3302 = vsel %vm3294, %v3281, %v3284
    %v3303 = vsel %vm3297, %v3290, 920167782
    %v3304 = vsel %vm3296, %v3287, %v3303
    %v3305 = vsel %vm3295, %v3302, %v3304
    %v3306 = vsel %vm3294, %v3284, %v3287
    %v3307 = vsel %vm3297, %v3293, 1326507024
    %v3308 = vsel %vm3296, %v3290, %v3307
    %v3309 = vsel %vm3295, %v3306, %v3308
    %v3310 = vshll.u32 %v3270, 8
    %v3311 = vmul.u32.u64.compose %v3310, %v3309
    %v3312 = vextract.low.u32 %v3311
    %v3313 = vextract.high.u32 %v3311
    %v3314 = vmul.u32.u64.compose %v3310, %v3305
    %v3315 = vextract.low.u32 %v3314
    %v3316 = vextract.high.u32 %v3314
    %v3317 = vmul.u32 %v3310, %v3301
    %v3318 = vadd.s32 %v3313, %v3315
    %vm3319 = vc.u32 %v3313, %v3315
    %v3320 = vadd.s32 %v3316, 1
    %v3321 = vsel %vm3319, %v3320, %v3316
    %v3322 = vadd.s32 %v3317, %v3321
    %v3323 = vadd.s32 %v3322, 536870912
    %v3324 = vshrl.u32 %v3323, 30
    %v3325 = vshll.u32 %v3324, 30
    %v3326 = vsub.s32 %v3322, %v3325
    %vm3327 = vcmp.lt.s32.totalorder %v3326, 0
    %v3328 = vsub.s32 0, %v3326
    %v3329 = vsel %vm3327, %v3328, %v3326
    %v3330 = vclz %v3329
    %v3331 = vsub.s32 %v3330, 2
    %vm3332 = vcmp.gt.s32.totalorder 0, %v3331
    %v3333 = vsel %vm3332, 0, %v3331
    %v3334 = vsub.s32 32, %v3333
    %v3335 = vshll.u32 %v3326, %v3333
    %v3336 = vshrl.u32 %v3318, %v3334
    %v3337 = vor.u32 %v3335, %v3336
    %v3338 = vsub.s32 4294967266, %v3333
    %v3339 = vadd.s32 %v3338, 127
    %v3340 = vshll.u32 %v3339, 23
    %v3341 = vor.u32 4788187, %v3340
    %v3342 = vand.u32 2147483647, %v3341
    %v3344 = vcvt.s32.f32 %v3337
    %v3345 = vmul.f32 %v3344, %v3342
    %v3346 = vxor.u32 %v3345, 2147483648
    %v3347 = vsel %vm3264, %v3346, %v3345
    %v3348 = vsub.s32 4, %v3324
    %v3349 = vsel %vm3264, %v3348, %v3324
    %v3350 = vsel %vm3263, %v238, %v3347
    %v3351 = vsel %vm3263, 0, %v3349
    %v3352 = vcosq.f32.pop %v3350
    %v3353 = vsinq.f32.pop %v3350
    %vm3354 = vweird.f32 %v238
    %v3355 = vadd.s32 %v3351, 3
    %v3356 = vand.u32 %v3355, 3
    %vm3357 = vcmp.lt.s32.totalorder %v3356, 2
    %vm3358 = vcmp.eq.s32.totalorder %v3356, 0
    %v3359 = vxor.u32 %v3353, 2147483648
    %v3360 = vsel %vm3358, %v3352, %v3359
    %vm3361 = vcmp.eq.s32.totalorder %v3356, 2
    %v3362 = vxor.u32 %v3352, 2147483648
    %v3363 = vsel %vm3361, %v3362, %v3353
    %v3364 = vsel %vm3357, %v3360, %v3363
    %v3365 = vsel %vm3354, nan, %v3364
    %v3366 = vand.u32 2147483647, %v242
    %vm3367 = vcmp.le.f32.partialorder %v3366, 0.7853982
    %vm3368 = vcmp.lt.s32.totalorder %v242, 0
    %v3369 = vand.u32 %v242, 2139095040
    %v3370 = vshrl.u32 %v3369, 23
    %v3371 = vsub.s32 %v3370, 127
    %v3372 = vand.u32 2147483647, %v242
    %v3373 = vand.u32 %v3372, 8388607
    %v3374 = vor.u32 %v3373, 8388608
    %v3375 = vsub.s32 0, %v3374
    %v3376 = vadd.s32 %v3371, 1
    %vm3377 = vcmp.gt.s32.totalorder %v3376, 0
    %v3378 = vsel %vm3377, %v3376, 0
    %v3379 = vshrl.u32 %v3378, 5
    %v3380 = vand.u32 %v3378, 31
    %v3381 = vsub.s32 32, %v3380
    %v3382 = vshrl.u32 683565275, %v3381
    %v3383 = vshll.u32 683565275, %v3380
    %v3384 = vshrl.u32 2475754826, %v3381
    %v3385 = vor.u32 %v3383, %v3384
    %v3386 = vshll.u32 2475754826, %v3380
    %v3387 = vshrl.u32 2131351028, %v3381
    %v3388 = vor.u32 %v3386, %v3387
    %v3389 = vshll.u32 2131351028, %v3380
    %v3390 = vshrl.u32 2102212464, %v3381
    %v3391 = vor.u32 %v3389, %v3390
    %v3392 = vshll.u32 2102212464, %v3380
    %v3393 = vshrl.u32 920167782, %v3381
    %v3394 = vor.u32 %v3392, %v3393
    %v3395 = vshll.u32 920167782, %v3380
    %v3396 = vshrl.u32 1326507024, %v3381
    %v3397 = vor.u32 %v3395, %v3396
    %vm3398 = vcmp.lt.s32.totalorder %v3379, 1
    %vm3399 = vcmp.lt.s32.totalorder %v3379, 2
    %vm3400 = vcmp.lt.s32.totalorder %v3379, 3
    %vm3401 = vcmp.lt.s32.totalorder %v3379, 4
    %v3402 = vsel %vm3398, %v3382, %v3385
    %v3403 = vsel %vm3401, %v3391, 2102212464
    %v3404 = vsel %vm3400, %v3388, %v3403
    %v3405 = vsel %vm3399, %v3402, %v3404
    %v3406 = vsel %vm3398, %v3385, %v3388
    %v3407 = vsel %vm3401, %v3394, 920167782
    %v3408 = vsel %vm3400, %v3391, %v3407
    %v3409 = vsel %vm3399, %v3406, %v3408
    %v3410 = vsel %vm3398, %v3388, %v3391
    %v3411 = vsel %vm3401, %v3397, 1326507024
    %v3412 = vsel %vm3400, %v3394, %v3411
    %v3413 = vsel %vm3399, %v3410, %v3412
    %v3414 = vshll.u32 %v3374, 8
    %v3415 = vmul.u32.u64.compose %v3414, %v3413
    %v3416 = vextract.low.u32 %v3415
    %v3417 = vextract.high.u32 %v3415
    %v3418 = vmul.u32.u64.compose %v3414, %v3409
    %v3419 = vextract.low.u32 %v3418
    %v3420 = vextract.high.u32 %v3418
    %v3421 = vmul.u32 %v3414, %v3405
    %v3422 = vadd.s32 %v3417, %v3419
    %vm3423 = vc.u32 %v3417, %v3419
    %v3424 = vadd.s32 %v3420, 1
    %v3425 = vsel %vm3423, %v3424, %v3420
    %v3426 = vadd.s32 %v3421, %v3425
    %v3427 = vadd.s32 %v3426, 536870912
    %v3428 = vshrl.u32 %v3427, 30
    %v3429 = vshll.u32 %v3428, 30
    %v3430 = vsub.s32 %v3426, %v3429
    %vm3431 = vcmp.lt.s32.totalorder %v3430, 0
    %v3432 = vsub.s32 0, %v3430
    %v3433 = vsel %vm3431, %v3432, %v3430
    %v3434 = vclz %v3433
    %v3435 = vsub.s32 %v3434, 2
    %vm3436 = vcmp.gt.s32.totalorder 0, %v3435
    %v3437 = vsel %vm3436, 0, %v3435
    %v3438 = vsub.s32 32, %v3437
    %v3439 = vshll.u32 %v3430, %v3437
    %v3440 = vshrl.u32 %v3422, %v3438
    %v3441 = vor.u32 %v3439, %v3440
    %v3442 = vsub.s32 4294967266, %v3437
    %v3443 = vadd.s32 %v3442, 127
    %v3444 = vshll.u32 %v3443, 23
    %v3445 = vor.u32 4788187, %v3444
    %v3446 = vand.u32 2147483647, %v3445
    %v3448 = vcvt.s32.f32 %v3441
    %v3449 = vmul.f32 %v3448, %v3446
    %v3450 = vxor.u32 %v3449, 2147483648
    %v3451 = vsel %vm3368, %v3450, %v3449
    %v3452 = vsub.s32 4, %v3428
    %v3453 = vsel %vm3368, %v3452, %v3428
    %v3454 = vsel %vm3367, %v242, %v3451
    %v3455 = vsel %vm3367, 0, %v3453
    %v3456 = vcosq.f32.pop %v3454
    %v3457 = vsinq.f32.pop %v3454
    %vm3458 = vweird.f32 %v242
    %v3459 = vadd.s32 %v3455, 3
    %v3460 = vand.u32 %v3459, 3
    %vm3461 = vcmp.lt.s32.totalorder %v3460, 2
    %vm3462 = vcmp.eq.s32.totalorder %v3460, 0
    %v3463 = vxor.u32 %v3457, 2147483648
    %v3464 = vsel %vm3462, %v3456, %v3463
    %vm3465 = vcmp.eq.s32.totalorder %v3460, 2
    %v3466 = vxor.u32 %v3456, 2147483648
    %v3467 = vsel %vm3465, %v3466, %v3457
    %v3468 = vsel %vm3461, %v3464, %v3467
    %v3469 = vsel %vm3458, nan, %v3468
    %v3470 = vand.u32 2147483647, %v244
    %vm3471 = vcmp.le.f32.partialorder %v3470, 0.7853982
    %vm3472 = vcmp.lt.s32.totalorder %v244, 0
    %v3473 = vand.u32 %v244, 2139095040
    %v3474 = vshrl.u32 %v3473, 23
    %v3475 = vsub.s32 %v3474, 127
    %v3476 = vand.u32 2147483647, %v244
    %v3477 = vand.u32 %v3476, 8388607
    %v3478 = vor.u32 %v3477, 8388608
    %v3479 = vsub.s32 0, %v3478
    %v3480 = vadd.s32 %v3475, 1
    %vm3481 = vcmp.gt.s32.totalorder %v3480, 0
    %v3482 = vsel %vm3481, %v3480, 0
    %v3483 = vshrl.u32 %v3482, 5
    %v3484 = vand.u32 %v3482, 31
    %v3485 = vsub.s32 32, %v3484
    %v3486 = vshrl.u32 683565275, %v3485
    %v3487 = vshll.u32 683565275, %v3484
    %v3488 = vshrl.u32 2475754826, %v3485
    %v3489 = vor.u32 %v3487, %v3488
    %v3490 = vshll.u32 2475754826, %v3484
    %v3491 = vshrl.u32 2131351028, %v3485
    %v3492 = vor.u32 %v3490, %v3491
    %v3493 = vshll.u32 2131351028, %v3484
    %v3494 = vshrl.u32 2102212464, %v3485
    %v3495 = vor.u32 %v3493, %v3494
    %v3496 = vshll.u32 2102212464, %v3484
    %v3497 = vshrl.u32 920167782, %v3485
    %v3498 = vor.u32 %v3496, %v3497
    %v3499 = vshll.u32 920167782, %v3484
    %v3500 = vshrl.u32 1326507024, %v3485
    %v3501 = vor.u32 %v3499, %v3500
    %vm3502 = vcmp.lt.s32.totalorder %v3483, 1
    %vm3503 = vcmp.lt.s32.totalorder %v3483, 2
    %vm3504 = vcmp.lt.s32.totalorder %v3483, 3
    %vm3505 = vcmp.lt.s32.totalorder %v3483, 4
    %v3506 = vsel %vm3502, %v3486, %v3489
    %v3507 = vsel %vm3505, %v3495, 2102212464
    %v3508 = vsel %vm3504, %v3492, %v3507
    %v3509 = vsel %vm3503, %v3506, %v3508
    %v3510 = vsel %vm3502, %v3489, %v3492
    %v3511 = vsel %vm3505, %v3498, 920167782
    %v3512 = vsel %vm3504, %v3495, %v3511
    %v3513 = vsel %vm3503, %v3510, %v3512
    %v3514 = vsel %vm3502, %v3492, %v3495
    %v3515 = vsel %vm3505, %v3501, 1326507024
    %v3516 = vsel %vm3504, %v3498, %v3515
    %v3517 = vsel %vm3503, %v3514, %v3516
    %v3518 = vshll.u32 %v3478, 8
    %v3519 = vmul.u32.u64.compose %v3518, %v3517
    %v3520 = vextract.low.u32 %v3519
    %v3521 = vextract.high.u32 %v3519
    %v3522 = vmul.u32.u64.compose %v3518, %v3513
    %v3523 = vextract.low.u32 %v3522
    %v3524 = vextract.high.u32 %v3522
    %v3525 = vmul.u32 %v3518, %v3509
    %v3526 = vadd.s32 %v3521, %v3523
    %vm3527 = vc.u32 %v3521, %v3523
    %v3528 = vadd.s32 %v3524, 1
    %v3529 = vsel %vm3527, %v3528, %v3524
    %v3530 = vadd.s32 %v3525, %v3529
    %v3531 = vadd.s32 %v3530, 536870912
    %v3532 = vshrl.u32 %v3531, 30
    %v3533 = vshll.u32 %v3532, 30
    %v3534 = vsub.s32 %v3530, %v3533
    %vm3535 = vcmp.lt.s32.totalorder %v3534, 0
    %v3536 = vsub.s32 0, %v3534
    %v3537 = vsel %vm3535, %v3536, %v3534
    %v3538 = vclz %v3537
    %v3539 = vsub.s32 %v3538, 2
    %vm3540 = vcmp.gt.s32.totalorder 0, %v3539
    %v3541 = vsel %vm3540, 0, %v3539
    %v3542 = vsub.s32 32, %v3541
    %v3543 = vshll.u32 %v3534, %v3541
    %v3544 = vshrl.u32 %v3526, %v3542
    %v3545 = vor.u32 %v3543, %v3544
    %v3546 = vsub.s32 4294967266, %v3541
    %v3547 = vadd.s32 %v3546, 127
    %v3548 = vshll.u32 %v3547, 23
    %v3549 = vor.u32 4788187, %v3548
    %v3550 = vand.u32 2147483647, %v3549
    %v3552 = vcvt.s32.f32 %v3545
    %v3553 = vmul.f32 %v3552, %v3550
    %v3554 = vxor.u32 %v3553, 2147483648
    %v3555 = vsel %vm3472, %v3554, %v3553
    %v3556 = vsub.s32 4, %v3532
    %v3557 = vsel %vm3472, %v3556, %v3532
    %v3558 = vsel %vm3471, %v244, %v3555
    %v3559 = vsel %vm3471, 0, %v3557
    %v3560 = vcosq.f32.pop %v3558
    %v3561 = vsinq.f32.pop %v3558
    %vm3562 = vweird.f32 %v244
    %v3563 = vadd.s32 %v3559, 3
    %v3564 = vand.u32 %v3563, 3
    %vm3565 = vcmp.lt.s32.totalorder %v3564, 2
    %vm3566 = vcmp.eq.s32.totalorder %v3564, 0
    %v3567 = vxor.u32 %v3561, 2147483648
    %v3568 = vsel %vm3566, %v3560, %v3567
    %vm3569 = vcmp.eq.s32.totalorder %v3564, 2
    %v3570 = vxor.u32 %v3560, 2147483648
    %v3571 = vsel %vm3569, %v3570, %v3561
    %v3572 = vsel %vm3565, %v3568, %v3571
    %v3573 = vsel %vm3562, nan, %v3572
    %3574 = vst [vmem:[#allocation2] sm:$0xff] %v349
    %3575 = vst [vmem:[#allocation2 + $0x8] sm:$0xff] %v453
    %3576 = vst [vmem:[#allocation2 + $0x10] sm:$0xff] %v557
    %3577 = vst [vmem:[#allocation2 + $0x18] sm:$0xff] %v661
    %3578 = vst [vmem:[#allocation2 + $0x20] sm:$0xff] %v765
    %3579 = vst [vmem:[#allocation2 + $0x28] sm:$0xff] %v869
    %3580 = vst [vmem:[#allocation2 + $0x30] sm:$0xff] %v973
    %3581 = vst [vmem:[#allocation2 + $0x38] sm:$0xff] %v1077
    %3582 = vst [vmem:[#allocation2 + $0x40] sm:$0xff] %v1181
    %3583 = vst [vmem:[#allocation2 + $0x48] sm:$0xff] %v1285
    %3584 = vst [vmem:[#allocation2 + $0x50] sm:$0xff] %v1389
    %3585 = vst [vmem:[#allocation2 + $0x58] sm:$0xff] %v1493
    %3586 = vst [vmem:[#allocation2 + $0x60] sm:$0xff] %v1597
    %3587 = vst [vmem:[#allocation2 + $0x68] sm:$0xff] %v1701
    %3588 = vst [vmem:[#allocation2 + $0x70] sm:$0xff] %v1805
    %3589 = vst [vmem:[#allocation2 + $0x78] sm:$0xff] %v1909
    %3590 = vst [vmem:[#allocation2 + $0x80] sm:$0xff] %v2013
    %3591 = vst [vmem:[#allocation2 + $0x88] sm:$0xff] %v2117
    %3592 = vst [vmem:[#allocation2 + $0x90] sm:$0xff] %v2221
    %3593 = vst [vmem:[#allocation2 + $0x98] sm:$0xff] %v2325
    %3594 = vst [vmem:[#allocation2 + $0xa0] sm:$0xff] %v2429
    %3595 = vst [vmem:[#allocation2 + $0xa8] sm:$0xff] %v2533
    %3596 = vst [vmem:[#allocation2 + $0xb0] sm:$0xff] %v2637
    %3597 = vst [vmem:[#allocation2 + $0xb8] sm:$0xff] %v2741
    %3598 = vst [vmem:[#allocation2 + $0xc0] sm:$0xff] %v2845
    %3599 = vst [vmem:[#allocation2 + $0xc8] sm:$0xff] %v2949
    %3600 = vst [vmem:[#allocation2 + $0xd0] sm:$0xff] %v3053
    %3601 = vst [vmem:[#allocation2 + $0xd8] sm:$0xff] %v3157
    %3602 = vst [vmem:[#allocation2 + $0xe0] sm:$0xff] %v3261
    %3603 = vst [vmem:[#allocation2 + $0xe8] sm:$0xff] %v3365
    %3604 = vst [vmem:[#allocation2 + $0xf0] sm:$0xff] %v3469
    %3605 = vst [vmem:[#allocation2 + $0xf8] sm:$0xff] %v3573
    // Predicated region
    $region10: #{tpu_custom_call.1} parent=1 // pred_check
      _
    $region11: #{tpu_custom_call.1} parent=1 // pred_check_branch
      %3607 = sbr.rel (0) target = $region13
    $region12: #{tpu_custom_call.1} parent=1 // pred_region
      %s3609 = ssub.s32 4096, 4096
      %3610 = vsyncadd [#allocation3], %s3609
      %s3611 = sshll.u32 [#allocation2], 4
      %s3612 = int_to_ptr.vmem [resolvable:$true] %s3611
      %3617 = dma.vmem_to_hbm [thread:$0]  %s3612, 4096, %s2, [#allocation3], 256, 256, 16
    $region13: #{tpu_custom_call.1} parent=1 // pred_fallthru
      _
    // Predicated region
    $region14: #{tpu_custom_call.1} parent=1 // pred_check
      _
    $region15: #{tpu_custom_call.1} parent=1 // pred_check_branch
      %3619 = sbr.rel (0) target = $region17
    $region16: #{tpu_custom_call.1} parent=1 // pred_region
      %3620 = dma.done [#allocation3], 4096
    $region17: #{tpu_custom_call.1} parent=1 // pred_fallthru
      _
    %3621 = vsyncpa [#allocation3], 1

</llo_original>
